<compile_context>
chip_gen: v7x
topology: tpu7x:2x2x1
jax: 0.10.0
libtpu: 0.0.40
codegen_flags: <defaults>
</compile_context>

<pallas_src>
import functools

import jax
import jax.numpy as jnp
from jax.experimental import pallas as pl
from jax.experimental.pallas import tpu as pltpu


# ----------------------------------------------------------------------------
# Fused Pallas kernel
# ----------------------------------------------------------------------------
def _pgat_fused_kernel(*refs, alpha, num_heads, fh, head_ds, out_ds, mm_dtype):
    refs = list(refs)
    o_ref = refs.pop()                        # (TB, N, Fo) f32
    it = iter(refs)
    x_ref = next(it)                          # (TB, N, Cin)   mm_dtype (or f32)
    adj_ref = next(it)                        # (2, N, N)      f32
    wh_ref = next(it)                         # (2, Cin, H*Fh) mm_dtype, stacked head W
    ah_ref = next(it)                         # (2, H*Fh, 2H)  mm_dtype, block-diag [a1|a2]
    bh_ref = next(it)                         # (2, N, H*Fh)   f32
    wdsh_ref = next(it) if head_ds else None  # (2, Cin, H*Fh) mm_dtype
    bdsh_ref = next(it) if head_ds else None  # (2, 1, H*Fh)   f32
    wo_ref = next(it)                         # (2, H*Fh, Fo)  mm_dtype
    ao_ref = next(it)                         # (2, Fo, 2)     mm_dtype, [a1 a2] of out-GAT
    bo_ref = next(it)                         # (2, N, Fo)     f32
    wdso_ref = next(it) if out_ds else None   # (2, H*Fh, Fo)  mm_dtype
    bdso_ref = next(it) if out_ds else None   # (2, 1, Fo)     f32
    wgs_ref = next(it)                        # (Fo, Fo)       mm_dtype (fs)
    wgg_ref = next(it)                        # (Fo, Fo)       mm_dtype (fg)
    bg_ref = next(it)                         # (1, Fo)        f32 (fs_b + fg_b)

    H = num_heads
    x_in = x_ref[...]
    TB, N, Cin = x_in.shape
    HF = H * fh
    Fo = o_ref.shape[-1]
    x2m = x_in.reshape(TB * N, Cin).astype(mm_dtype)

    def attend(adj, f1, f2t, feat_mm):
        # e[b,i,j] = f1[b,i] + f2[b,j]: broadcast add on the VPU (no concat / K=2 einsum)
        e = f1 + f2t                                        # (TB,N,N)
        e = jnp.where(e > 0, e, alpha * e)                  # LeakyReLU
        att = adj[None] * e
        # torch softmax(dim=1): normalize over the row index i (axis 1)
        m = jnp.max(att, axis=1, keepdims=True)
        p = jnp.exp(att - m)
        att = p / jnp.sum(p, axis=1, keepdims=True)         # exact recip; denom is (TB,1,N)
        return jnp.einsum('bij,bjf->bif', att.astype(mm_dtype), feat_mm,
                          preferred_element_type=jnp.float32)

    def gat_group(g):
        adj = adj_ref[g]                                                        # (N, N)
        # all H heads in one wide MXU push
        h_all = jnp.dot(x2m, wh_ref[g], preferred_element_type=jnp.float32)     # (TB*N, HF)
        f_all = jnp.dot(h_all.astype(mm_dtype), ah_ref[g],
                        preferred_element_type=jnp.float32)                     # (TB*N, 2H)
        h3 = h_all.reshape(TB, N, HF)
        f3 = f_all.reshape(TB, N, 2 * H)
        f2t_all = jnp.swapaxes(f3[:, :, H:], 1, 2)                              # (TB, H, N)
        if head_ds:
            res_all = (jnp.dot(x2m, wdsh_ref[g], preferred_element_type=jnp.float32)
                       .reshape(TB, N, HF) + bdsh_ref[g][None])
        else:
            x_res = x_in.astype(jnp.float32)

        wo = wo_ref[g]
        bh = bh_ref[g]
        ho_acc = jnp.zeros((TB * N, Fo), jnp.float32)
        dso_acc = jnp.zeros((TB * N, Fo), jnp.float32)
        xcat_parts = []
        # Per-head attention; each head's result folds straight into the
        # out-GAT input accumulators -> no lane-axis concat, no H live (N,N) mats.
        for hd in range(H):
            sl = slice(hd * fh, (hd + 1) * fh)
            hp = attend(adj,
                        f3[:, :, hd:hd + 1],                # f1  (TB,N,1)
                        f2t_all[:, hd:hd + 1, :],           # f2' (TB,1,N)
                        h3[:, :, sl].astype(mm_dtype))      # (TB,N,Fh)
            hp = hp + bh[:, sl][None]
            hp = hp + (res_all[:, :, sl] if head_ds else x_res)
            hp2 = hp.reshape(TB * N, fh).astype(mm_dtype)
            ho_acc = ho_acc + jnp.dot(hp2, wo[sl, :],
                                      preferred_element_type=jnp.float32)
            if out_ds:
                dso_acc = dso_acc + jnp.dot(hp2, wdso_ref[g][sl, :],
                                            preferred_element_type=jnp.float32)
            else:
                xcat_parts.append(hp)

        # output GAT on the (implicit) head concat
        fo = jnp.dot(ho_acc.astype(mm_dtype), ao_ref[g],
                     preferred_element_type=jnp.float32).reshape(TB, N, 2)
        ho3 = ho_acc.reshape(TB, N, Fo)
        fo2t = jnp.swapaxes(fo[:, :, 1:2], 1, 2)                                # (TB,1,N)
        hpo = attend(adj, fo[:, :, 0:1], fo2t, ho3.astype(mm_dtype)) + bo_ref[g][None]
        if out_ds:
            hpo = hpo + dso_acc.reshape(TB, N, Fo) + bdso_ref[g][None]
        else:
            xcat = xcat_parts[0] if H == 1 else jnp.concatenate(xcat_parts, axis=-1)
            hpo = hpo + xcat
        # ELU (clamp the exp argument so the unselected branch cannot overflow)
        return jnp.where(hpo > 0, hpo, jnp.exp(jnp.minimum(hpo, 0.0)) - 1.0)

    xd = gat_group(0)                                       # (TB, N, Fo)
    xf = gat_group(1)
    xd2 = xd.reshape(TB * N, Fo)
    xf2 = xf.reshape(TB * N, Fo)
    # gated fusion: split matmuls (no [xd|xf] concat); bf16 operands, f32 math
    s = (jnp.dot(xd2.astype(mm_dtype), wgs_ref[...], preferred_element_type=jnp.float32)
         + jnp.dot(xf2.astype(mm_dtype), wgg_ref[...], preferred_element_type=jnp.float32)
         + bg_ref[...])
    gate = 1.0 / (1.0 + jnp.exp(-s))
    out = gate * xd2 + (1.0 - gate) * xf2
    o_ref[...] = out.reshape(TB, N, Fo).astype(o_ref.dtype)


# ----------------------------------------------------------------------------
# Parameter packing
# ----------------------------------------------------------------------------
def _pack_group(mh, mm_dtype):
    heads = mh["heads"]
    H = len(heads)
    Fh = heads[0]["W"].shape[1]
    wh = jnp.concatenate([h["W"] for h in heads], axis=1)            # (Cin, H*Fh)
    ah = jnp.zeros((H * Fh, 2 * H), jnp.float32)                     # block-diag [a1 | a2]
    for i, h in enumerate(heads):
        ah = ah.at[i * Fh:(i + 1) * Fh, i].set(h["a1"][:, 0])
        ah = ah.at[i * Fh:(i + 1) * Fh, H + i].set(h["a2"][:, 0])
    bh = jnp.concatenate([h["bias"] for h in heads], axis=1)         # (N, H*Fh)
    wdsh = jnp.concatenate([h["wds"] for h in heads], axis=1)        # (Cin, H*Fh)
    bdsh = jnp.concatenate([h["bds"] for h in heads], axis=1)        # (1, H*Fh)
    o = mh["out"]
    ao = jnp.concatenate([o["a1"], o["a2"]], axis=1)                 # (Fo, 2)
    return dict(wh=wh.astype(mm_dtype), ah=ah.astype(mm_dtype), bh=bh,
                wdsh=wdsh.astype(mm_dtype), bdsh=bdsh,
                wo=o["W"].astype(mm_dtype), ao=ao.astype(mm_dtype), bo=o["bias"],
                wdso=o["wds"].astype(mm_dtype), bdso=o["bds"])


def _pack_params(params, adj_1, adj_2, mm_dtype):
    g1 = _pack_group(params["g1"], mm_dtype)
    g2 = _pack_group(params["g2"], mm_dtype)
    packed = {k: jnp.stack([g1[k], g2[k]], axis=0) for k in g1}
    packed["adj"] = jnp.stack([adj_1, adj_2], axis=0).astype(jnp.float32)
    packed["wgs"] = params["fs_w"].astype(mm_dtype)
    packed["wgg"] = params["fg_w"].astype(mm_dtype)
    packed["bg"] = params["fs_b"] + params["fg_b"]
    return packed


# ----------------------------------------------------------------------------
# Generation-aware tiling
# ----------------------------------------------------------------------------
def _tpu_vmem_and_cores():
    """Best-effort (VMEM bytes / TensorCore, TensorCores / chip) from device kind;
    conservative v7x-like fallback (64 MiB, 2 cores) for unknown parts."""
    try:
        kind = jax.devices()[0].device_kind.lower()
    except Exception:
        return 64 << 20, 2
    if "7" in kind:
        return 64 << 20, 2            # v7x: 64 MiB per TC, 2 TCs per chip
    if "v4" in kind or "v5p" in kind:
        return 128 << 20, 2           # megacore parts
    if "v5" in kind or "v6" in kind:
        return 128 << 20, 1           # v5e / v6e: 128 MiB, single TC
    return 64 << 20, 2


def _choose_tb(BT, N, Cin, HF, Fo, *, x_bytes, vmem_budget, min_steps):
    """Largest TB dividing BT whose working set fits the VMEM budget, keeping at
    least `min_steps` grid steps (>=2 per TensorCore on multi-core chips)."""
    # f32 in-kernel temporaries per (b,t) slab (attention matrices, h_all,
    # accumulators, xd/xf/gate) plus the double-buffered x/out stream blocks.
    per_slab = 4 * N * (Cin + 3 * HF + 8 * N + 8 * Fo + 16)
    per_slab += 2 * N * (Cin * x_bytes + 4 * Fo)
    cap = max(1, vmem_budget // per_slab)
    if min_steps > 1 and BT >= min_steps:
        cap = min(cap, BT // min_steps)
    cap = min(cap, BT)
    tb = 1
    for d in range(1, int(cap) + 1):
        if BT % d == 0:
            tb = d
    return tb


# ----------------------------------------------------------------------------
# Wrapper
# ----------------------------------------------------------------------------
@functools.partial(jax.jit, static_argnames=("alpha", "matmul_dtype"))
def parallel_gat(x, adj_1, adj_2, params, *, alpha=0.2, matmul_dtype=jnp.bfloat16):
    """x: (B, N, T, C) -> (B, N, T, out_features). Fused Pallas TPU forward pass."""
    B, N, T, C = x.shape
    heads = params["g1"]["heads"]
    H = len(heads)
    Fh = heads[0]["W"].shape[1]
    Fo = params["g1"]["out"]["W"].shape[1]
    HF = H * Fh
    head_ds = (C != Fh)
    out_ds = (HF != Fo)

    packed = _pack_params(params, adj_1, adj_2, matmul_dtype)

    BT = B * T
    # TODO(synk): this transpose is one extra HBM pass of x (see header note).
    x_bt = jnp.transpose(x, (0, 2, 1, 3)).reshape(BT, N, C)
    # Stream x at matmul precision (halves HBM bytes of the only per-step
    # stream); keep it f32 when the identity residual needs full-precision x.
    x_bt = x_bt.astype(matmul_dtype if head_ds else jnp.float32)

    vmem_bytes, n_cores = _tpu_vmem_and_cores()
    TB = _choose_tb(BT, N, C, HF, Fo,
                    x_bytes=jnp.dtype(x_bt.dtype).itemsize,
                    vmem_budget=int(vmem_bytes * 0.7),
                    min_steps=(4 if n_cores > 1 else 1))

    def _const_spec(arr):
        nd = arr.ndim
        return pl.BlockSpec(arr.shape, lambda i: (0,) * nd)

    inputs = [(x_bt, pl.BlockSpec((TB, N, C), lambda i: (i, 0, 0)))]
    const_keys = ["adj", "wh", "ah", "bh"]
    if head_ds:
        const_keys += ["wdsh", "bdsh"]
    const_keys += ["wo", "ao", "bo"]
    if out_ds:
        const_keys += ["wdso", "bdso"]
    const_keys += ["wgs", "wgg", "bg"]
    for key in const_keys:
        inputs.append((packed[key], _const_spec(packed[key])))

    args = [a for a, _ in inputs]
    in_specs = [s for _, s in inputs]

    kernel = functools.partial(
        _pgat_fused_kernel, alpha=alpha, num_heads=H, fh=Fh,
        head_ds=head_ds, out_ds=out_ds, mm_dtype=matmul_dtype)

    out_bt = pl.pallas_call(
        kernel,
        out_shape=jax.ShapeDtypeStruct((BT, N, Fo), jnp.float32),
        grid=(BT // TB,),
        in_specs=in_specs,
        out_specs=pl.BlockSpec((TB, N, Fo), lambda i: (i, 0, 0)),
        compiler_params=pltpu.CompilerParams(
            dimension_semantics=("parallel",),
            vmem_limit_bytes=int(vmem_bytes * 0.85)),
    )(*args)

    return jnp.transpose(out_bt.reshape(B, T, N, Fo), (0, 2, 1, 3))


# ----------------------------------------------------------------------------
# Deterministic parameter init (shapes from the PyTorch __init__)
# ----------------------------------------------------------------------------
def _xavier_uniform(key, shape, gain):
    fan_in, fan_out = shape[0], shape[1]
    limit = gain * (6.0 / (fan_in + fan_out)) ** 0.5
    return jax.random.uniform(key, shape, jnp.float32, -limit, limit)


def init_gat_params(key, in_f, out_f, num_nodes):
    ks = jax.random.split(key, 5)
    g = 2.0 ** 0.5
    return {
        "W": _xavier_uniform(ks[0], (in_f, out_f), g),
        "a1": _xavier_uniform(ks[1], (out_f, 1), g),
        "a2": _xavier_uniform(ks[2], (out_f, 1), g),
        "bias": jnp.zeros((num_nodes, out_f), jnp.float32),
        # Conv1d(in_f, out_f, 1) weight stored pre-transposed as (in_f, out_f)
        "wds": 0.1 * jax.random.normal(ks[3], (in_f, out_f), jnp.float32),
        "bds": 0.1 * jax.random.normal(ks[4], (1, out_f), jnp.float32),
    }


def init_multihead_params(key, in_f, hidden, out_f, num_nodes, num_heads):
    keys = jax.random.split(key, num_heads + 1)
    return {
        "heads": [init_gat_params(keys[h], in_f, hidden, num_nodes)
                  for h in range(num_heads)],
        "out": init_gat_params(keys[-1], hidden * num_heads, out_f, num_nodes),
    }


def init_parallel_params(key, in_f, hidden, out_f, num_nodes, num_heads):
    k1, k2, k3, k4, k5, k6 = jax.random.split(key, 6)
    return {
        "g1": init_multihead_params(k1, in_f, hidden, out_f, num_nodes, num_heads),
        "g2": init_multihead_params(k2, in_f, hidden, out_f, num_nodes, num_heads),
        # nn.Linear weights stored pre-transposed: y = x @ W + b
        "fs_w": 0.3 * jax.random.normal(k3, (out_f, out_f), jnp.float32),
        "fs_b": 0.3 * jax.random.normal(k4, (1, out_f), jnp.float32),
        "fg_w": 0.3 * jax.random.normal(k5, (out_f, out_f), jnp.float32),
        "fg_b": 0.3 * jax.random.normal(k6, (1, out_f), jnp.float32),
    }


# ----------------------------------------------------------------------------
# Pure-JAX reference (matmul_dtype mirrors the kernel's MXU-operand cast)
# ----------------------------------------------------------------------------
def _mm(a, b, md):
    return jnp.matmul(a.astype(md), b.astype(md), preferred_element_type=jnp.float32)


def _gat_layer_ref(x, adj, p, md, alpha=0.2):
    h = _mm(x, p["W"], md)
    f1 = _mm(h, p["a1"], md)
    f2 = _mm(h, p["a2"], md)
    e = f1 + jnp.swapaxes(f2, -1, -2)
    e = jnp.where(e > 0, e, alpha * e)
    att = jax.nn.softmax(adj[None] * e, axis=1)
    hp = _mm(att, h, md) + p["bias"][None]
    if x.shape[-1] != hp.shape[-1]:
        hp = hp + _mm(x, p["wds"], md) + p["bds"][None]
    else:
        hp = hp + x
    return hp


def _multi_head_ref(x_bt, adj, mh, md):
    cat = jnp.concatenate([_gat_layer_ref(x_bt, adj, hp, md) for hp in mh["heads"]],
                          axis=-1)
    return jax.nn.elu(_gat_layer_ref(cat, adj, mh["out"], md))


def parallel_gat_ref(x, adj_1, adj_2, params, matmul_dtype=jnp.float32):
    B, N, T, C = x.shape
    md = matmul_dtype
    x_bt = jnp.transpose(x, (0, 2, 1, 3)).reshape(B * T, N, C)
    xd = _multi_head_ref(x_bt, adj_1, params["g1"], md)
    xf = _multi_head_ref(x_bt, adj_2, params["g2"], md)
    s = (_mm(xd, params["fs_w"], md) + params["fs_b"][None]
         + _mm(xf, params["fg_w"], md) + params["fg_b"][None])
    g = jax.nn.sigmoid(s)
    out_bt = g * xd + (1.0 - g) * xf
    F = out_bt.shape[-1]
    return jnp.transpose(out_bt.reshape(B, T, N, F), (0, 2, 1, 3))


# ----------------------------------------------------------------------------
if __name__ == "__main__":
    B, N, T, C = 2, 8, 4, 4          # batch, num_nodes, time, in_features
    hidden, out_f, num_heads = 8, 8, 2

    key = jax.random.PRNGKey(0)
    k_x, k_a1, k_a2, k_p = jax.random.split(key, 4)
    x = jax.random.normal(k_x, (B, N, T, C), jnp.float32)
    adj_1 = (jax.random.uniform(k_a1, (N, N)) > 0.5).astype(jnp.float32)
    adj_2 = (jax.random.uniform(k_a2, (N, N)) > 0.5).astype(jnp.float32)
    params = init_parallel_params(k_p, C, hidden, out_f, N, num_heads)

    # 1) exact-precision run: checks the fused kernel's logic against the module math
    out_f32 = parallel_gat(x, adj_1, adj_2, params, matmul_dtype=jnp.float32)
    jax.block_until_ready(out_f32)
    ref_f32 = parallel_gat_ref(x, adj_1, adj_2, params, matmul_dtype=jnp.float32)
    assert out_f32.shape == (B, N, T, out_f)
    assert jnp.allclose(out_f32, ref_f32, rtol=2e-3, atol=2e-3), "f32 Pallas != reference"

    # 2) default fast path: bf16 MXU operands (f32 accumulate + f32 softmax/ELU/sigmoid)
    #    compared against a matched-precision reference; tolerance covers bf16
    #    quantization boundaries amplified through the two softmax layers.
    out_bf16 = parallel_gat(x, adj_1, adj_2, params)
    jax.block_until_ready(out_bf16)
    ref_bf16 = parallel_gat_ref(x, adj_1, adj_2, params, matmul_dtype=jnp.bfloat16)
    assert out_bf16.shape == (B, N, T, out_f)
    assert jnp.allclose(out_bf16, ref_bf16, rtol=3e-2, atol=3e-2), "bf16 Pallas != reference"

    print("KERNEL_OK")
</pallas_src>

<mosaic_0001>
module attributes {stable_mosaic.version = 11 : i64} {
  func.func @_pgat_fused_kernel(%arg0: i32, %arg1: memref<2x8x4xf32, #tpu.memory_space<vmem>>, %arg2: memref<2x8x8xf32, #tpu.memory_space<vmem>>, %arg3: memref<2x4x16xf32, #tpu.memory_space<vmem>>, %arg4: memref<2x16x4xf32, #tpu.memory_space<vmem>>, %arg5: memref<2x8x16xf32, #tpu.memory_space<vmem>>, %arg6: memref<2x4x16xf32, #tpu.memory_space<vmem>>, %arg7: memref<2x1x16xf32, #tpu.memory_space<vmem>>, %arg8: memref<2x16x8xf32, #tpu.memory_space<vmem>>, %arg9: memref<2x8x2xf32, #tpu.memory_space<vmem>>, %arg10: memref<2x8x8xf32, #tpu.memory_space<vmem>>, %arg11: memref<2x16x8xf32, #tpu.memory_space<vmem>>, %arg12: memref<2x1x8xf32, #tpu.memory_space<vmem>>, %arg13: memref<8x8xf32, #tpu.memory_space<vmem>>, %arg14: memref<8x8xf32, #tpu.memory_space<vmem>>, %arg15: memref<1x8xf32, #tpu.memory_space<vmem>>, %arg16: memref<2x8x8xf32, #tpu.memory_space<vmem>>) attributes {dimension_semantics = [#tpu.dimension_semantics<parallel>], iteration_bounds = array<i64: 4>, scalar_prefetch = 0 : i64, scratch_operands = 0 : i64, tpu.core_type = #tpu.core_type<tc>, window_params = [{transform_indices = @transform_0, window_bounds = array<i64: 2, 8, 4>}, {pipeline_mode = #tpu.pipeline_mode<synchronous>, transform_indices = @transform_1, window_bounds = array<i64: 2, 8, 8>}, {pipeline_mode = #tpu.pipeline_mode<synchronous>, transform_indices = @transform_2, window_bounds = array<i64: 2, 4, 16>}, {pipeline_mode = #tpu.pipeline_mode<synchronous>, transform_indices = @transform_3, window_bounds = array<i64: 2, 16, 4>}, {pipeline_mode = #tpu.pipeline_mode<synchronous>, transform_indices = @transform_4, window_bounds = array<i64: 2, 8, 16>}, {pipeline_mode = #tpu.pipeline_mode<synchronous>, transform_indices = @transform_5, window_bounds = array<i64: 2, 4, 16>}, {pipeline_mode = #tpu.pipeline_mode<synchronous>, transform_indices = @transform_6, window_bounds = array<i64: 2, 1, 16>}, {pipeline_mode = #tpu.pipeline_mode<synchronous>, transform_indices = @transform_7, window_bounds = array<i64: 2, 16, 8>}, {pipeline_mode = #tpu.pipeline_mode<synchronous>, transform_indices = @transform_8, window_bounds = array<i64: 2, 8, 2>}, {pipeline_mode = #tpu.pipeline_mode<synchronous>, transform_indices = @transform_9, window_bounds = array<i64: 2, 8, 8>}, {pipeline_mode = #tpu.pipeline_mode<synchronous>, transform_indices = @transform_10, window_bounds = array<i64: 2, 16, 8>}, {pipeline_mode = #tpu.pipeline_mode<synchronous>, transform_indices = @transform_11, window_bounds = array<i64: 2, 1, 8>}, {pipeline_mode = #tpu.pipeline_mode<synchronous>, transform_indices = @transform_12, window_bounds = array<i64: 8, 8>}, {pipeline_mode = #tpu.pipeline_mode<synchronous>, transform_indices = @transform_13, window_bounds = array<i64: 8, 8>}, {pipeline_mode = #tpu.pipeline_mode<synchronous>, transform_indices = @transform_14, window_bounds = array<i64: 1, 8>}, {transform_indices = @transform_15, window_bounds = array<i64: 2, 8, 8>}]} {
    %c0 = arith.constant 0 : index
    %c0_0 = arith.constant 0 : index
    %c0_1 = arith.constant 0 : index
    %0 = vector.load %arg1[%c0, %c0_0, %c0_1] : memref<2x8x4xf32, #tpu.memory_space<vmem>>, vector<2x8x4xf32>
    %1 = vector.shape_cast %0 : vector<2x8x4xf32> to vector<16x4xf32>
    %c0_2 = arith.constant 0 : index
    %c0_3 = arith.constant 0 : index
    %c0_4 = arith.constant 0 : index
    %2 = vector.load %arg2[%c0_2, %c0_3, %c0_4] : memref<2x8x8xf32, #tpu.memory_space<vmem>>, vector<1x8x8xf32>
    %3 = vector.shape_cast %2 : vector<1x8x8xf32> to vector<8x8xf32>
    %c0_5 = arith.constant 0 : index
    %c0_6 = arith.constant 0 : index
    %c0_7 = arith.constant 0 : index
    %4 = vector.load %arg3[%c0_5, %c0_6, %c0_7] : memref<2x4x16xf32, #tpu.memory_space<vmem>>, vector<1x4x16xf32>
    %5 = vector.shape_cast %4 : vector<1x4x16xf32> to vector<4x16xf32>
    %cst = arith.constant dense<0.000000e+00> : vector<16x16xf32>
    %6 = tpu.matmul %1, %5, %cst {dimension_numbers = #tpu.dot_dimension_numbers<[1], [0], [0], [1], [0, 0, 1, 1], [], []>} : vector<16x4xf32>, vector<4x16xf32>, vector<16x16xf32> -> vector<16x16xf32>
    %c0_8 = arith.constant 0 : index
    %c0_9 = arith.constant 0 : index
    %c0_10 = arith.constant 0 : index
    %7 = vector.load %arg4[%c0_8, %c0_9, %c0_10] : memref<2x16x4xf32, #tpu.memory_space<vmem>>, vector<1x16x4xf32>
    %8 = vector.shape_cast %7 : vector<1x16x4xf32> to vector<16x4xf32>
    %cst_11 = arith.constant dense<0.000000e+00> : vector<16x4xf32>
    %9 = tpu.matmul %6, %8, %cst_11 {dimension_numbers = #tpu.dot_dimension_numbers<[1], [0], [0], [1], [0, 0, 1, 1], [], []>} : vector<16x16xf32>, vector<16x4xf32>, vector<16x4xf32> -> vector<16x4xf32>
    %10 = vector.shape_cast %6 : vector<16x16xf32> to vector<2x8x16xf32>
    %11 = vector.shape_cast %9 : vector<16x4xf32> to vector<2x8x4xf32>
    %12 = vector.extract_strided_slice %11 {offsets = [0, 0, 2], sizes = [2, 8, 2], strides = [1, 1, 1]} : vector<2x8x4xf32> to vector<2x8x2xf32>
    %13 = tpu.transpose %12, [0, 2, 1] : vector<2x8x2xf32> -> vector<2x2x8xf32>
    %c0_12 = arith.constant 0 : index
    %c0_13 = arith.constant 0 : index
    %c0_14 = arith.constant 0 : index
    %14 = vector.load %arg6[%c0_12, %c0_13, %c0_14] : memref<2x4x16xf32, #tpu.memory_space<vmem>>, vector<1x4x16xf32>
    %15 = vector.shape_cast %14 : vector<1x4x16xf32> to vector<4x16xf32>
    %cst_15 = arith.constant dense<0.000000e+00> : vector<16x16xf32>
    %16 = tpu.matmul %1, %15, %cst_15 {dimension_numbers = #tpu.dot_dimension_numbers<[1], [0], [0], [1], [0, 0, 1, 1], [], []>} : vector<16x4xf32>, vector<4x16xf32>, vector<16x16xf32> -> vector<16x16xf32>
    %17 = vector.shape_cast %16 : vector<16x16xf32> to vector<2x8x16xf32>
    %c0_16 = arith.constant 0 : index
    %c0_17 = arith.constant 0 : index
    %c0_18 = arith.constant 0 : index
    %18 = vector.load %arg7[%c0_16, %c0_17, %c0_18] : memref<2x1x16xf32, #tpu.memory_space<vmem>>, vector<1x1x16xf32>
    %19 = vector.shape_cast %18 : vector<1x1x16xf32> to vector<1x16xf32>
    %20 = vector.shape_cast %19 : vector<1x16xf32> to vector<1x1x16xf32>
    %21 = vector.broadcast %20 : vector<1x1x16xf32> to vector<2x8x16xf32>
    %22 = arith.addf %17, %21 : vector<2x8x16xf32>
    %c0_19 = arith.constant 0 : index
    %c0_20 = arith.constant 0 : index
    %c0_21 = arith.constant 0 : index
    %23 = vector.load %arg8[%c0_19, %c0_20, %c0_21] : memref<2x16x8xf32, #tpu.memory_space<vmem>>, vector<1x16x8xf32>
    %24 = vector.shape_cast %23 : vector<1x16x8xf32> to vector<16x8xf32>
    %c0_22 = arith.constant 0 : index
    %c0_23 = arith.constant 0 : index
    %c0_24 = arith.constant 0 : index
    %25 = vector.load %arg5[%c0_22, %c0_23, %c0_24] : memref<2x8x16xf32, #tpu.memory_space<vmem>>, vector<1x8x16xf32>
    %26 = vector.shape_cast %25 : vector<1x8x16xf32> to vector<8x16xf32>
    %cst_25 = arith.constant 0.000000e+00 : f32
    %27 = vector.broadcast %cst_25 : f32 to vector<16x8xf32>
    %cst_26 = arith.constant 0.000000e+00 : f32
    %28 = vector.broadcast %cst_26 : f32 to vector<16x8xf32>
    %29 = vector.extract_strided_slice %11 {offsets = [0, 0, 0], sizes = [2, 8, 1], strides = [1, 1, 1]} : vector<2x8x4xf32> to vector<2x8x1xf32>
    %30 = vector.extract_strided_slice %13 {offsets = [0, 0, 0], sizes = [2, 1, 8], strides = [1, 1, 1]} : vector<2x2x8xf32> to vector<2x1x8xf32>
    %31 = vector.extract_strided_slice %10 {offsets = [0, 0, 0], sizes = [2, 8, 8], strides = [1, 1, 1]} : vector<2x8x16xf32> to vector<2x8x8xf32>
    %32 = vector.broadcast %29 : vector<2x8x1xf32> to vector<2x8x8xf32>
    %33 = vector.broadcast %30 : vector<2x1x8xf32> to vector<2x8x8xf32>
    %34 = arith.addf %32, %33 : vector<2x8x8xf32>
    %cst_27 = arith.constant 0.000000e+00 : f32
    %35 = vector.broadcast %cst_27 : f32 to vector<2x8x8xf32>
    %36 = arith.cmpf ogt, %34, %35 : vector<2x8x8xf32>
    %cst_28 = arith.constant 2.000000e-01 : f32
    %37 = vector.broadcast %cst_28 : f32 to vector<2x8x8xf32>
    %38 = arith.mulf %37, %34 : vector<2x8x8xf32>
    %39 = arith.select %36, %34, %38 : vector<2x8x8xi1>, vector<2x8x8xf32>
    %40 = vector.shape_cast %3 : vector<8x8xf32> to vector<1x8x8xf32>
    %41 = vector.broadcast %40 : vector<1x8x8xf32> to vector<2x8x8xf32>
    %42 = arith.mulf %41, %39 : vector<2x8x8xf32>
    %cst_29 = arith.constant dense<0xFF800000> : vector<2x8xf32>
    %43 = vector.multi_reduction <maximumf>, %42, %cst_29 [1] : vector<2x8x8xf32> to vector<2x8xf32>
    %44 = vector.shape_cast %43 : vector<2x8xf32> to vector<2x1x8xf32>
    %45 = vector.broadcast %44 : vector<2x1x8xf32> to vector<2x8x8xf32>
    %46 = arith.subf %42, %45 : vector<2x8x8xf32>
    %47 = math.exp %46 : vector<2x8x8xf32>
    %cst_30 = arith.constant dense<0.000000e+00> : vector<2x8xf32>
    %48 = vector.multi_reduction <add>, %47, %cst_30 [1] : vector<2x8x8xf32> to vector<2x8xf32>
    %49 = vector.shape_cast %48 : vector<2x8xf32> to vector<2x1x8xf32>
    %50 = vector.broadcast %49 : vector<2x1x8xf32> to vector<2x8x8xf32>
    %51 = arith.divf %47, %50 : vector<2x8x8xf32>
    "tpu.trace_start"() <{level = 10 : i32, message = "bij,bjf->bif"}> : () -> ()
    %cst_31 = arith.constant dense<0.000000e+00> : vector<2x8x8xf32>
    %52 = tpu.matmul %51, %31, %cst_31 {dimension_numbers = #tpu.dot_dimension_numbers<[2], [1], [1], [2], [0, 0, 0, 1, 1, 2], [0], [0]>} : vector<2x8x8xf32>, vector<2x8x8xf32>, vector<2x8x8xf32> -> vector<2x8x8xf32>
    "tpu.trace_stop"() : () -> ()
    %53 = vector.extract_strided_slice %26 {offsets = [0, 0], sizes = [8, 8], strides = [1, 1]} : vector<8x16xf32> to vector<8x8xf32>
    %54 = vector.shape_cast %53 : vector<8x8xf32> to vector<1x8x8xf32>
    %55 = vector.broadcast %54 : vector<1x8x8xf32> to vector<2x8x8xf32>
    %56 = arith.addf %52, %55 : vector<2x8x8xf32>
    %57 = vector.extract_strided_slice %22 {offsets = [0, 0, 0], sizes = [2, 8, 8], strides = [1, 1, 1]} : vector<2x8x16xf32> to vector<2x8x8xf32>
    %58 = arith.addf %56, %57 : vector<2x8x8xf32>
    %59 = vector.shape_cast %58 : vector<2x8x8xf32> to vector<16x8xf32>
    %60 = vector.extract_strided_slice %24 {offsets = [0, 0], sizes = [8, 8], strides = [1, 1]} : vector<16x8xf32> to vector<8x8xf32>
    %cst_32 = arith.constant dense<0.000000e+00> : vector<16x8xf32>
    %61 = tpu.matmul %59, %60, %cst_32 {dimension_numbers = #tpu.dot_dimension_numbers<[1], [0], [0], [1], [0, 0, 1, 1], [], []>} : vector<16x8xf32>, vector<8x8xf32>, vector<16x8xf32> -> vector<16x8xf32>
    %62 = arith.addf %27, %61 : vector<16x8xf32>
    %c0_33 = arith.constant 0 : index
    %c0_34 = arith.constant 0 : index
    %c0_35 = arith.constant 0 : index
    %63 = vector.load %arg11[%c0_33, %c0_34, %c0_35] : memref<2x16x8xf32, #tpu.memory_space<vmem>>, vector<1x16x8xf32>
    %64 = vector.shape_cast %63 : vector<1x16x8xf32> to vector<16x8xf32>
    %65 = vector.extract_strided_slice %64 {offsets = [0, 0], sizes = [8, 8], strides = [1, 1]} : vector<16x8xf32> to vector<8x8xf32>
    %cst_36 = arith.constant dense<0.000000e+00> : vector<16x8xf32>
    %66 = tpu.matmul %59, %65, %cst_36 {dimension_numbers = #tpu.dot_dimension_numbers<[1], [0], [0], [1], [0, 0, 1, 1], [], []>} : vector<16x8xf32>, vector<8x8xf32>, vector<16x8xf32> -> vector<16x8xf32>
    %67 = arith.addf %28, %66 : vector<16x8xf32>
    %68 = vector.extract_strided_slice %11 {offsets = [0, 0, 1], sizes = [2, 8, 1], strides = [1, 1, 1]} : vector<2x8x4xf32> to vector<2x8x1xf32>
    %69 = vector.extract_strided_slice %13 {offsets = [0, 1, 0], sizes = [2, 1, 8], strides = [1, 1, 1]} : vector<2x2x8xf32> to vector<2x1x8xf32>
    %70 = vector.extract_strided_slice %10 {offsets = [0, 0, 8], sizes = [2, 8, 8], strides = [1, 1, 1]} : vector<2x8x16xf32> to vector<2x8x8xf32>
    %71 = vector.broadcast %68 : vector<2x8x1xf32> to vector<2x8x8xf32>
    %72 = vector.broadcast %69 : vector<2x1x8xf32> to vector<2x8x8xf32>
    %73 = arith.addf %71, %72 : vector<2x8x8xf32>
    %cst_37 = arith.constant 0.000000e+00 : f32
    %74 = vector.broadcast %cst_37 : f32 to vector<2x8x8xf32>
    %75 = arith.cmpf ogt, %73, %74 : vector<2x8x8xf32>
    %cst_38 = arith.constant 2.000000e-01 : f32
    %76 = vector.broadcast %cst_38 : f32 to vector<2x8x8xf32>
    %77 = arith.mulf %76, %73 : vector<2x8x8xf32>
    %78 = arith.select %75, %73, %77 : vector<2x8x8xi1>, vector<2x8x8xf32>
    %79 = vector.shape_cast %3 : vector<8x8xf32> to vector<1x8x8xf32>
    %80 = vector.broadcast %79 : vector<1x8x8xf32> to vector<2x8x8xf32>
    %81 = arith.mulf %80, %78 : vector<2x8x8xf32>
    %cst_39 = arith.constant dense<0xFF800000> : vector<2x8xf32>
    %82 = vector.multi_reduction <maximumf>, %81, %cst_39 [1] : vector<2x8x8xf32> to vector<2x8xf32>
    %83 = vector.shape_cast %82 : vector<2x8xf32> to vector<2x1x8xf32>
    %84 = vector.broadcast %83 : vector<2x1x8xf32> to vector<2x8x8xf32>
    %85 = arith.subf %81, %84 : vector<2x8x8xf32>
    %86 = math.exp %85 : vector<2x8x8xf32>
    %cst_40 = arith.constant dense<0.000000e+00> : vector<2x8xf32>
    %87 = vector.multi_reduction <add>, %86, %cst_40 [1] : vector<2x8x8xf32> to vector<2x8xf32>
    %88 = vector.shape_cast %87 : vector<2x8xf32> to vector<2x1x8xf32>
    %89 = vector.broadcast %88 : vector<2x1x8xf32> to vector<2x8x8xf32>
    %90 = arith.divf %86, %89 : vector<2x8x8xf32>
    "tpu.trace_start"() <{level = 10 : i32, message = "bij,bjf->bif"}> : () -> ()
    %cst_41 = arith.constant dense<0.000000e+00> : vector<2x8x8xf32>
    %91 = tpu.matmul %90, %70, %cst_41 {dimension_numbers = #tpu.dot_dimension_numbers<[2], [1], [1], [2], [0, 0, 0, 1, 1, 2], [0], [0]>} : vector<2x8x8xf32>, vector<2x8x8xf32>, vector<2x8x8xf32> -> vector<2x8x8xf32>
    "tpu.trace_stop"() : () -> ()
    %92 = vector.extract_strided_slice %26 {offsets = [0, 8], sizes = [8, 8], strides = [1, 1]} : vector<8x16xf32> to vector<8x8xf32>
    %93 = vector.shape_cast %92 : vector<8x8xf32> to vector<1x8x8xf32>
    %94 = vector.broadcast %93 : vector<1x8x8xf32> to vector<2x8x8xf32>
    %95 = arith.addf %91, %94 : vector<2x8x8xf32>
    %96 = vector.extract_strided_slice %22 {offsets = [0, 0, 8], sizes = [2, 8, 8], strides = [1, 1, 1]} : vector<2x8x16xf32> to vector<2x8x8xf32>
    %97 = arith.addf %95, %96 : vector<2x8x8xf32>
    %98 = vector.shape_cast %97 : vector<2x8x8xf32> to vector<16x8xf32>
    %99 = vector.extract_strided_slice %24 {offsets = [8, 0], sizes = [8, 8], strides = [1, 1]} : vector<16x8xf32> to vector<8x8xf32>
    %cst_42 = arith.constant dense<0.000000e+00> : vector<16x8xf32>
    %100 = tpu.matmul %98, %99, %cst_42 {dimension_numbers = #tpu.dot_dimension_numbers<[1], [0], [0], [1], [0, 0, 1, 1], [], []>} : vector<16x8xf32>, vector<8x8xf32>, vector<16x8xf32> -> vector<16x8xf32>
    %101 = arith.addf %62, %100 : vector<16x8xf32>
    %c0_43 = arith.constant 0 : index
    %c0_44 = arith.constant 0 : index
    %c0_45 = arith.constant 0 : index
    %102 = vector.load %arg11[%c0_43, %c0_44, %c0_45] : memref<2x16x8xf32, #tpu.memory_space<vmem>>, vector<1x16x8xf32>
    %103 = vector.shape_cast %102 : vector<1x16x8xf32> to vector<16x8xf32>
    %104 = vector.extract_strided_slice %103 {offsets = [8, 0], sizes = [8, 8], strides = [1, 1]} : vector<16x8xf32> to vector<8x8xf32>
    %cst_46 = arith.constant dense<0.000000e+00> : vector<16x8xf32>
    %105 = tpu.matmul %98, %104, %cst_46 {dimension_numbers = #tpu.dot_dimension_numbers<[1], [0], [0], [1], [0, 0, 1, 1], [], []>} : vector<16x8xf32>, vector<8x8xf32>, vector<16x8xf32> -> vector<16x8xf32>
    %106 = arith.addf %67, %105 : vector<16x8xf32>
    %c0_47 = arith.constant 0 : index
    %c0_48 = arith.constant 0 : index
    %c0_49 = arith.constant 0 : index
    %107 = vector.load %arg9[%c0_47, %c0_48, %c0_49] : memref<2x8x2xf32, #tpu.memory_space<vmem>>, vector<1x8x2xf32>
    %108 = vector.shape_cast %107 : vector<1x8x2xf32> to vector<8x2xf32>
    %cst_50 = arith.constant dense<0.000000e+00> : vector<16x2xf32>
    %109 = tpu.matmul %101, %108, %cst_50 {dimension_numbers = #tpu.dot_dimension_numbers<[1], [0], [0], [1], [0, 0, 1, 1], [], []>} : vector<16x8xf32>, vector<8x2xf32>, vector<16x2xf32> -> vector<16x2xf32>
    %110 = vector.shape_cast %109 : vector<16x2xf32> to vector<2x8x2xf32>
    %111 = vector.shape_cast %101 : vector<16x8xf32> to vector<2x8x8xf32>
    %112 = vector.extract_strided_slice %110 {offsets = [0, 0, 1], sizes = [2, 8, 1], strides = [1, 1, 1]} : vector<2x8x2xf32> to vector<2x8x1xf32>
    %113 = tpu.transpose %112, [0, 2, 1] : vector<2x8x1xf32> -> vector<2x1x8xf32>
    %114 = vector.extract_strided_slice %110 {offsets = [0, 0, 0], sizes = [2, 8, 1], strides = [1, 1, 1]} : vector<2x8x2xf32> to vector<2x8x1xf32>
    %115 = vector.broadcast %114 : vector<2x8x1xf32> to vector<2x8x8xf32>
    %116 = vector.broadcast %113 : vector<2x1x8xf32> to vector<2x8x8xf32>
    %117 = arith.addf %115, %116 : vector<2x8x8xf32>
    %cst_51 = arith.constant 0.000000e+00 : f32
    %118 = vector.broadcast %cst_51 : f32 to vector<2x8x8xf32>
    %119 = arith.cmpf ogt, %117, %118 : vector<2x8x8xf32>
    %cst_52 = arith.constant 2.000000e-01 : f32
    %120 = vector.broadcast %cst_52 : f32 to vector<2x8x8xf32>
    %121 = arith.mulf %120, %117 : vector<2x8x8xf32>
    %122 = arith.select %119, %117, %121 : vector<2x8x8xi1>, vector<2x8x8xf32>
    %123 = vector.shape_cast %3 : vector<8x8xf32> to vector<1x8x8xf32>
    %124 = vector.broadcast %123 : vector<1x8x8xf32> to vector<2x8x8xf32>
    %125 = arith.mulf %124, %122 : vector<2x8x8xf32>
    %cst_53 = arith.constant dense<0xFF800000> : vector<2x8xf32>
    %126 = vector.multi_reduction <maximumf>, %125, %cst_53 [1] : vector<2x8x8xf32> to vector<2x8xf32>
    %127 = vector.shape_cast %126 : vector<2x8xf32> to vector<2x1x8xf32>
    %128 = vector.broadcast %127 : vector<2x1x8xf32> to vector<2x8x8xf32>
    %129 = arith.subf %125, %128 : vector<2x8x8xf32>
    %130 = math.exp %129 : vector<2x8x8xf32>
    %cst_54 = arith.constant dense<0.000000e+00> : vector<2x8xf32>
    %131 = vector.multi_reduction <add>, %130, %cst_54 [1] : vector<2x8x8xf32> to vector<2x8xf32>
    %132 = vector.shape_cast %131 : vector<2x8xf32> to vector<2x1x8xf32>
    %133 = vector.broadcast %132 : vector<2x1x8xf32> to vector<2x8x8xf32>
    %134 = arith.divf %130, %133 : vector<2x8x8xf32>
    "tpu.trace_start"() <{level = 10 : i32, message = "bij,bjf->bif"}> : () -> ()
    %cst_55 = arith.constant dense<0.000000e+00> : vector<2x8x8xf32>
    %135 = tpu.matmul %134, %111, %cst_55 {dimension_numbers = #tpu.dot_dimension_numbers<[2], [1], [1], [2], [0, 0, 0, 1, 1, 2], [0], [0]>} : vector<2x8x8xf32>, vector<2x8x8xf32>, vector<2x8x8xf32> -> vector<2x8x8xf32>
    "tpu.trace_stop"() : () -> ()
    %c0_56 = arith.constant 0 : index
    %c0_57 = arith.constant 0 : index
    %c0_58 = arith.constant 0 : index
    %136 = vector.load %arg10[%c0_56, %c0_57, %c0_58] : memref<2x8x8xf32, #tpu.memory_space<vmem>>, vector<1x8x8xf32>
    %137 = vector.shape_cast %136 : vector<1x8x8xf32> to vector<8x8xf32>
    %138 = vector.shape_cast %137 : vector<8x8xf32> to vector<1x8x8xf32>
    %139 = vector.broadcast %138 : vector<1x8x8xf32> to vector<2x8x8xf32>
    %140 = arith.addf %135, %139 : vector<2x8x8xf32>
    %141 = vector.shape_cast %106 : vector<16x8xf32> to vector<2x8x8xf32>
    %142 = arith.addf %140, %141 : vector<2x8x8xf32>
    %c0_59 = arith.constant 0 : index
    %c0_60 = arith.constant 0 : index
    %c0_61 = arith.constant 0 : index
    %143 = vector.load %arg12[%c0_59, %c0_60, %c0_61] : memref<2x1x8xf32, #tpu.memory_space<vmem>>, vector<1x1x8xf32>
    %144 = vector.shape_cast %143 : vector<1x1x8xf32> to vector<1x8xf32>
    %145 = vector.shape_cast %144 : vector<1x8xf32> to vector<1x1x8xf32>
    %146 = vector.broadcast %145 : vector<1x1x8xf32> to vector<2x8x8xf32>
    %147 = arith.addf %142, %146 : vector<2x8x8xf32>
    %cst_62 = arith.constant 0.000000e+00 : f32
    %148 = vector.broadcast %cst_62 : f32 to vector<2x8x8xf32>
    %149 = arith.cmpf ogt, %147, %148 : vector<2x8x8xf32>
    %cst_63 = arith.constant 0.000000e+00 : f32
    %150 = vector.broadcast %cst_63 : f32 to vector<2x8x8xf32>
    %151 = arith.minimumf %147, %150 : vector<2x8x8xf32>
    %152 = math.exp %151 : vector<2x8x8xf32>
    %cst_64 = arith.constant 1.000000e+00 : f32
    %153 = vector.broadcast %cst_64 : f32 to vector<2x8x8xf32>
    %154 = arith.subf %152, %153 : vector<2x8x8xf32>
    %155 = arith.select %149, %147, %154 : vector<2x8x8xi1>, vector<2x8x8xf32>
    %c1 = arith.constant 1 : index
    %c0_65 = arith.constant 0 : index
    %c0_66 = arith.constant 0 : index
    %156 = vector.load %arg2[%c1, %c0_65, %c0_66] : memref<2x8x8xf32, #tpu.memory_space<vmem>>, vector<1x8x8xf32>
    %157 = vector.shape_cast %156 : vector<1x8x8xf32> to vector<8x8xf32>
    %c1_67 = arith.constant 1 : index
    %c0_68 = arith.constant 0 : index
    %c0_69 = arith.constant 0 : index
    %158 = vector.load %arg3[%c1_67, %c0_68, %c0_69] : memref<2x4x16xf32, #tpu.memory_space<vmem>>, vector<1x4x16xf32>
    %159 = vector.shape_cast %158 : vector<1x4x16xf32> to vector<4x16xf32>
    %cst_70 = arith.constant dense<0.000000e+00> : vector<16x16xf32>
    %160 = tpu.matmul %1, %159, %cst_70 {dimension_numbers = #tpu.dot_dimension_numbers<[1], [0], [0], [1], [0, 0, 1, 1], [], []>} : vector<16x4xf32>, vector<4x16xf32>, vector<16x16xf32> -> vector<16x16xf32>
    %c1_71 = arith.constant 1 : index
    %c0_72 = arith.constant 0 : index
    %c0_73 = arith.constant 0 : index
    %161 = vector.load %arg4[%c1_71, %c0_72, %c0_73] : memref<2x16x4xf32, #tpu.memory_space<vmem>>, vector<1x16x4xf32>
    %162 = vector.shape_cast %161 : vector<1x16x4xf32> to vector<16x4xf32>
    %cst_74 = arith.constant dense<0.000000e+00> : vector<16x4xf32>
    %163 = tpu.matmul %160, %162, %cst_74 {dimension_numbers = #tpu.dot_dimension_numbers<[1], [0], [0], [1], [0, 0, 1, 1], [], []>} : vector<16x16xf32>, vector<16x4xf32>, vector<16x4xf32> -> vector<16x4xf32>
    %164 = vector.shape_cast %160 : vector<16x16xf32> to vector<2x8x16xf32>
    %165 = vector.shape_cast %163 : vector<16x4xf32> to vector<2x8x4xf32>
    %166 = vector.extract_strided_slice %165 {offsets = [0, 0, 2], sizes = [2, 8, 2], strides = [1, 1, 1]} : vector<2x8x4xf32> to vector<2x8x2xf32>
    %167 = tpu.transpose %166, [0, 2, 1] : vector<2x8x2xf32> -> vector<2x2x8xf32>
    %c1_75 = arith.constant 1 : index
    %c0_76 = arith.constant 0 : index
    %c0_77 = arith.constant 0 : index
    %168 = vector.load %arg6[%c1_75, %c0_76, %c0_77] : memref<2x4x16xf32, #tpu.memory_space<vmem>>, vector<1x4x16xf32>
    %169 = vector.shape_cast %168 : vector<1x4x16xf32> to vector<4x16xf32>
    %cst_78 = arith.constant dense<0.000000e+00> : vector<16x16xf32>
    %170 = tpu.matmul %1, %169, %cst_78 {dimension_numbers = #tpu.dot_dimension_numbers<[1], [0], [0], [1], [0, 0, 1, 1], [], []>} : vector<16x4xf32>, vector<4x16xf32>, vector<16x16xf32> -> vector<16x16xf32>
    %171 = vector.shape_cast %170 : vector<16x16xf32> to vector<2x8x16xf32>
    %c1_79 = arith.constant 1 : index
    %c0_80 = arith.constant 0 : index
    %c0_81 = arith.constant 0 : index
    %172 = vector.load %arg7[%c1_79, %c0_80, %c0_81] : memref<2x1x16xf32, #tpu.memory_space<vmem>>, vector<1x1x16xf32>
    %173 = vector.shape_cast %172 : vector<1x1x16xf32> to vector<1x16xf32>
    %174 = vector.shape_cast %173 : vector<1x16xf32> to vector<1x1x16xf32>
    %175 = vector.broadcast %174 : vector<1x1x16xf32> to vector<2x8x16xf32>
    %176 = arith.addf %171, %175 : vector<2x8x16xf32>
    %c1_82 = arith.constant 1 : index
    %c0_83 = arith.constant 0 : index
    %c0_84 = arith.constant 0 : index
    %177 = vector.load %arg8[%c1_82, %c0_83, %c0_84] : memref<2x16x8xf32, #tpu.memory_space<vmem>>, vector<1x16x8xf32>
    %178 = vector.shape_cast %177 : vector<1x16x8xf32> to vector<16x8xf32>
    %c1_85 = arith.constant 1 : index
    %c0_86 = arith.constant 0 : index
    %c0_87 = arith.constant 0 : index
    %179 = vector.load %arg5[%c1_85, %c0_86, %c0_87] : memref<2x8x16xf32, #tpu.memory_space<vmem>>, vector<1x8x16xf32>
    %180 = vector.shape_cast %179 : vector<1x8x16xf32> to vector<8x16xf32>
    %cst_88 = arith.constant 0.000000e+00 : f32
    %181 = vector.broadcast %cst_88 : f32 to vector<16x8xf32>
    %cst_89 = arith.constant 0.000000e+00 : f32
    %182 = vector.broadcast %cst_89 : f32 to vector<16x8xf32>
    %183 = vector.extract_strided_slice %165 {offsets = [0, 0, 0], sizes = [2, 8, 1], strides = [1, 1, 1]} : vector<2x8x4xf32> to vector<2x8x1xf32>
    %184 = vector.extract_strided_slice %167 {offsets = [0, 0, 0], sizes = [2, 1, 8], strides = [1, 1, 1]} : vector<2x2x8xf32> to vector<2x1x8xf32>
    %185 = vector.extract_strided_slice %164 {offsets = [0, 0, 0], sizes = [2, 8, 8], strides = [1, 1, 1]} : vector<2x8x16xf32> to vector<2x8x8xf32>
    %186 = vector.broadcast %183 : vector<2x8x1xf32> to vector<2x8x8xf32>
    %187 = vector.broadcast %184 : vector<2x1x8xf32> to vector<2x8x8xf32>
    %188 = arith.addf %186, %187 : vector<2x8x8xf32>
    %cst_90 = arith.constant 0.000000e+00 : f32
    %189 = vector.broadcast %cst_90 : f32 to vector<2x8x8xf32>
    %190 = arith.cmpf ogt, %188, %189 : vector<2x8x8xf32>
    %cst_91 = arith.constant 2.000000e-01 : f32
    %191 = vector.broadcast %cst_91 : f32 to vector<2x8x8xf32>
    %192 = arith.mulf %191, %188 : vector<2x8x8xf32>
    %193 = arith.select %190, %188, %192 : vector<2x8x8xi1>, vector<2x8x8xf32>
    %194 = vector.shape_cast %157 : vector<8x8xf32> to vector<1x8x8xf32>
    %195 = vector.broadcast %194 : vector<1x8x8xf32> to vector<2x8x8xf32>
    %196 = arith.mulf %195, %193 : vector<2x8x8xf32>
    %cst_92 = arith.constant dense<0xFF800000> : vector<2x8xf32>
    %197 = vector.multi_reduction <maximumf>, %196, %cst_92 [1] : vector<2x8x8xf32> to vector<2x8xf32>
    %198 = vector.shape_cast %197 : vector<2x8xf32> to vector<2x1x8xf32>
    %199 = vector.broadcast %198 : vector<2x1x8xf32> to vector<2x8x8xf32>
    %200 = arith.subf %196, %199 : vector<2x8x8xf32>
    %201 = math.exp %200 : vector<2x8x8xf32>
    %cst_93 = arith.constant dense<0.000000e+00> : vector<2x8xf32>
    %202 = vector.multi_reduction <add>, %201, %cst_93 [1] : vector<2x8x8xf32> to vector<2x8xf32>
    %203 = vector.shape_cast %202 : vector<2x8xf32> to vector<2x1x8xf32>
    %204 = vector.broadcast %203 : vector<2x1x8xf32> to vector<2x8x8xf32>
    %205 = arith.divf %201, %204 : vector<2x8x8xf32>
    "tpu.trace_start"() <{level = 10 : i32, message = "bij,bjf->bif"}> : () -> ()
    %cst_94 = arith.constant dense<0.000000e+00> : vector<2x8x8xf32>
    %206 = tpu.matmul %205, %185, %cst_94 {dimension_numbers = #tpu.dot_dimension_numbers<[2], [1], [1], [2], [0, 0, 0, 1, 1, 2], [0], [0]>} : vector<2x8x8xf32>, vector<2x8x8xf32>, vector<2x8x8xf32> -> vector<2x8x8xf32>
    "tpu.trace_stop"() : () -> ()
    %207 = vector.extract_strided_slice %180 {offsets = [0, 0], sizes = [8, 8], strides = [1, 1]} : vector<8x16xf32> to vector<8x8xf32>
    %208 = vector.shape_cast %207 : vector<8x8xf32> to vector<1x8x8xf32>
    %209 = vector.broadcast %208 : vector<1x8x8xf32> to vector<2x8x8xf32>
    %210 = arith.addf %206, %209 : vector<2x8x8xf32>
    %211 = vector.extract_strided_slice %176 {offsets = [0, 0, 0], sizes = [2, 8, 8], strides = [1, 1, 1]} : vector<2x8x16xf32> to vector<2x8x8xf32>
    %212 = arith.addf %210, %211 : vector<2x8x8xf32>
    %213 = vector.shape_cast %212 : vector<2x8x8xf32> to vector<16x8xf32>
    %214 = vector.extract_strided_slice %178 {offsets = [0, 0], sizes = [8, 8], strides = [1, 1]} : vector<16x8xf32> to vector<8x8xf32>
    %cst_95 = arith.constant dense<0.000000e+00> : vector<16x8xf32>
    %215 = tpu.matmul %213, %214, %cst_95 {dimension_numbers = #tpu.dot_dimension_numbers<[1], [0], [0], [1], [0, 0, 1, 1], [], []>} : vector<16x8xf32>, vector<8x8xf32>, vector<16x8xf32> -> vector<16x8xf32>
    %216 = arith.addf %181, %215 : vector<16x8xf32>
    %c1_96 = arith.constant 1 : index
    %c0_97 = arith.constant 0 : index
    %c0_98 = arith.constant 0 : index
    %217 = vector.load %arg11[%c1_96, %c0_97, %c0_98] : memref<2x16x8xf32, #tpu.memory_space<vmem>>, vector<1x16x8xf32>
    %218 = vector.shape_cast %217 : vector<1x16x8xf32> to vector<16x8xf32>
    %219 = vector.extract_strided_slice %218 {offsets = [0, 0], sizes = [8, 8], strides = [1, 1]} : vector<16x8xf32> to vector<8x8xf32>
    %cst_99 = arith.constant dense<0.000000e+00> : vector<16x8xf32>
    %220 = tpu.matmul %213, %219, %cst_99 {dimension_numbers = #tpu.dot_dimension_numbers<[1], [0], [0], [1], [0, 0, 1, 1], [], []>} : vector<16x8xf32>, vector<8x8xf32>, vector<16x8xf32> -> vector<16x8xf32>
    %221 = arith.addf %182, %220 : vector<16x8xf32>
    %222 = vector.extract_strided_slice %165 {offsets = [0, 0, 1], sizes = [2, 8, 1], strides = [1, 1, 1]} : vector<2x8x4xf32> to vector<2x8x1xf32>
    %223 = vector.extract_strided_slice %167 {offsets = [0, 1, 0], sizes = [2, 1, 8], strides = [1, 1, 1]} : vector<2x2x8xf32> to vector<2x1x8xf32>
    %224 = vector.extract_strided_slice %164 {offsets = [0, 0, 8], sizes = [2, 8, 8], strides = [1, 1, 1]} : vector<2x8x16xf32> to vector<2x8x8xf32>
    %225 = vector.broadcast %222 : vector<2x8x1xf32> to vector<2x8x8xf32>
    %226 = vector.broadcast %223 : vector<2x1x8xf32> to vector<2x8x8xf32>
    %227 = arith.addf %225, %226 : vector<2x8x8xf32>
    %cst_100 = arith.constant 0.000000e+00 : f32
    %228 = vector.broadcast %cst_100 : f32 to vector<2x8x8xf32>
    %229 = arith.cmpf ogt, %227, %228 : vector<2x8x8xf32>
    %cst_101 = arith.constant 2.000000e-01 : f32
    %230 = vector.broadcast %cst_101 : f32 to vector<2x8x8xf32>
    %231 = arith.mulf %230, %227 : vector<2x8x8xf32>
    %232 = arith.select %229, %227, %231 : vector<2x8x8xi1>, vector<2x8x8xf32>
    %233 = vector.shape_cast %157 : vector<8x8xf32> to vector<1x8x8xf32>
    %234 = vector.broadcast %233 : vector<1x8x8xf32> to vector<2x8x8xf32>
    %235 = arith.mulf %234, %232 : vector<2x8x8xf32>
    %cst_102 = arith.constant dense<0xFF800000> : vector<2x8xf32>
    %236 = vector.multi_reduction <maximumf>, %235, %cst_102 [1] : vector<2x8x8xf32> to vector<2x8xf32>
    %237 = vector.shape_cast %236 : vector<2x8xf32> to vector<2x1x8xf32>
    %238 = vector.broadcast %237 : vector<2x1x8xf32> to vector<2x8x8xf32>
    %239 = arith.subf %235, %238 : vector<2x8x8xf32>
    %240 = math.exp %239 : vector<2x8x8xf32>
    %cst_103 = arith.constant dense<0.000000e+00> : vector<2x8xf32>
    %241 = vector.multi_reduction <add>, %240, %cst_103 [1] : vector<2x8x8xf32> to vector<2x8xf32>
    %242 = vector.shape_cast %241 : vector<2x8xf32> to vector<2x1x8xf32>
    %243 = vector.broadcast %242 : vector<2x1x8xf32> to vector<2x8x8xf32>
    %244 = arith.divf %240, %243 : vector<2x8x8xf32>
    "tpu.trace_start"() <{level = 10 : i32, message = "bij,bjf->bif"}> : () -> ()
    %cst_104 = arith.constant dense<0.000000e+00> : vector<2x8x8xf32>
    %245 = tpu.matmul %244, %224, %cst_104 {dimension_numbers = #tpu.dot_dimension_numbers<[2], [1], [1], [2], [0, 0, 0, 1, 1, 2], [0], [0]>} : vector<2x8x8xf32>, vector<2x8x8xf32>, vector<2x8x8xf32> -> vector<2x8x8xf32>
    "tpu.trace_stop"() : () -> ()
    %246 = vector.extract_strided_slice %180 {offsets = [0, 8], sizes = [8, 8], strides = [1, 1]} : vector<8x16xf32> to vector<8x8xf32>
    %247 = vector.shape_cast %246 : vector<8x8xf32> to vector<1x8x8xf32>
    %248 = vector.broadcast %247 : vector<1x8x8xf32> to vector<2x8x8xf32>
    %249 = arith.addf %245, %248 : vector<2x8x8xf32>
    %250 = vector.extract_strided_slice %176 {offsets = [0, 0, 8], sizes = [2, 8, 8], strides = [1, 1, 1]} : vector<2x8x16xf32> to vector<2x8x8xf32>
    %251 = arith.addf %249, %250 : vector<2x8x8xf32>
    %252 = vector.shape_cast %251 : vector<2x8x8xf32> to vector<16x8xf32>
    %253 = vector.extract_strided_slice %178 {offsets = [8, 0], sizes = [8, 8], strides = [1, 1]} : vector<16x8xf32> to vector<8x8xf32>
    %cst_105 = arith.constant dense<0.000000e+00> : vector<16x8xf32>
    %254 = tpu.matmul %252, %253, %cst_105 {dimension_numbers = #tpu.dot_dimension_numbers<[1], [0], [0], [1], [0, 0, 1, 1], [], []>} : vector<16x8xf32>, vector<8x8xf32>, vector<16x8xf32> -> vector<16x8xf32>
    %255 = arith.addf %216, %254 : vector<16x8xf32>
    %c1_106 = arith.constant 1 : index
    %c0_107 = arith.constant 0 : index
    %c0_108 = arith.constant 0 : index
    %256 = vector.load %arg11[%c1_106, %c0_107, %c0_108] : memref<2x16x8xf32, #tpu.memory_space<vmem>>, vector<1x16x8xf32>
    %257 = vector.shape_cast %256 : vector<1x16x8xf32> to vector<16x8xf32>
    %258 = vector.extract_strided_slice %257 {offsets = [8, 0], sizes = [8, 8], strides = [1, 1]} : vector<16x8xf32> to vector<8x8xf32>
    %cst_109 = arith.constant dense<0.000000e+00> : vector<16x8xf32>
    %259 = tpu.matmul %252, %258, %cst_109 {dimension_numbers = #tpu.dot_dimension_numbers<[1], [0], [0], [1], [0, 0, 1, 1], [], []>} : vector<16x8xf32>, vector<8x8xf32>, vector<16x8xf32> -> vector<16x8xf32>
    %260 = arith.addf %221, %259 : vector<16x8xf32>
    %c1_110 = arith.constant 1 : index
    %c0_111 = arith.constant 0 : index
    %c0_112 = arith.constant 0 : index
    %261 = vector.load %arg9[%c1_110, %c0_111, %c0_112] : memref<2x8x2xf32, #tpu.memory_space<vmem>>, vector<1x8x2xf32>
    %262 = vector.shape_cast %261 : vector<1x8x2xf32> to vector<8x2xf32>
    %cst_113 = arith.constant dense<0.000000e+00> : vector<16x2xf32>
    %263 = tpu.matmul %255, %262, %cst_113 {dimension_numbers = #tpu.dot_dimension_numbers<[1], [0], [0], [1], [0, 0, 1, 1], [], []>} : vector<16x8xf32>, vector<8x2xf32>, vector<16x2xf32> -> vector<16x2xf32>
    %264 = vector.shape_cast %263 : vector<16x2xf32> to vector<2x8x2xf32>
    %265 = vector.shape_cast %255 : vector<16x8xf32> to vector<2x8x8xf32>
    %266 = vector.extract_strided_slice %264 {offsets = [0, 0, 1], sizes = [2, 8, 1], strides = [1, 1, 1]} : vector<2x8x2xf32> to vector<2x8x1xf32>
    %267 = tpu.transpose %266, [0, 2, 1] : vector<2x8x1xf32> -> vector<2x1x8xf32>
    %268 = vector.extract_strided_slice %264 {offsets = [0, 0, 0], sizes = [2, 8, 1], strides = [1, 1, 1]} : vector<2x8x2xf32> to vector<2x8x1xf32>
    %269 = vector.broadcast %268 : vector<2x8x1xf32> to vector<2x8x8xf32>
    %270 = vector.broadcast %267 : vector<2x1x8xf32> to vector<2x8x8xf32>
    %271 = arith.addf %269, %270 : vector<2x8x8xf32>
    %cst_114 = arith.constant 0.000000e+00 : f32
    %272 = vector.broadcast %cst_114 : f32 to vector<2x8x8xf32>
    %273 = arith.cmpf ogt, %271, %272 : vector<2x8x8xf32>
    %cst_115 = arith.constant 2.000000e-01 : f32
    %274 = vector.broadcast %cst_115 : f32 to vector<2x8x8xf32>
    %275 = arith.mulf %274, %271 : vector<2x8x8xf32>
    %276 = arith.select %273, %271, %275 : vector<2x8x8xi1>, vector<2x8x8xf32>
    %277 = vector.shape_cast %157 : vector<8x8xf32> to vector<1x8x8xf32>
    %278 = vector.broadcast %277 : vector<1x8x8xf32> to vector<2x8x8xf32>
    %279 = arith.mulf %278, %276 : vector<2x8x8xf32>
    %cst_116 = arith.constant dense<0xFF800000> : vector<2x8xf32>
    %280 = vector.multi_reduction <maximumf>, %279, %cst_116 [1] : vector<2x8x8xf32> to vector<2x8xf32>
    %281 = vector.shape_cast %280 : vector<2x8xf32> to vector<2x1x8xf32>
    %282 = vector.broadcast %281 : vector<2x1x8xf32> to vector<2x8x8xf32>
    %283 = arith.subf %279, %282 : vector<2x8x8xf32>
    %284 = math.exp %283 : vector<2x8x8xf32>
    %cst_117 = arith.constant dense<0.000000e+00> : vector<2x8xf32>
    %285 = vector.multi_reduction <add>, %284, %cst_117 [1] : vector<2x8x8xf32> to vector<2x8xf32>
    %286 = vector.shape_cast %285 : vector<2x8xf32> to vector<2x1x8xf32>
    %287 = vector.broadcast %286 : vector<2x1x8xf32> to vector<2x8x8xf32>
    %288 = arith.divf %284, %287 : vector<2x8x8xf32>
    "tpu.trace_start"() <{level = 10 : i32, message = "bij,bjf->bif"}> : () -> ()
    %cst_118 = arith.constant dense<0.000000e+00> : vector<2x8x8xf32>
    %289 = tpu.matmul %288, %265, %cst_118 {dimension_numbers = #tpu.dot_dimension_numbers<[2], [1], [1], [2], [0, 0, 0, 1, 1, 2], [0], [0]>} : vector<2x8x8xf32>, vector<2x8x8xf32>, vector<2x8x8xf32> -> vector<2x8x8xf32>
    "tpu.trace_stop"() : () -> ()
    %c1_119 = arith.constant 1 : index
    %c0_120 = arith.constant 0 : index
    %c0_121 = arith.constant 0 : index
    %290 = vector.load %arg10[%c1_119, %c0_120, %c0_121] : memref<2x8x8xf32, #tpu.memory_space<vmem>>, vector<1x8x8xf32>
    %291 = vector.shape_cast %290 : vector<1x8x8xf32> to vector<8x8xf32>
    %292 = vector.shape_cast %291 : vector<8x8xf32> to vector<1x8x8xf32>
    %293 = vector.broadcast %292 : vector<1x8x8xf32> to vector<2x8x8xf32>
    %294 = arith.addf %289, %293 : vector<2x8x8xf32>
    %295 = vector.shape_cast %260 : vector<16x8xf32> to vector<2x8x8xf32>
    %296 = arith.addf %294, %295 : vector<2x8x8xf32>
    %c1_122 = arith.constant 1 : index
    %c0_123 = arith.constant 0 : index
    %c0_124 = arith.constant 0 : index
    %297 = vector.load %arg12[%c1_122, %c0_123, %c0_124] : memref<2x1x8xf32, #tpu.memory_space<vmem>>, vector<1x1x8xf32>
    %298 = vector.shape_cast %297 : vector<1x1x8xf32> to vector<1x8xf32>
    %299 = vector.shape_cast %298 : vector<1x8xf32> to vector<1x1x8xf32>
    %300 = vector.broadcast %299 : vector<1x1x8xf32> to vector<2x8x8xf32>
    %301 = arith.addf %296, %300 : vector<2x8x8xf32>
    %cst_125 = arith.constant 0.000000e+00 : f32
    %302 = vector.broadcast %cst_125 : f32 to vector<2x8x8xf32>
    %303 = arith.cmpf ogt, %301, %302 : vector<2x8x8xf32>
    %cst_126 = arith.constant 0.000000e+00 : f32
    %304 = vector.broadcast %cst_126 : f32 to vector<2x8x8xf32>
    %305 = arith.minimumf %301, %304 : vector<2x8x8xf32>
    %306 = math.exp %305 : vector<2x8x8xf32>
    %cst_127 = arith.constant 1.000000e+00 : f32
    %307 = vector.broadcast %cst_127 : f32 to vector<2x8x8xf32>
    %308 = arith.subf %306, %307 : vector<2x8x8xf32>
    %309 = arith.select %303, %301, %308 : vector<2x8x8xi1>, vector<2x8x8xf32>
    %310 = vector.shape_cast %155 : vector<2x8x8xf32> to vector<16x8xf32>
    %311 = vector.shape_cast %309 : vector<2x8x8xf32> to vector<16x8xf32>
    %c0_128 = arith.constant 0 : index
    %c0_129 = arith.constant 0 : index
    %312 = vector.load %arg13[%c0_128, %c0_129] : memref<8x8xf32, #tpu.memory_space<vmem>>, vector<8x8xf32>
    %cst_130 = arith.constant dense<0.000000e+00> : vector<16x8xf32>
    %313 = tpu.matmul %310, %312, %cst_130 {dimension_numbers = #tpu.dot_dimension_numbers<[1], [0], [0], [1], [0, 0, 1, 1], [], []>} : vector<16x8xf32>, vector<8x8xf32>, vector<16x8xf32> -> vector<16x8xf32>
    %c0_131 = arith.constant 0 : index
    %c0_132 = arith.constant 0 : index
    %314 = vector.load %arg14[%c0_131, %c0_132] : memref<8x8xf32, #tpu.memory_space<vmem>>, vector<8x8xf32>
    %cst_133 = arith.constant dense<0.000000e+00> : vector<16x8xf32>
    %315 = tpu.matmul %311, %314, %cst_133 {dimension_numbers = #tpu.dot_dimension_numbers<[1], [0], [0], [1], [0, 0, 1, 1], [], []>} : vector<16x8xf32>, vector<8x8xf32>, vector<16x8xf32> -> vector<16x8xf32>
    %316 = arith.addf %313, %315 : vector<16x8xf32>
    %c0_134 = arith.constant 0 : index
    %c0_135 = arith.constant 0 : index
    %317 = vector.load %arg15[%c0_134, %c0_135] : memref<1x8xf32, #tpu.memory_space<vmem>>, vector<1x8xf32>
    %318 = vector.broadcast %317 : vector<1x8xf32> to vector<16x8xf32>
    %319 = arith.addf %316, %318 : vector<16x8xf32>
    %cst_136 = arith.constant 0.000000e+00 : f32
    %320 = vector.broadcast %cst_136 : f32 to vector<16x8xf32>
    %321 = arith.subf %320, %319 : vector<16x8xf32>
    %322 = math.exp %321 : vector<16x8xf32>
    %cst_137 = arith.constant 1.000000e+00 : f32
    %323 = vector.broadcast %cst_137 : f32 to vector<16x8xf32>
    %324 = arith.addf %323, %322 : vector<16x8xf32>
    %cst_138 = arith.constant 1.000000e+00 : f32
    %325 = vector.broadcast %cst_138 : f32 to vector<16x8xf32>
    %326 = arith.divf %325, %324 : vector<16x8xf32>
    %327 = arith.mulf %326, %310 : vector<16x8xf32>
    %cst_139 = arith.constant 1.000000e+00 : f32
    %328 = vector.broadcast %cst_139 : f32 to vector<16x8xf32>
    %329 = arith.subf %328, %326 : vector<16x8xf32>
    %330 = arith.mulf %329, %311 : vector<16x8xf32>
    %331 = arith.addf %327, %330 : vector<16x8xf32>
    %332 = vector.shape_cast %331 : vector<16x8xf32> to vector<2x8x8xf32>
    %c0_140 = arith.constant 0 : index
    %c0_141 = arith.constant 0 : index
    %c0_142 = arith.constant 0 : index
    %333 = vector.load %arg16[%c0_140, %c0_141, %c0_142] : memref<2x8x8xf32, #tpu.memory_space<vmem>>, vector<2x8x8xf32>
    tpu.vector_store %arg16[%c0_140, %c0_141, %c0_142], %332 {strides = array<i32>} : memref<2x8x8xf32, #tpu.memory_space<vmem>>, vector<2x8x8xf32>,
    return
  }
  func.func @transform_0(%arg0: i32) -> (i32, i32, i32) {
    %c0_i32 = arith.constant 0 : i32
    %c0_i32_0 = arith.constant 0 : i32
    %c0_i32_1 = arith.constant 0 : i32
    return %arg0, %c0_i32, %c0_i32_0 : i32, i32, i32
  }
  func.func @transform_1(%arg0: i32) -> (i32, i32, i32) {
    %c0_i32 = arith.constant 0 : i32
    %c0_i32_0 = arith.constant 0 : i32
    %c0_i32_1 = arith.constant 0 : i32
    %c0_i32_2 = arith.constant 0 : i32
    return %c0_i32, %c0_i32_0, %c0_i32_1 : i32, i32, i32
  }
  func.func @transform_2(%arg0: i32) -> (i32, i32, i32) {
    %c0_i32 = arith.constant 0 : i32
    %c0_i32_0 = arith.constant 0 : i32
    %c0_i32_1 = arith.constant 0 : i32
    %c0_i32_2 = arith.constant 0 : i32
    return %c0_i32, %c0_i32_0, %c0_i32_1 : i32, i32, i32
  }
  func.func @transform_3(%arg0: i32) -> (i32, i32, i32) {
    %c0_i32 = arith.constant 0 : i32
    %c0_i32_0 = arith.constant 0 : i32
    %c0_i32_1 = arith.constant 0 : i32
    %c0_i32_2 = arith.constant 0 : i32
    return %c0_i32, %c0_i32_0, %c0_i32_1 : i32, i32, i32
  }
  func.func @transform_4(%arg0: i32) -> (i32, i32, i32) {
    %c0_i32 = arith.constant 0 : i32
    %c0_i32_0 = arith.constant 0 : i32
    %c0_i32_1 = arith.constant 0 : i32
    %c0_i32_2 = arith.constant 0 : i32
    return %c0_i32, %c0_i32_0, %c0_i32_1 : i32, i32, i32
  }
  func.func @transform_5(%arg0: i32) -> (i32, i32, i32) {
    %c0_i32 = arith.constant 0 : i32
    %c0_i32_0 = arith.constant 0 : i32
    %c0_i32_1 = arith.constant 0 : i32
    %c0_i32_2 = arith.constant 0 : i32
    return %c0_i32, %c0_i32_0, %c0_i32_1 : i32, i32, i32
  }
  func.func @transform_6(%arg0: i32) -> (i32, i32, i32) {
    %c0_i32 = arith.constant 0 : i32
    %c0_i32_0 = arith.constant 0 : i32
    %c0_i32_1 = arith.constant 0 : i32
    %c0_i32_2 = arith.constant 0 : i32
    return %c0_i32, %c0_i32_0, %c0_i32_1 : i32, i32, i32
  }
  func.func @transform_7(%arg0: i32) -> (i32, i32, i32) {
    %c0_i32 = arith.constant 0 : i32
    %c0_i32_0 = arith.constant 0 : i32
    %c0_i32_1 = arith.constant 0 : i32
    %c0_i32_2 = arith.constant 0 : i32
    return %c0_i32, %c0_i32_0, %c0_i32_1 : i32, i32, i32
  }
  func.func @transform_8(%arg0: i32) -> (i32, i32, i32) {
    %c0_i32 = arith.constant 0 : i32
    %c0_i32_0 = arith.constant 0 : i32
    %c0_i32_1 = arith.constant 0 : i32
    %c0_i32_2 = arith.constant 0 : i32
    return %c0_i32, %c0_i32_0, %c0_i32_1 : i32, i32, i32
  }
  func.func @transform_9(%arg0: i32) -> (i32, i32, i32) {
    %c0_i32 = arith.constant 0 : i32
    %c0_i32_0 = arith.constant 0 : i32
    %c0_i32_1 = arith.constant 0 : i32
    %c0_i32_2 = arith.constant 0 : i32
    return %c0_i32, %c0_i32_0, %c0_i32_1 : i32, i32, i32
  }
  func.func @transform_10(%arg0: i32) -> (i32, i32, i32) {
    %c0_i32 = arith.constant 0 : i32
    %c0_i32_0 = arith.constant 0 : i32
    %c0_i32_1 = arith.constant 0 : i32
    %c0_i32_2 = arith.constant 0 : i32
    return %c0_i32, %c0_i32_0, %c0_i32_1 : i32, i32, i32
  }
  func.func @transform_11(%arg0: i32) -> (i32, i32, i32) {
    %c0_i32 = arith.constant 0 : i32
    %c0_i32_0 = arith.constant 0 : i32
    %c0_i32_1 = arith.constant 0 : i32
    %c0_i32_2 = arith.constant 0 : i32
    return %c0_i32, %c0_i32_0, %c0_i32_1 : i32, i32, i32
  }
  func.func @transform_12(%arg0: i32) -> (i32, i32) {
    %c0_i32 = arith.constant 0 : i32
    %c0_i32_0 = arith.constant 0 : i32
    %c0_i32_1 = arith.constant 0 : i32
    return %c0_i32, %c0_i32_0 : i32, i32
  }
  func.func @transform_13(%arg0: i32) -> (i32, i32) {
    %c0_i32 = arith.constant 0 : i32
    %c0_i32_0 = arith.constant 0 : i32
    %c0_i32_1 = arith.constant 0 : i32
    return %c0_i32, %c0_i32_0 : i32, i32
  }
  func.func @transform_14(%arg0: i32) -> (i32, i32) {
    %c0_i32 = arith.constant 0 : i32
    %c0_i32_0 = arith.constant 0 : i32
    %c0_i32_1 = arith.constant 0 : i32
    return %c0_i32, %c0_i32_0 : i32, i32
  }
  func.func @transform_15(%arg0: i32) -> (i32, i32, i32) {
    %c0_i32 = arith.constant 0 : i32
    %c0_i32_0 = arith.constant 0 : i32
    %c0_i32_1 = arith.constant 0 : i32
    return %arg0, %c0_i32, %c0_i32_0 : i32, i32, i32
  }
}

</mosaic_0001>

<llo_original>
// kernel: parallel_gat.1
$region0: #{parallel_gat.1}
  #allocation0 [shape = 'u32[]', space=smem, size = 0x4, offset = 0x4, fixed_abs, tag = 'smem constant byte address 0x4 - core index']
  #allocation1 [shape = 'u32[144,128]{1,0:T(1,128)}', space=vmem, size = 0x12000, scoped, tag = 'internal scratch']
  %s0 = inlined_call_operand.vmem [shape: f32[8,8,4], index: 0, kind: input, shape index: {}]
  %s1 = inlined_call_operand.vmem [shape: f32[2,8,8], index: 1, kind: input, shape index: {}]
  %s2 = inlined_call_operand.vmem [shape: f32[2,4,16], index: 2, kind: input, shape index: {}]
  %s3 = inlined_call_operand.vmem [shape: f32[2,16,4], index: 3, kind: input, shape index: {}]
  %s4 = inlined_call_operand.vmem [shape: f32[2,8,16], index: 4, kind: input, shape index: {}]
  %s5 = inlined_call_operand.vmem [shape: f32[2,4,16], index: 5, kind: input, shape index: {}]
  %s6 = inlined_call_operand.vmem [shape: f32[2,1,16], index: 6, kind: input, shape index: {}]
  %s7 = inlined_call_operand.vmem [shape: f32[2,16,8], index: 7, kind: input, shape index: {}]
  %s8 = inlined_call_operand.vmem [shape: f32[2,8,2], index: 8, kind: input, shape index: {}]
  %s9 = inlined_call_operand.vmem [shape: f32[2,8,8], index: 9, kind: input, shape index: {}]
  %s10 = inlined_call_operand.vmem [shape: f32[2,16,8], index: 10, kind: input, shape index: {}]
  %s11 = inlined_call_operand.vmem [shape: f32[2,1,8], index: 11, kind: input, shape index: {}]
  %s12 = inlined_call_operand.vmem [shape: f32[8,8], index: 12, kind: input, shape index: {}]
  %s13 = inlined_call_operand.vmem [shape: f32[8,8], index: 13, kind: input, shape index: {}]
  %s14 = inlined_call_operand.vmem [shape: f32[1,8], index: 14, kind: input, shape index: {}]
  %s15 = inlined_call_operand.vmem [shape: f32[8,8,8], index: 15, kind: output, shape index: {}]
  %s16 = sld [smem:[#allocation0]]
  $region93: #{parallel_gat.1} parent=0
    _
  %s18 = ssub.s32 1, %s16
  %s19 = scalar_select 0, %s18, %s16
  loop: start=0, step=1, limit=6
  $region2: #{parallel_gat.1} parent=0 // loop_pre_header
    _
  $region3: #{parallel_gat.1} parent=0 // loop_header
    %s21 = sphi 0, %s25
    %p22 = scmp.ge.s32.totalorder %s21, 6
    %s31 = sphi 0, %s33
    %s34 = sphi 0, %s31
    %s35 = sphi 0, %s34
    %s51 = sphi 0, %s35
    %s55 = sphi 0, %s55
    %s57 = sphi 0, %s55
    %s58 = sphi 0, %s57
    %s72 = sphi 0, %s58
    %s76 = sphi 0, %s76
    %s78 = sphi 0, %s76
    %s79 = sphi 0, %s78
    %s93 = sphi 0, %s79
    %s97 = sphi 0, %s97
    %s99 = sphi 0, %s97
    %s100 = sphi 0, %s99
    %s114 = sphi 0, %s100
    %s118 = sphi 0, %s118
    %s120 = sphi 0, %s118
    %s121 = sphi 0, %s120
    %s135 = sphi 0, %s121
    %s139 = sphi 0, %s139
    %s141 = sphi 0, %s139
    %s142 = sphi 0, %s141
    %s156 = sphi 0, %s142
    %s160 = sphi 0, %s160
    %s162 = sphi 0, %s160
    %s163 = sphi 0, %s162
    %s177 = sphi 0, %s163
    %s181 = sphi 0, %s181
    %s183 = sphi 0, %s181
    %s184 = sphi 0, %s183
    %s198 = sphi 0, %s184
    %s202 = sphi 0, %s202
    %s204 = sphi 0, %s202
    %s205 = sphi 0, %s204
    %s219 = sphi 0, %s205
    %s223 = sphi 0, %s223
    %s225 = sphi 0, %s223
    %s226 = sphi 0, %s225
    %s240 = sphi 0, %s226
    %s244 = sphi 0, %s244
    %s246 = sphi 0, %s244
    %s247 = sphi 0, %s246
    %s261 = sphi 0, %s247
    %s265 = sphi 0, %s265
    %s267 = sphi 0, %s265
    %s268 = sphi 0, %s267
    %s282 = sphi 0, %s268
    %s286 = sphi 0, %s286
    %s288 = sphi 0, %s286
    %s289 = sphi 0, %s288
    %s303 = sphi 0, %s289
    %s307 = sphi 0, %s307
    %s309 = sphi 0, %s307
    %s310 = sphi 0, %s309
    %s324 = sphi 0, %s310
    %s328 = sphi 0, %s328
    %s330 = sphi 0, %s328
    %s331 = sphi 0, %s330
    %s345 = sphi 0, %s331
    %s351 = sphi 0, %s353
    %s354 = sphi 0, %s351
    %s355 = sphi 0, %s354
    %s371 = sphi 0, %s355
  $region4: #{parallel_gat.1} parent=0 // loop_header_branch
    %24 = sbr.rel (%p22) target = $region8
  $region5: #{parallel_gat.1} parent=0 // loop_body
    %s26 = ssub.s32 %s21, 1
    %s27 = ssub.s32 %s21, 2
    %s28 = sadd.s32 %s21, 1
    %s29 = ssub.s32 %s21, %s28
    %p30 = scmp.eq.s32.totalorder %s29, 0
    %s32 = sadd.s32 %s31, 1
    %s33 = scalar_select %p30, %s31, %s32
    %p36 = pneg %p30
    %p37 = scmp.eq.s32.totalorder %s21, 3
    %p38 = por %p36, %p37
    %p39 = scmp.ne.s32.totalorder %s31, %s34
    %p40 = scmp.eq.s32.totalorder %s21, 0
    %p41 = por %p39, %p40
    %p42 = scmp.ne.s32.totalorder %s31, %s34
    %p43 = scmp.eq.s32.totalorder %s26, 3
    %p44 = por %p42, %p43
    %p45 = scmp.ne.s32.totalorder %s34, %s35
    %p46 = scmp.eq.s32.totalorder %s26, 0
    %p47 = por %p45, %p46
    %p48 = scmp.ne.s32.totalorder %s34, %s35
    %p49 = scmp.eq.s32.totalorder %s27, 3
    %p50 = por %p48, %p49
    %p52 = scmp.ne.s32.totalorder %s35, %s51
    %p53 = scmp.eq.s32.totalorder %s27, 0
    %p54 = por %p52, %p53
    %s56 = sadd.s32 %s55, 1
    %p59 = scmp.eq.s32.totalorder %s21, 3
    %p60 = scmp.ne.s32.totalorder %s55, %s57
    %p61 = scmp.eq.s32.totalorder %s21, 0
    %p62 = por %p60, %p61
    %p63 = scmp.ne.s32.totalorder %s55, %s57
    %p64 = scmp.eq.s32.totalorder %s26, 3
    %p65 = por %p63, %p64
    %p66 = scmp.ne.s32.totalorder %s57, %s58
    %p67 = scmp.eq.s32.totalorder %s26, 0
    %p68 = por %p66, %p67
    %p69 = scmp.ne.s32.totalorder %s57, %s58
    %p70 = scmp.eq.s32.totalorder %s27, 3
    %p71 = por %p69, %p70
    %p73 = scmp.ne.s32.totalorder %s58, %s72
    %p74 = scmp.eq.s32.totalorder %s27, 0
    %p75 = por %p73, %p74
    %s77 = sadd.s32 %s76, 1
    %p80 = scmp.eq.s32.totalorder %s21, 3
    %p81 = scmp.ne.s32.totalorder %s76, %s78
    %p82 = scmp.eq.s32.totalorder %s21, 0
    %p83 = por %p81, %p82
    %p84 = scmp.ne.s32.totalorder %s76, %s78
    %p85 = scmp.eq.s32.totalorder %s26, 3
    %p86 = por %p84, %p85
    %p87 = scmp.ne.s32.totalorder %s78, %s79
    %p88 = scmp.eq.s32.totalorder %s26, 0
    %p89 = por %p87, %p88
    %p90 = scmp.ne.s32.totalorder %s78, %s79
    %p91 = scmp.eq.s32.totalorder %s27, 3
    %p92 = por %p90, %p91
    %p94 = scmp.ne.s32.totalorder %s79, %s93
    %p95 = scmp.eq.s32.totalorder %s27, 0
    %p96 = por %p94, %p95
    %s98 = sadd.s32 %s97, 1
    %p101 = scmp.eq.s32.totalorder %s21, 3
    %p102 = scmp.ne.s32.totalorder %s97, %s99
    %p103 = scmp.eq.s32.totalorder %s21, 0
    %p104 = por %p102, %p103
    %p105 = scmp.ne.s32.totalorder %s97, %s99
    %p106 = scmp.eq.s32.totalorder %s26, 3
    %p107 = por %p105, %p106
    %p108 = scmp.ne.s32.totalorder %s99, %s100
    %p109 = scmp.eq.s32.totalorder %s26, 0
    %p110 = por %p108, %p109
    %p111 = scmp.ne.s32.totalorder %s99, %s100
    %p112 = scmp.eq.s32.totalorder %s27, 3
    %p113 = por %p111, %p112
    %p115 = scmp.ne.s32.totalorder %s100, %s114
    %p116 = scmp.eq.s32.totalorder %s27, 0
    %p117 = por %p115, %p116
    %s119 = sadd.s32 %s118, 1
    %p122 = scmp.eq.s32.totalorder %s21, 3
    %p123 = scmp.ne.s32.totalorder %s118, %s120
    %p124 = scmp.eq.s32.totalorder %s21, 0
    %p125 = por %p123, %p124
    %p126 = scmp.ne.s32.totalorder %s118, %s120
    %p127 = scmp.eq.s32.totalorder %s26, 3
    %p128 = por %p126, %p127
    %p129 = scmp.ne.s32.totalorder %s120, %s121
    %p130 = scmp.eq.s32.totalorder %s26, 0
    %p131 = por %p129, %p130
    %p132 = scmp.ne.s32.totalorder %s120, %s121
    %p133 = scmp.eq.s32.totalorder %s27, 3
    %p134 = por %p132, %p133
    %p136 = scmp.ne.s32.totalorder %s121, %s135
    %p137 = scmp.eq.s32.totalorder %s27, 0
    %p138 = por %p136, %p137
    %s140 = sadd.s32 %s139, 1
    %p143 = scmp.eq.s32.totalorder %s21, 3
    %p144 = scmp.ne.s32.totalorder %s139, %s141
    %p145 = scmp.eq.s32.totalorder %s21, 0
    %p146 = por %p144, %p145
    %p147 = scmp.ne.s32.totalorder %s139, %s141
    %p148 = scmp.eq.s32.totalorder %s26, 3
    %p149 = por %p147, %p148
    %p150 = scmp.ne.s32.totalorder %s141, %s142
    %p151 = scmp.eq.s32.totalorder %s26, 0
    %p152 = por %p150, %p151
    %p153 = scmp.ne.s32.totalorder %s141, %s142
    %p154 = scmp.eq.s32.totalorder %s27, 3
    %p155 = por %p153, %p154
    %p157 = scmp.ne.s32.totalorder %s142, %s156
    %p158 = scmp.eq.s32.totalorder %s27, 0
    %p159 = por %p157, %p158
    %s161 = sadd.s32 %s160, 1
    %p164 = scmp.eq.s32.totalorder %s21, 3
    %p165 = scmp.ne.s32.totalorder %s160, %s162
    %p166 = scmp.eq.s32.totalorder %s21, 0
    %p167 = por %p165, %p166
    %p168 = scmp.ne.s32.totalorder %s160, %s162
    %p169 = scmp.eq.s32.totalorder %s26, 3
    %p170 = por %p168, %p169
    %p171 = scmp.ne.s32.totalorder %s162, %s163
    %p172 = scmp.eq.s32.totalorder %s26, 0
    %p173 = por %p171, %p172
    %p174 = scmp.ne.s32.totalorder %s162, %s163
    %p175 = scmp.eq.s32.totalorder %s27, 3
    %p176 = por %p174, %p175
    %p178 = scmp.ne.s32.totalorder %s163, %s177
    %p179 = scmp.eq.s32.totalorder %s27, 0
    %p180 = por %p178, %p179
    %s182 = sadd.s32 %s181, 1
    %p185 = scmp.eq.s32.totalorder %s21, 3
    %p186 = scmp.ne.s32.totalorder %s181, %s183
    %p187 = scmp.eq.s32.totalorder %s21, 0
    %p188 = por %p186, %p187
    %p189 = scmp.ne.s32.totalorder %s181, %s183
    %p190 = scmp.eq.s32.totalorder %s26, 3
    %p191 = por %p189, %p190
    %p192 = scmp.ne.s32.totalorder %s183, %s184
    %p193 = scmp.eq.s32.totalorder %s26, 0
    %p194 = por %p192, %p193
    %p195 = scmp.ne.s32.totalorder %s183, %s184
    %p196 = scmp.eq.s32.totalorder %s27, 3
    %p197 = por %p195, %p196
    %p199 = scmp.ne.s32.totalorder %s184, %s198
    %p200 = scmp.eq.s32.totalorder %s27, 0
    %p201 = por %p199, %p200
    %s203 = sadd.s32 %s202, 1
    %p206 = scmp.eq.s32.totalorder %s21, 3
    %p207 = scmp.ne.s32.totalorder %s202, %s204
    %p208 = scmp.eq.s32.totalorder %s21, 0
    %p209 = por %p207, %p208
    %p210 = scmp.ne.s32.totalorder %s202, %s204
    %p211 = scmp.eq.s32.totalorder %s26, 3
    %p212 = por %p210, %p211
    %p213 = scmp.ne.s32.totalorder %s204, %s205
    %p214 = scmp.eq.s32.totalorder %s26, 0
    %p215 = por %p213, %p214
    %p216 = scmp.ne.s32.totalorder %s204, %s205
    %p217 = scmp.eq.s32.totalorder %s27, 3
    %p218 = por %p216, %p217
    %p220 = scmp.ne.s32.totalorder %s205, %s219
    %p221 = scmp.eq.s32.totalorder %s27, 0
    %p222 = por %p220, %p221
    %s224 = sadd.s32 %s223, 1
    %p227 = scmp.eq.s32.totalorder %s21, 3
    %p228 = scmp.ne.s32.totalorder %s223, %s225
    %p229 = scmp.eq.s32.totalorder %s21, 0
    %p230 = por %p228, %p229
    %p231 = scmp.ne.s32.totalorder %s223, %s225
    %p232 = scmp.eq.s32.totalorder %s26, 3
    %p233 = por %p231, %p232
    %p234 = scmp.ne.s32.totalorder %s225, %s226
    %p235 = scmp.eq.s32.totalorder %s26, 0
    %p236 = por %p234, %p235
    %p237 = scmp.ne.s32.totalorder %s225, %s226
    %p238 = scmp.eq.s32.totalorder %s27, 3
    %p239 = por %p237, %p238
    %p241 = scmp.ne.s32.totalorder %s226, %s240
    %p242 = scmp.eq.s32.totalorder %s27, 0
    %p243 = por %p241, %p242
    %s245 = sadd.s32 %s244, 1
    %p248 = scmp.eq.s32.totalorder %s21, 3
    %p249 = scmp.ne.s32.totalorder %s244, %s246
    %p250 = scmp.eq.s32.totalorder %s21, 0
    %p251 = por %p249, %p250
    %p252 = scmp.ne.s32.totalorder %s244, %s246
    %p253 = scmp.eq.s32.totalorder %s26, 3
    %p254 = por %p252, %p253
    %p255 = scmp.ne.s32.totalorder %s246, %s247
    %p256 = scmp.eq.s32.totalorder %s26, 0
    %p257 = por %p255, %p256
    %p258 = scmp.ne.s32.totalorder %s246, %s247
    %p259 = scmp.eq.s32.totalorder %s27, 3
    %p260 = por %p258, %p259
    %p262 = scmp.ne.s32.totalorder %s247, %s261
    %p263 = scmp.eq.s32.totalorder %s27, 0
    %p264 = por %p262, %p263
    %s266 = sadd.s32 %s265, 1
    %p269 = scmp.eq.s32.totalorder %s21, 3
    %p270 = scmp.ne.s32.totalorder %s265, %s267
    %p271 = scmp.eq.s32.totalorder %s21, 0
    %p272 = por %p270, %p271
    %p273 = scmp.ne.s32.totalorder %s265, %s267
    %p274 = scmp.eq.s32.totalorder %s26, 3
    %p275 = por %p273, %p274
    %p276 = scmp.ne.s32.totalorder %s267, %s268
    %p277 = scmp.eq.s32.totalorder %s26, 0
    %p278 = por %p276, %p277
    %p279 = scmp.ne.s32.totalorder %s267, %s268
    %p280 = scmp.eq.s32.totalorder %s27, 3
    %p281 = por %p279, %p280
    %p283 = scmp.ne.s32.totalorder %s268, %s282
    %p284 = scmp.eq.s32.totalorder %s27, 0
    %p285 = por %p283, %p284
    %s287 = sadd.s32 %s286, 1
    %p290 = scmp.eq.s32.totalorder %s21, 3
    %p291 = scmp.ne.s32.totalorder %s286, %s288
    %p292 = scmp.eq.s32.totalorder %s21, 0
    %p293 = por %p291, %p292
    %p294 = scmp.ne.s32.totalorder %s286, %s288
    %p295 = scmp.eq.s32.totalorder %s26, 3
    %p296 = por %p294, %p295
    %p297 = scmp.ne.s32.totalorder %s288, %s289
    %p298 = scmp.eq.s32.totalorder %s26, 0
    %p299 = por %p297, %p298
    %p300 = scmp.ne.s32.totalorder %s288, %s289
    %p301 = scmp.eq.s32.totalorder %s27, 3
    %p302 = por %p300, %p301
    %p304 = scmp.ne.s32.totalorder %s289, %s303
    %p305 = scmp.eq.s32.totalorder %s27, 0
    %p306 = por %p304, %p305
    %s308 = sadd.s32 %s307, 1
    %p311 = scmp.eq.s32.totalorder %s21, 3
    %p312 = scmp.ne.s32.totalorder %s307, %s309
    %p313 = scmp.eq.s32.totalorder %s21, 0
    %p314 = por %p312, %p313
    %p315 = scmp.ne.s32.totalorder %s307, %s309
    %p316 = scmp.eq.s32.totalorder %s26, 3
    %p317 = por %p315, %p316
    %p318 = scmp.ne.s32.totalorder %s309, %s310
    %p319 = scmp.eq.s32.totalorder %s26, 0
    %p320 = por %p318, %p319
    %p321 = scmp.ne.s32.totalorder %s309, %s310
    %p322 = scmp.eq.s32.totalorder %s27, 3
    %p323 = por %p321, %p322
    %p325 = scmp.ne.s32.totalorder %s310, %s324
    %p326 = scmp.eq.s32.totalorder %s27, 0
    %p327 = por %p325, %p326
    %s329 = sadd.s32 %s328, 1
    %p332 = scmp.eq.s32.totalorder %s21, 3
    %p333 = scmp.ne.s32.totalorder %s328, %s330
    %p334 = scmp.eq.s32.totalorder %s21, 0
    %p335 = por %p333, %p334
    %p336 = scmp.ne.s32.totalorder %s328, %s330
    %p337 = scmp.eq.s32.totalorder %s26, 3
    %p338 = por %p336, %p337
    %p339 = scmp.ne.s32.totalorder %s330, %s331
    %p340 = scmp.eq.s32.totalorder %s26, 0
    %p341 = por %p339, %p340
    %p342 = scmp.ne.s32.totalorder %s330, %s331
    %p343 = scmp.eq.s32.totalorder %s27, 3
    %p344 = por %p342, %p343
    %p346 = scmp.ne.s32.totalorder %s331, %s345
    %p347 = scmp.eq.s32.totalorder %s27, 0
    %p348 = por %p346, %p347
    %s349 = ssub.s32 %s21, %s28
    %p350 = scmp.eq.s32.totalorder %s349, 0
    %s352 = sadd.s32 %s351, 1
    %s353 = scalar_select %p350, %s351, %s352
    %p356 = pneg %p350
    %p357 = scmp.eq.s32.totalorder %s21, 3
    %p358 = por %p356, %p357
    %p359 = scmp.ne.s32.totalorder %s351, %s354
    %p360 = scmp.eq.s32.totalorder %s21, 0
    %p361 = por %p359, %p360
    %p362 = scmp.ne.s32.totalorder %s351, %s354
    %p363 = scmp.eq.s32.totalorder %s26, 3
    %p364 = por %p362, %p363
    %p365 = scmp.ne.s32.totalorder %s354, %s355
    %p366 = scmp.eq.s32.totalorder %s26, 0
    %p367 = por %p365, %p366
    %p368 = scmp.ne.s32.totalorder %s354, %s355
    %p369 = scmp.eq.s32.totalorder %s27, 3
    %p370 = por %p368, %p369
    %p372 = scmp.ne.s32.totalorder %s355, %s371
    %p373 = scmp.eq.s32.totalorder %s27, 0
    %p374 = por %p372, %p373
    %p375 = scmp.le.s32.totalorder 1, %s21
    %p376 = scmp.lt.s32.totalorder %s21, 5
    %p377 = pnand %p375, %p376
    %p378 = pneg %p377
    // Predicated region
    $region9: #{parallel_gat.1} parent=5 // pred_check
      _
    $region10: #{parallel_gat.1} parent=5 // pred_check_branch
      %380 = sbr.rel (%p377) target = $region12
    $region11: #{parallel_gat.1} parent=5 // pred_region
      %s381 = ssub.s32 %s21, 1
      // Predicated region
      $region13: #{parallel_gat.1} parent=11 // pred_check
        %p382 = pneg %p68
      $region14: #{parallel_gat.1} parent=11 // pred_check_branch
        %384 = sbr.rel (%p382) target = $region16
      $region15: #{parallel_gat.1} parent=11 // pred_region
        _
      $region16: #{parallel_gat.1} parent=11 // pred_fallthru
        _
      // Predicated region
      $region17: #{parallel_gat.1} parent=11 // pred_check
        %p385 = pneg %p89
      $region18: #{parallel_gat.1} parent=11 // pred_check_branch
        %387 = sbr.rel (%p385) target = $region20
      $region19: #{parallel_gat.1} parent=11 // pred_region
        _
      $region20: #{parallel_gat.1} parent=11 // pred_fallthru
        _
      // Predicated region
      $region21: #{parallel_gat.1} parent=11 // pred_check
        %p388 = pneg %p110
      $region22: #{parallel_gat.1} parent=11 // pred_check_branch
        %390 = sbr.rel (%p388) target = $region24
      $region23: #{parallel_gat.1} parent=11 // pred_region
        _
      $region24: #{parallel_gat.1} parent=11 // pred_fallthru
        _
      // Predicated region
      $region25: #{parallel_gat.1} parent=11 // pred_check
        %p391 = pneg %p131
      $region26: #{parallel_gat.1} parent=11 // pred_check_branch
        %393 = sbr.rel (%p391) target = $region28
      $region27: #{parallel_gat.1} parent=11 // pred_region
        _
      $region28: #{parallel_gat.1} parent=11 // pred_fallthru
        _
      // Predicated region
      $region29: #{parallel_gat.1} parent=11 // pred_check
        %p394 = pneg %p152
      $region30: #{parallel_gat.1} parent=11 // pred_check_branch
        %396 = sbr.rel (%p394) target = $region32
      $region31: #{parallel_gat.1} parent=11 // pred_region
        _
      $region32: #{parallel_gat.1} parent=11 // pred_fallthru
        _
      // Predicated region
      $region33: #{parallel_gat.1} parent=11 // pred_check
        %p397 = pneg %p173
      $region34: #{parallel_gat.1} parent=11 // pred_check_branch
        %399 = sbr.rel (%p397) target = $region36
      $region35: #{parallel_gat.1} parent=11 // pred_region
        _
      $region36: #{parallel_gat.1} parent=11 // pred_fallthru
        _
      // Predicated region
      $region37: #{parallel_gat.1} parent=11 // pred_check
        %p400 = pneg %p194
      $region38: #{parallel_gat.1} parent=11 // pred_check_branch
        %402 = sbr.rel (%p400) target = $region40
      $region39: #{parallel_gat.1} parent=11 // pred_region
        _
      $region40: #{parallel_gat.1} parent=11 // pred_fallthru
        _
      // Predicated region
      $region41: #{parallel_gat.1} parent=11 // pred_check
        %p403 = pneg %p215
      $region42: #{parallel_gat.1} parent=11 // pred_check_branch
        %405 = sbr.rel (%p403) target = $region44
      $region43: #{parallel_gat.1} parent=11 // pred_region
        _
      $region44: #{parallel_gat.1} parent=11 // pred_fallthru
        _
      // Predicated region
      $region45: #{parallel_gat.1} parent=11 // pred_check
        %p406 = pneg %p236
      $region46: #{parallel_gat.1} parent=11 // pred_check_branch
        %408 = sbr.rel (%p406) target = $region48
      $region47: #{parallel_gat.1} parent=11 // pred_region
        _
      $region48: #{parallel_gat.1} parent=11 // pred_fallthru
        _
      // Predicated region
      $region49: #{parallel_gat.1} parent=11 // pred_check
        %p409 = pneg %p257
      $region50: #{parallel_gat.1} parent=11 // pred_check_branch
        %411 = sbr.rel (%p409) target = $region52
      $region51: #{parallel_gat.1} parent=11 // pred_region
        _
      $region52: #{parallel_gat.1} parent=11 // pred_fallthru
        _
      // Predicated region
      $region53: #{parallel_gat.1} parent=11 // pred_check
        %p412 = pneg %p278
      $region54: #{parallel_gat.1} parent=11 // pred_check_branch
        %414 = sbr.rel (%p412) target = $region56
      $region55: #{parallel_gat.1} parent=11 // pred_region
        _
      $region56: #{parallel_gat.1} parent=11 // pred_fallthru
        _
      // Predicated region
      $region57: #{parallel_gat.1} parent=11 // pred_check
        %p415 = pneg %p299
      $region58: #{parallel_gat.1} parent=11 // pred_check_branch
        %417 = sbr.rel (%p415) target = $region60
      $region59: #{parallel_gat.1} parent=11 // pred_region
        _
      $region60: #{parallel_gat.1} parent=11 // pred_fallthru
        _
      // Predicated region
      $region61: #{parallel_gat.1} parent=11 // pred_check
        %p418 = pneg %p320
      $region62: #{parallel_gat.1} parent=11 // pred_check_branch
        %420 = sbr.rel (%p418) target = $region64
      $region63: #{parallel_gat.1} parent=11 // pred_region
        _
      $region64: #{parallel_gat.1} parent=11 // pred_fallthru
        _
      // Predicated region
      $region65: #{parallel_gat.1} parent=11 // pred_check
        %p421 = pneg %p341
      $region66: #{parallel_gat.1} parent=11 // pred_check_branch
        %423 = sbr.rel (%p421) target = $region68
      $region67: #{parallel_gat.1} parent=11 // pred_region
        _
      $region68: #{parallel_gat.1} parent=11 // pred_fallthru
        _
    $region12: #{parallel_gat.1} parent=5 // pred_fallthru
      _
    %p424 = scmp.lt.s32.totalorder %s21, 4
    // Predicated region
    $region69: #{parallel_gat.1} parent=5 // pred_check
      %p425 = pneg %p424
    $region70: #{parallel_gat.1} parent=5 // pred_check_branch
      %427 = sbr.rel (%p425) target = $region72
    $region71: #{parallel_gat.1} parent=5 // pred_region
      // Predicated region
      $region73: #{parallel_gat.1} parent=71 // pred_check
        %p428 = pneg %p41
      $region74: #{parallel_gat.1} parent=71 // pred_check_branch
        %430 = sbr.rel (%p428) target = $region76
      $region75: #{parallel_gat.1} parent=71 // pred_region
        %s431 = smul.u32 2, %s21
        %p432 = scmp.lt.s32.totalorder %s431, 7
        %s433 = scalar_select %p432, %s431, 7
        %s434 = smul.addr %s433, 8
        %s435 = scalar_lea.vmem %s0, %s434
        %s436 = smul.u32 2, %s21
      $region76: #{parallel_gat.1} parent=71 // pred_fallthru
        _
    $region72: #{parallel_gat.1} parent=5 // pred_fallthru
      _
    %p437 = scmp.le.s32.totalorder 1, %s21
    %p438 = scmp.lt.s32.totalorder %s21, 5
    %p439 = pnand %p437, %p438
    %p440 = pneg %p439
    // Predicated region
    $region77: #{parallel_gat.1} parent=5 // pred_check
      _
    $region78: #{parallel_gat.1} parent=5 // pred_check_branch
      %442 = sbr.rel (%p439) target = $region80
    $region79: #{parallel_gat.1} parent=5 // pred_region
      %s443 = ssub.s32 %s21, 1
      %s444 = smul.u32 2, %s26
      %p445 = scmp.lt.s32.totalorder %s444, 7
      %s446 = scalar_select %p445, %s444, 7
      %s447 = smul.addr %s446, 8
      %s448 = scalar_lea.vmem %s0, %s447
      %p449 = pneg %p47
      %p450 = pneg %p44
      %p451 = pneg %p68
      %p452 = pneg %p65
      %p453 = pneg %p89
      %p454 = pneg %p86
      %p455 = pneg %p110
      %p456 = pneg %p107
      %p457 = pneg %p131
      %p458 = pneg %p128
      %p459 = pneg %p152
      %p460 = pneg %p149
      %p461 = pneg %p173
      %p462 = pneg %p170
      %p463 = pneg %p194
      %p464 = pneg %p191
      %p465 = pneg %p215
      %p466 = pneg %p212
      %p467 = pneg %p236
      %p468 = pneg %p233
      %p469 = pneg %p257
      %p470 = pneg %p254
      %p471 = pneg %p278
      %p472 = pneg %p275
      %p473 = pneg %p299
      %p474 = pneg %p296
      %p475 = pneg %p320
      %p476 = pneg %p317
      %p477 = pneg %p341
      %p478 = pneg %p338
      %p479 = pneg %p367
      %p480 = pneg %p364
      %s481 = smul.u32 2, %s26
      %p482 = scmp.lt.s32.totalorder %s481, 7
      %s483 = scalar_select %p482, %s481, 7
      %s484 = smul.addr %s483, 8
      %s485 = scalar_lea.vmem %s15, %s484
      %s486 = smul.u32 2, %s26
      %p487 = scmp.lt.s32.totalorder %s486, 7
      %s488 = scalar_select %p487, %s486, 7
      %s489 = smul.addr %s488, 8
      %s490 = scalar_lea.vmem %s0, %s489
      %s491 = smul.u32 2, %s26
      %s492 = smul.u32 2, %s26
      %p493 = scmp.lt.s32.totalorder %s492, 7
      %s494 = scalar_select %p493, %s492, 7
      %s495 = smul.addr %s494, 8
      %s496 = scalar_lea.vmem %s15, %s495
      %s497 = smul.u32 2, %s26
      %v498 = vld [vmem:[%s490] sm:$0xff]
      %v499 = vld [vmem:[%s490 + $0x8] sm:$0xff]
      %v500 = vld [vmem:[%s1] sm:$0xff]
      %v501 = vld [vmem:[%s2] sm:$0xf]
      %vm502 = vcmask 31744
      %v504 = vsel %vm502, %v498, 0
      %v507 = vsel %vm502, %v499, 0
      %vm509 = vcmask 1043456
      %v511 = vsel %vm509, %v501, 0
      %513 = vmatprep.subr.mxu0 0.0
      %514 = vmatpush1.msra.mxu0 %v511
      %515 = vmatprep.subr.mxu0 0.0
      %516 = vmatpush1.msra.mxu0 0.0
      %517 = vmatprep.subr.mxu0 0.0
      %518 = vmatpush1.msra.mxu0 0.0
      %519 = vmatprep.subr.mxu0 0.0
      %520 = vmatpush1.msra.mxu0 0.0
      %521 = vmatprep.subr.mxu0 0.0
      %522 = vmatpush1.msra.mxu0 0.0
      %523 = vmatprep.subr.mxu0 0.0
      %524 = vmatpush1.msra.mxu0 0.0
      %525 = vmatprep.subr.mxu0 0.0
      %526 = vmatpush1.msra.mxu0 0.0
      %527 = vmatprep.subr.mxu0 0.0
      %528 = vmatpush1.msra.mxu0 0.0
      %529 = vmatprep.subr.mxu0 0.0
      %530 = vmatpush1.msra.mxu0 0.0
      %531 = vmatprep.subr.mxu0 0.0
      %532 = vmatpush1.msra.mxu0 0.0
      %533 = vmatprep.subr.mxu0 0.0
      %534 = vmatpush1.msra.mxu0 0.0
      %535 = vmatprep.subr.mxu0 0.0
      %536 = vmatpush1.msra.mxu0 0.0
      %537 = vmatprep.subr.mxu0 0.0
      %538 = vmatpush1.msra.mxu0 0.0
      %539 = vmatprep.subr.mxu0 0.0
      %540 = vmatpush1.msra.mxu0 0.0
      %541 = vmatprep.subr.mxu0 0.0
      %542 = vmatpush1.msra.mxu0 0.0
      %543 = vmatprep.subr.mxu0 0.0
      %544 = vmatpush1.msra.mxu0 0.0
      %545 = vmatprep.subr.mxu0 0.0
      %546 = vmatpush1.msra.mxu0 0.0
      %547 = vmatprep.subr.mxu0 0.0
      %548 = vmatpush1.msra.mxu0 0.0
      %549 = vmatprep.subr.mxu0 0.0
      %550 = vmatpush1.msra.mxu0 0.0
      %551 = vmatprep.subr.mxu0 0.0
      %552 = vmatpush1.msra.mxu0 0.0
      %553 = vmatprep.subr.mxu0 0.0
      %554 = vmatpush1.msra.mxu0 0.0
      %555 = vmatprep.subr.mxu0 0.0
      %556 = vmatpush1.msra.mxu0 0.0
      %557 = vmatprep.subr.mxu0 0.0
      %558 = vmatpush1.msra.mxu0 0.0
      %559 = vmatprep.subr.mxu0 0.0
      %560 = vmatpush1.msra.mxu0 0.0
      %561 = vmatprep.subr.mxu0 0.0
      %562 = vmatpush1.msra.mxu0 0.0
      %563 = vmatprep.subr.mxu0 0.0
      %564 = vmatpush1.msra.mxu0 0.0
      %565 = vmatprep.subr.mxu0 0.0
      %566 = vmatpush1.msra.mxu0 0.0
      %567 = vmatprep.subr.mxu0 0.0
      %568 = vmatpush1.msra.mxu0 0.0
      %569 = vmatprep.subr.mxu0 0.0
      %570 = vmatpush1.msra.mxu0 0.0
      %571 = vmatprep.subr.mxu0 0.0
      %572 = vmatpush1.msra.mxu0 0.0
      %573 = vmatprep.subr.mxu0 0.0
      %574 = vmatpush1.msra.mxu0 0.0
      %575 = vmatprep.subr.mxu0 0.0
      %576 = vmatpush1.msra.mxu0 0.0
      %577 = vmatprep.mubr.f32.mxu0 0.0
      %578 = vmatmul.mubr.f32.gmra.mrb[0].mxu0 %v504
      %v579 = vpop.f32.mrb[0].mxu0
      %v580 = vadd.f32 0.0, %v579
      %v581 = vpop.f32.mrb[0].mxu0
      %582 = vmatprep.mubr.f32.mxu0 0.0
      %583 = vmatmul.mubr.f32.gmra.mrb[0].mxu0 %v507
      %v584 = vpop.f32.mrb[0].mxu0
      %v585 = vadd.f32 0.0, %v584
      %v586 = vpop.f32.mrb[0].mxu0
      %587 = vdwg.mxu0
      %v588 = vld [vmem:[%s3] sm:$0xff]
      %v589 = vld [vmem:[%s3 + $0x8] sm:$0xff]
      %vm590 = vcmask 130048
      %v592 = vsel %vm590, %v580, 0
      %v595 = vsel %vm590, %v585, 0
      %597 = vmatprep.subr.mxu0 0.0
      %598 = vmatpush1.msra.mxu0 %v588
      %599 = vmatprep.subr.mxu0 0.0
      %600 = vmatpush1.msra.mxu0 %v589
      %601 = vmatprep.subr.mxu0 0.0
      %602 = vmatpush1.msra.mxu0 0.0
      %603 = vmatprep.subr.mxu0 0.0
      %604 = vmatpush1.msra.mxu0 0.0
      %605 = vmatprep.subr.mxu0 0.0
      %606 = vmatpush1.msra.mxu0 0.0
      %607 = vmatprep.subr.mxu0 0.0
      %608 = vmatpush1.msra.mxu0 0.0
      %609 = vmatprep.subr.mxu0 0.0
      %610 = vmatpush1.msra.mxu0 0.0
      %611 = vmatprep.subr.mxu0 0.0
      %612 = vmatpush1.msra.mxu0 0.0
      %613 = vmatprep.subr.mxu0 0.0
      %614 = vmatpush1.msra.mxu0 0.0
      %615 = vmatprep.subr.mxu0 0.0
      %616 = vmatpush1.msra.mxu0 0.0
      %617 = vmatprep.subr.mxu0 0.0
      %618 = vmatpush1.msra.mxu0 0.0
      %619 = vmatprep.subr.mxu0 0.0
      %620 = vmatpush1.msra.mxu0 0.0
      %621 = vmatprep.subr.mxu0 0.0
      %622 = vmatpush1.msra.mxu0 0.0
      %623 = vmatprep.subr.mxu0 0.0
      %624 = vmatpush1.msra.mxu0 0.0
      %625 = vmatprep.subr.mxu0 0.0
      %626 = vmatpush1.msra.mxu0 0.0
      %627 = vmatprep.subr.mxu0 0.0
      %628 = vmatpush1.msra.mxu0 0.0
      %629 = vmatprep.subr.mxu0 0.0
      %630 = vmatpush1.msra.mxu0 0.0
      %631 = vmatprep.subr.mxu0 0.0
      %632 = vmatpush1.msra.mxu0 0.0
      %633 = vmatprep.subr.mxu0 0.0
      %634 = vmatpush1.msra.mxu0 0.0
      %635 = vmatprep.subr.mxu0 0.0
      %636 = vmatpush1.msra.mxu0 0.0
      %637 = vmatprep.subr.mxu0 0.0
      %638 = vmatpush1.msra.mxu0 0.0
      %639 = vmatprep.subr.mxu0 0.0
      %640 = vmatpush1.msra.mxu0 0.0
      %641 = vmatprep.subr.mxu0 0.0
      %642 = vmatpush1.msra.mxu0 0.0
      %643 = vmatprep.subr.mxu0 0.0
      %644 = vmatpush1.msra.mxu0 0.0
      %645 = vmatprep.subr.mxu0 0.0
      %646 = vmatpush1.msra.mxu0 0.0
      %647 = vmatprep.subr.mxu0 0.0
      %648 = vmatpush1.msra.mxu0 0.0
      %649 = vmatprep.subr.mxu0 0.0
      %650 = vmatpush1.msra.mxu0 0.0
      %651 = vmatprep.subr.mxu0 0.0
      %652 = vmatpush1.msra.mxu0 0.0
      %653 = vmatprep.subr.mxu0 0.0
      %654 = vmatpush1.msra.mxu0 0.0
      %655 = vmatprep.subr.mxu0 0.0
      %656 = vmatpush1.msra.mxu0 0.0
      %657 = vmatprep.subr.mxu0 0.0
      %658 = vmatpush1.msra.mxu0 0.0
      %659 = vmatprep.subr.mxu0 0.0
      %660 = vmatpush1.msra.mxu0 0.0
      %661 = vmatprep.mubr.f32.mxu0 0.0
      %662 = vmatmul.mubr.f32.gmra.mrb[0].mxu0 %v592
      %v663 = vpop.f32.mrb[0].mxu0
      %v664 = vadd.f32 0.0, %v663
      %v665 = vpop.f32.mrb[0].mxu0
      %666 = vmatprep.mubr.f32.mxu0 0.0
      %667 = vmatmul.mubr.f32.gmra.mrb[0].mxu0 %v595
      %v668 = vpop.f32.mrb[0].mxu0
      %v669 = vadd.f32 0.0, %v668
      %v670 = vpop.f32.mrb[0].mxu0
      %671 = vdwg.mxu0
      %674 = vrot.lane.b32.xlu0 %v664, 126
      %v675 = vpop.permute.xlu0 %674
      %676 = vrot.lane.b32.xlu0 %v669, 126
      %v677 = vpop.permute.xlu0 %676
      %680 = vxpose.xlu0.b32.start [1/16] %v675, 128
      %681 = vxpose.xlu0.b32.cont [2/16] 0.0, 128
      %682 = vxpose.xlu0.b32.cont [3/16] 0.0, 128
      %683 = vxpose.xlu0.b32.cont [4/16] 0.0, 128
      %684 = vxpose.xlu0.b32.cont [5/16] 0.0, 128
      %685 = vxpose.xlu0.b32.cont [6/16] 0.0, 128
      %686 = vxpose.xlu0.b32.cont [7/16] 0.0, 128
      %687 = vxpose.xlu0.b32.cont [8/16] 0.0, 128
      %688 = vxpose.xlu0.b32.cont [9/16] 0.0, 128
      %689 = vxpose.xlu0.b32.cont [10/16] 0.0, 128
      %690 = vxpose.xlu0.b32.cont [11/16] 0.0, 128
      %691 = vxpose.xlu0.b32.cont [12/16] 0.0, 128
      %692 = vxpose.xlu0.b32.cont [13/16] 0.0, 128
      %693 = vxpose.xlu0.b32.cont [14/16] 0.0, 128
      %694 = vxpose.xlu0.b32.cont [15/16] 0.0, 128
      %695 = vxpose.xlu0.b32.end [16/16] 0.0, 128
      %v696 = vpop.trf.xlu0
      %v697 = vpop.trf.xlu0
      %v698 = vpop.trf.xlu0
      %v699 = vpop.trf.xlu0
      %v700 = vpop.trf.xlu0
      %v701 = vpop.trf.xlu0
      %v702 = vpop.trf.xlu0
      %v703 = vpop.trf.xlu0
      %v704 = vpop.trf.xlu0
      %v705 = vpop.trf.xlu0
      %v706 = vpop.trf.xlu0
      %v707 = vpop.trf.xlu0
      %v708 = vpop.trf.xlu0
      %v709 = vpop.trf.xlu0
      %v710 = vpop.trf.xlu0
      %v711 = vpop.trf.xlu0
      %712 = vxpose.xlu0.b32.start [1/16] %v677, 128
      %713 = vxpose.xlu0.b32.cont [2/16] 0.0, 128
      %714 = vxpose.xlu0.b32.cont [3/16] 0.0, 128
      %715 = vxpose.xlu0.b32.cont [4/16] 0.0, 128
      %716 = vxpose.xlu0.b32.cont [5/16] 0.0, 128
      %717 = vxpose.xlu0.b32.cont [6/16] 0.0, 128
      %718 = vxpose.xlu0.b32.cont [7/16] 0.0, 128
      %719 = vxpose.xlu0.b32.cont [8/16] 0.0, 128
      %720 = vxpose.xlu0.b32.cont [9/16] 0.0, 128
      %721 = vxpose.xlu0.b32.cont [10/16] 0.0, 128
      %722 = vxpose.xlu0.b32.cont [11/16] 0.0, 128
      %723 = vxpose.xlu0.b32.cont [12/16] 0.0, 128
      %724 = vxpose.xlu0.b32.cont [13/16] 0.0, 128
      %725 = vxpose.xlu0.b32.cont [14/16] 0.0, 128
      %726 = vxpose.xlu0.b32.cont [15/16] 0.0, 128
      %727 = vxpose.xlu0.b32.end [16/16] 0.0, 128
      %v728 = vpop.trf.xlu0
      %v729 = vpop.trf.xlu0
      %v730 = vpop.trf.xlu0
      %v731 = vpop.trf.xlu0
      %v732 = vpop.trf.xlu0
      %v733 = vpop.trf.xlu0
      %v734 = vpop.trf.xlu0
      %v735 = vpop.trf.xlu0
      %v736 = vpop.trf.xlu0
      %v737 = vpop.trf.xlu0
      %v738 = vpop.trf.xlu0
      %v739 = vpop.trf.xlu0
      %v740 = vpop.trf.xlu0
      %v741 = vpop.trf.xlu0
      %v742 = vpop.trf.xlu0
      %v743 = vpop.trf.xlu0
      %v744 = vld [vmem:[%s5] sm:$0xf]
      %v746 = vsel %vm509, %v744, 0
      %748 = vmatprep.subr.mxu0 0.0
      %749 = vmatpush1.msra.mxu0 %v746
      %750 = vmatprep.subr.mxu0 0.0
      %751 = vmatpush1.msra.mxu0 0.0
      %752 = vmatprep.subr.mxu0 0.0
      %753 = vmatpush1.msra.mxu0 0.0
      %754 = vmatprep.subr.mxu0 0.0
      %755 = vmatpush1.msra.mxu0 0.0
      %756 = vmatprep.subr.mxu0 0.0
      %757 = vmatpush1.msra.mxu0 0.0
      %758 = vmatprep.subr.mxu0 0.0
      %759 = vmatpush1.msra.mxu0 0.0
      %760 = vmatprep.subr.mxu0 0.0
      %761 = vmatpush1.msra.mxu0 0.0
      %762 = vmatprep.subr.mxu0 0.0
      %763 = vmatpush1.msra.mxu0 0.0
      %764 = vmatprep.subr.mxu0 0.0
      %765 = vmatpush1.msra.mxu0 0.0
      %766 = vmatprep.subr.mxu0 0.0
      %767 = vmatpush1.msra.mxu0 0.0
      %768 = vmatprep.subr.mxu0 0.0
      %769 = vmatpush1.msra.mxu0 0.0
      %770 = vmatprep.subr.mxu0 0.0
      %771 = vmatpush1.msra.mxu0 0.0
      %772 = vmatprep.subr.mxu0 0.0
      %773 = vmatpush1.msra.mxu0 0.0
      %774 = vmatprep.subr.mxu0 0.0
      %775 = vmatpush1.msra.mxu0 0.0
      %776 = vmatprep.subr.mxu0 0.0
      %777 = vmatpush1.msra.mxu0 0.0
      %778 = vmatprep.subr.mxu0 0.0
      %779 = vmatpush1.msra.mxu0 0.0
      %780 = vmatprep.subr.mxu0 0.0
      %781 = vmatpush1.msra.mxu0 0.0
      %782 = vmatprep.subr.mxu0 0.0
      %783 = vmatpush1.msra.mxu0 0.0
      %784 = vmatprep.subr.mxu0 0.0
      %785 = vmatpush1.msra.mxu0 0.0
      %786 = vmatprep.subr.mxu0 0.0
      %787 = vmatpush1.msra.mxu0 0.0
      %788 = vmatprep.subr.mxu0 0.0
      %789 = vmatpush1.msra.mxu0 0.0
      %790 = vmatprep.subr.mxu0 0.0
      %791 = vmatpush1.msra.mxu0 0.0
      %792 = vmatprep.subr.mxu0 0.0
      %793 = vmatpush1.msra.mxu0 0.0
      %794 = vmatprep.subr.mxu0 0.0
      %795 = vmatpush1.msra.mxu0 0.0
      %796 = vmatprep.subr.mxu0 0.0
      %797 = vmatpush1.msra.mxu0 0.0
      %798 = vmatprep.subr.mxu0 0.0
      %799 = vmatpush1.msra.mxu0 0.0
      %800 = vmatprep.subr.mxu0 0.0
      %801 = vmatpush1.msra.mxu0 0.0
      %802 = vmatprep.subr.mxu0 0.0
      %803 = vmatpush1.msra.mxu0 0.0
      %804 = vmatprep.subr.mxu0 0.0
      %805 = vmatpush1.msra.mxu0 0.0
      %806 = vmatprep.subr.mxu0 0.0
      %807 = vmatpush1.msra.mxu0 0.0
      %808 = vmatprep.subr.mxu0 0.0
      %809 = vmatpush1.msra.mxu0 0.0
      %810 = vmatprep.subr.mxu0 0.0
      %811 = vmatpush1.msra.mxu0 0.0
      %812 = vmatprep.mubr.f32.mxu0 0.0
      %813 = vmatmul.mubr.f32.gmra.mrb[0].mxu0 %v504
      %v814 = vpop.f32.mrb[0].mxu0
      %v815 = vadd.f32 0.0, %v814
      %v816 = vpop.f32.mrb[0].mxu0
      %817 = vmatprep.mubr.f32.mxu0 0.0
      %818 = vmatmul.mubr.f32.gmra.mrb[0].mxu0 %v507
      %v819 = vpop.f32.mrb[0].mxu0
      %v820 = vadd.f32 0.0, %v819
      %v821 = vpop.f32.mrb[0].mxu0
      %822 = vdwg.mxu0
      %v823 = vld [vmem:[%s6] sm:$0x1]
      %v825 = vlaneseq
      %v826 = vshrl.u32 %v825, 7
      %v827 = vsub.s32 0, %v826
      %v828 = vrot.slane %v823, %v827
      %v830 = vadd.f32 %v815, %v828
      %v831 = vadd.f32 %v820, %v828
      %v832 = vld [vmem:[%s7] sm:$0xff]
      %v833 = vld [vmem:[%s7 + $0x8] sm:$0xff]
      %v834 = vld [vmem:[%s4] sm:$0xff]
      %835 = vset.pattern.permute.xlu0 0
      %836 = vperm.xlu0 %835, %v664
      %v837 = vpop.permute.xlu0 %836
      %839 = vset.pattern.permute.xlu0 0
      %840 = vperm.xlu0 %839, %v669
      %v841 = vpop.permute.xlu0 %840
      %v843 = vlaneseq
      %v844 = vshrl.u32 %v843, 7
      %v845 = vsub.s32 0, %v844
      %v846 = vrot.slane %v696, %v845
      %v847 = vlaneseq
      %v848 = vshrl.u32 %v847, 7
      %v849 = vsub.s32 0, %v848
      %v850 = vrot.slane %v728, %v849
      %v851 = vadd.f32 %v837, %v846
      %v852 = vadd.f32 %v841, %v850
      %vm853 = vcmp.gt.f32.partialorder %v851, 0.0
      %vm854 = vcmp.gt.f32.partialorder %v852, 0.0
      %v855 = vmul.f32 %v851, 0.2
      %v856 = vmul.f32 %v852, 0.2
      %v857 = vsel %vm853, %v851, %v855
      %v858 = vsel %vm854, %v852, %v856
      %v859 = vmul.f32 %v500, %v857
      %v860 = vmul.f32 %v500, %v858
      %vm861 = vcmask 64512
      %v862 = vsel %vm861, %v859, -inf
      %v863 = vrot.slane %v862, 4
      %v864 = vmax.f32 %v862, %v863
      %v865 = vrot.slane %v864, 2
      %v866 = vmax.f32 %v864, %v865
      %v867 = vrot.slane %v866, 1
      %v868 = vmax.f32 %v866, %v867
      %v869 = vsel %vm861, %v860, -inf
      %v870 = vrot.slane %v869, 4
      %v871 = vmax.f32 %v869, %v870
      %v872 = vrot.slane %v871, 2
      %v873 = vmax.f32 %v871, %v872
      %v874 = vrot.slane %v873, 1
      %v875 = vmax.f32 %v873, %v874
      %v876 = vsub.f32 %v859, %v868
      %v877 = vsub.f32 %v860, %v875
      %v878 = vmul.f32 %v876, 1.442695
      %v879 = vpow.pop %v878
      %v880 = vmul.f32 %v877, 1.442695
      %v881 = vpow.pop %v880
      %v882 = vsel %vm861, %v879, 0.0
      %v883 = vrot.slane %v882, 4
      %v884 = vadd.f32 %v882, %v883
      %v885 = vrot.slane %v884, 2
      %v886 = vadd.f32 %v884, %v885
      %v887 = vrot.slane %v886, 1
      %v888 = vadd.f32 %v886, %v887
      %v889 = vsel %vm861, %v881, 0.0
      %v890 = vrot.slane %v889, 4
      %v891 = vadd.f32 %v889, %v890
      %v892 = vrot.slane %v891, 2
      %v893 = vadd.f32 %v891, %v892
      %v894 = vrot.slane %v893, 1
      %v895 = vadd.f32 %v893, %v894
      %v896 = vrcp.pop %v888
      %v897 = vmul.f32 %v879, %v896
      %v898 = vrcp.pop %v895
      %v899 = vmul.f32 %v881, %v898
      %v901 = vsel %vm861, %v897, 0
      %903 = vmatprep.subr.mxu0 0.0
      %904 = vmatpush1.msra.mxu0 %v580
      %905 = vmatprep.subr.mxu0 0.0
      %906 = vmatpush1.msra.mxu0 0.0
      %907 = vmatprep.subr.mxu0 0.0
      %908 = vmatpush1.msra.mxu0 0.0
      %909 = vmatprep.subr.mxu0 0.0
      %910 = vmatpush1.msra.mxu0 0.0
      %911 = vmatprep.subr.mxu0 0.0
      %912 = vmatpush1.msra.mxu0 0.0
      %913 = vmatprep.subr.mxu0 0.0
      %914 = vmatpush1.msra.mxu0 0.0
      %915 = vmatprep.subr.mxu0 0.0
      %916 = vmatpush1.msra.mxu0 0.0
      %917 = vmatprep.subr.mxu0 0.0
      %918 = vmatpush1.msra.mxu0 0.0
      %919 = vmatprep.subr.mxu0 0.0
      %920 = vmatpush1.msra.mxu0 0.0
      %921 = vmatprep.subr.mxu0 0.0
      %922 = vmatpush1.msra.mxu0 0.0
      %923 = vmatprep.subr.mxu0 0.0
      %924 = vmatpush1.msra.mxu0 0.0
      %925 = vmatprep.subr.mxu0 0.0
      %926 = vmatpush1.msra.mxu0 0.0
      %927 = vmatprep.subr.mxu0 0.0
      %928 = vmatpush1.msra.mxu0 0.0
      %929 = vmatprep.subr.mxu0 0.0
      %930 = vmatpush1.msra.mxu0 0.0
      %931 = vmatprep.subr.mxu0 0.0
      %932 = vmatpush1.msra.mxu0 0.0
      %933 = vmatprep.subr.mxu0 0.0
      %934 = vmatpush1.msra.mxu0 0.0
      %935 = vmatprep.subr.mxu0 0.0
      %936 = vmatpush1.msra.mxu0 0.0
      %937 = vmatprep.subr.mxu0 0.0
      %938 = vmatpush1.msra.mxu0 0.0
      %939 = vmatprep.subr.mxu0 0.0
      %940 = vmatpush1.msra.mxu0 0.0
      %941 = vmatprep.subr.mxu0 0.0
      %942 = vmatpush1.msra.mxu0 0.0
      %943 = vmatprep.subr.mxu0 0.0
      %944 = vmatpush1.msra.mxu0 0.0
      %945 = vmatprep.subr.mxu0 0.0
      %946 = vmatpush1.msra.mxu0 0.0
      %947 = vmatprep.subr.mxu0 0.0
      %948 = vmatpush1.msra.mxu0 0.0
      %949 = vmatprep.subr.mxu0 0.0
      %950 = vmatpush1.msra.mxu0 0.0
      %951 = vmatprep.subr.mxu0 0.0
      %952 = vmatpush1.msra.mxu0 0.0
      %953 = vmatprep.subr.mxu0 0.0
      %954 = vmatpush1.msra.mxu0 0.0
      %955 = vmatprep.subr.mxu0 0.0
      %956 = vmatpush1.msra.mxu0 0.0
      %957 = vmatprep.subr.mxu0 0.0
      %958 = vmatpush1.msra.mxu0 0.0
      %959 = vmatprep.subr.mxu0 0.0
      %960 = vmatpush1.msra.mxu0 0.0
      %961 = vmatprep.subr.mxu0 0.0
      %962 = vmatpush1.msra.mxu0 0.0
      %963 = vmatprep.subr.mxu0 0.0
      %964 = vmatpush1.msra.mxu0 0.0
      %965 = vmatprep.subr.mxu0 0.0
      %966 = vmatpush1.msra.mxu0 0.0
      %967 = vmatprep.mubr.f32.mxu0 0.0
      %968 = vmatmul.mubr.f32.gmra.mrb[0].mxu0 %v901
      %v969 = vpop.f32.mrb[0].mxu0
      %v970 = vadd.f32 %v834, %v969
      %v971 = vpop.f32.mrb[0].mxu0
      %972 = vdwg.mxu0
      %v974 = vsel %vm861, %v899, 0
      %976 = vmatprep.subr.mxu0 0.0
      %977 = vmatpush1.msra.mxu0 %v585
      %978 = vmatprep.subr.mxu0 0.0
      %979 = vmatpush1.msra.mxu0 0.0
      %980 = vmatprep.subr.mxu0 0.0
      %981 = vmatpush1.msra.mxu0 0.0
      %982 = vmatprep.subr.mxu0 0.0
      %983 = vmatpush1.msra.mxu0 0.0
      %984 = vmatprep.subr.mxu0 0.0
      %985 = vmatpush1.msra.mxu0 0.0
      %986 = vmatprep.subr.mxu0 0.0
      %987 = vmatpush1.msra.mxu0 0.0
      %988 = vmatprep.subr.mxu0 0.0
      %989 = vmatpush1.msra.mxu0 0.0
      %990 = vmatprep.subr.mxu0 0.0
      %991 = vmatpush1.msra.mxu0 0.0
      %992 = vmatprep.subr.mxu0 0.0
      %993 = vmatpush1.msra.mxu0 0.0
      %994 = vmatprep.subr.mxu0 0.0
      %995 = vmatpush1.msra.mxu0 0.0
      %996 = vmatprep.subr.mxu0 0.0
      %997 = vmatpush1.msra.mxu0 0.0
      %998 = vmatprep.subr.mxu0 0.0
      %999 = vmatpush1.msra.mxu0 0.0
      %1000 = vmatprep.subr.mxu0 0.0
      %1001 = vmatpush1.msra.mxu0 0.0
      %1002 = vmatprep.subr.mxu0 0.0
      %1003 = vmatpush1.msra.mxu0 0.0
      %1004 = vmatprep.subr.mxu0 0.0
      %1005 = vmatpush1.msra.mxu0 0.0
      %1006 = vmatprep.subr.mxu0 0.0
      %1007 = vmatpush1.msra.mxu0 0.0
      %1008 = vmatprep.subr.mxu0 0.0
      %1009 = vmatpush1.msra.mxu0 0.0
      %1010 = vmatprep.subr.mxu0 0.0
      %1011 = vmatpush1.msra.mxu0 0.0
      %1012 = vmatprep.subr.mxu0 0.0
      %1013 = vmatpush1.msra.mxu0 0.0
      %1014 = vmatprep.subr.mxu0 0.0
      %1015 = vmatpush1.msra.mxu0 0.0
      %1016 = vmatprep.subr.mxu0 0.0
      %1017 = vmatpush1.msra.mxu0 0.0
      %1018 = vmatprep.subr.mxu0 0.0
      %1019 = vmatpush1.msra.mxu0 0.0
      %1020 = vmatprep.subr.mxu0 0.0
      %1021 = vmatpush1.msra.mxu0 0.0
      %1022 = vmatprep.subr.mxu0 0.0
      %1023 = vmatpush1.msra.mxu0 0.0
      %1024 = vmatprep.subr.mxu0 0.0
      %1025 = vmatpush1.msra.mxu0 0.0
      %1026 = vmatprep.subr.mxu0 0.0
      %1027 = vmatpush1.msra.mxu0 0.0
      %1028 = vmatprep.subr.mxu0 0.0
      %1029 = vmatpush1.msra.mxu0 0.0
      %1030 = vmatprep.subr.mxu0 0.0
      %1031 = vmatpush1.msra.mxu0 0.0
      %1032 = vmatprep.subr.mxu0 0.0
      %1033 = vmatpush1.msra.mxu0 0.0
      %1034 = vmatprep.subr.mxu0 0.0
      %1035 = vmatpush1.msra.mxu0 0.0
      %1036 = vmatprep.subr.mxu0 0.0
      %1037 = vmatpush1.msra.mxu0 0.0
      %1038 = vmatprep.subr.mxu0 0.0
      %1039 = vmatpush1.msra.mxu0 0.0
      %1040 = vmatprep.mubr.f32.mxu0 0.0
      %1041 = vmatmul.mubr.f32.gmra.mrb[0].mxu0 %v974
      %v1042 = vpop.f32.mrb[0].mxu0
      %v1043 = vadd.f32 %v834, %v1042
      %v1044 = vpop.f32.mrb[0].mxu0
      %1045 = vdwg.mxu0
      %v1046 = vadd.f32 %v970, %v830
      %v1047 = vadd.f32 %v1043, %v831
      %v1048 = vld [vmem:[%s10] sm:$0xff]
      %1049 = vset.pattern.permute.xlu0 1
      %1050 = vperm.xlu0 %1049, %v664
      %v1051 = vpop.permute.xlu0 %1050
      %1053 = vset.pattern.permute.xlu0 1
      %1054 = vperm.xlu0 %1053, %v669
      %v1055 = vpop.permute.xlu0 %1054
      %v1057 = vlaneseq
      %v1058 = vshrl.u32 %v1057, 7
      %v1059 = vsub.s32 1, %v1058
      %v1060 = vrot.slane %v696, %v1059
      %v1061 = vlaneseq
      %v1062 = vshrl.u32 %v1061, 7
      %v1063 = vsub.s32 1, %v1062
      %v1064 = vrot.slane %v728, %v1063
      %v1065 = vadd.f32 %v1051, %v1060
      %v1066 = vadd.f32 %v1055, %v1064
      %vm1067 = vcmp.gt.f32.partialorder %v1065, 0.0
      %vm1068 = vcmp.gt.f32.partialorder %v1066, 0.0
      %v1069 = vmul.f32 %v1065, 0.2
      %v1070 = vmul.f32 %v1066, 0.2
      %v1071 = vsel %vm1067, %v1065, %v1069
      %v1072 = vsel %vm1068, %v1066, %v1070
      %v1073 = vmul.f32 %v500, %v1071
      %v1074 = vmul.f32 %v500, %v1072
      %v1075 = vsel %vm861, %v1073, -inf
      %v1076 = vrot.slane %v1075, 4
      %v1077 = vmax.f32 %v1075, %v1076
      %v1078 = vrot.slane %v1077, 2
      %v1079 = vmax.f32 %v1077, %v1078
      %v1080 = vrot.slane %v1079, 1
      %v1081 = vmax.f32 %v1079, %v1080
      %v1082 = vsel %vm861, %v1074, -inf
      %v1083 = vrot.slane %v1082, 4
      %v1084 = vmax.f32 %v1082, %v1083
      %v1085 = vrot.slane %v1084, 2
      %v1086 = vmax.f32 %v1084, %v1085
      %v1087 = vrot.slane %v1086, 1
      %v1088 = vmax.f32 %v1086, %v1087
      %v1089 = vsub.f32 %v1073, %v1081
      %v1090 = vsub.f32 %v1074, %v1088
      %v1091 = vmul.f32 %v1089, 1.442695
      %v1092 = vpow.pop %v1091
      %v1093 = vmul.f32 %v1090, 1.442695
      %v1094 = vpow.pop %v1093
      %v1095 = vsel %vm861, %v1092, 0.0
      %v1096 = vrot.slane %v1095, 4
      %v1097 = vadd.f32 %v1095, %v1096
      %v1098 = vrot.slane %v1097, 2
      %v1099 = vadd.f32 %v1097, %v1098
      %v1100 = vrot.slane %v1099, 1
      %v1101 = vadd.f32 %v1099, %v1100
      %v1102 = vsel %vm861, %v1094, 0.0
      %v1103 = vrot.slane %v1102, 4
      %v1104 = vadd.f32 %v1102, %v1103
      %v1105 = vrot.slane %v1104, 2
      %v1106 = vadd.f32 %v1104, %v1105
      %v1107 = vrot.slane %v1106, 1
      %v1108 = vadd.f32 %v1106, %v1107
      %v1109 = vrcp.pop %v1101
      %v1110 = vmul.f32 %v1092, %v1109
      %v1111 = vrcp.pop %v1108
      %v1112 = vmul.f32 %v1094, %v1111
      %1113 = vrot.lane.b32.xlu0 %v580, 120
      %v1114 = vpop.permute.xlu0 %1113
      %1117 = vrot.lane.b32.xlu0 %v834, 120
      %v1118 = vpop.permute.xlu0 %1117
      %v1121 = vsel %vm861, %v1110, 0
      %1123 = vmatprep.subr.mxu0 0.0
      %1124 = vmatpush1.msra.mxu0 %v1114
      %1125 = vmatprep.subr.mxu0 0.0
      %1126 = vmatpush1.msra.mxu0 0.0
      %1127 = vmatprep.subr.mxu0 0.0
      %1128 = vmatpush1.msra.mxu0 0.0
      %1129 = vmatprep.subr.mxu0 0.0
      %1130 = vmatpush1.msra.mxu0 0.0
      %1131 = vmatprep.subr.mxu0 0.0
      %1132 = vmatpush1.msra.mxu0 0.0
      %1133 = vmatprep.subr.mxu0 0.0
      %1134 = vmatpush1.msra.mxu0 0.0
      %1135 = vmatprep.subr.mxu0 0.0
      %1136 = vmatpush1.msra.mxu0 0.0
      %1137 = vmatprep.subr.mxu0 0.0
      %1138 = vmatpush1.msra.mxu0 0.0
      %1139 = vmatprep.subr.mxu0 0.0
      %1140 = vmatpush1.msra.mxu0 0.0
      %1141 = vmatprep.subr.mxu0 0.0
      %1142 = vmatpush1.msra.mxu0 0.0
      %1143 = vmatprep.subr.mxu0 0.0
      %1144 = vmatpush1.msra.mxu0 0.0
      %1145 = vmatprep.subr.mxu0 0.0
      %1146 = vmatpush1.msra.mxu0 0.0
      %1147 = vmatprep.subr.mxu0 0.0
      %1148 = vmatpush1.msra.mxu0 0.0
      %1149 = vmatprep.subr.mxu0 0.0
      %1150 = vmatpush1.msra.mxu0 0.0
      %1151 = vmatprep.subr.mxu0 0.0
      %1152 = vmatpush1.msra.mxu0 0.0
      %1153 = vmatprep.subr.mxu0 0.0
      %1154 = vmatpush1.msra.mxu0 0.0
      %1155 = vmatprep.subr.mxu0 0.0
      %1156 = vmatpush1.msra.mxu0 0.0
      %1157 = vmatprep.subr.mxu0 0.0
      %1158 = vmatpush1.msra.mxu0 0.0
      %1159 = vmatprep.subr.mxu0 0.0
      %1160 = vmatpush1.msra.mxu0 0.0
      %1161 = vmatprep.subr.mxu0 0.0
      %1162 = vmatpush1.msra.mxu0 0.0
      %1163 = vmatprep.subr.mxu0 0.0
      %1164 = vmatpush1.msra.mxu0 0.0
      %1165 = vmatprep.subr.mxu0 0.0
      %1166 = vmatpush1.msra.mxu0 0.0
      %1167 = vmatprep.subr.mxu0 0.0
      %1168 = vmatpush1.msra.mxu0 0.0
      %1169 = vmatprep.subr.mxu0 0.0
      %1170 = vmatpush1.msra.mxu0 0.0
      %1171 = vmatprep.subr.mxu0 0.0
      %1172 = vmatpush1.msra.mxu0 0.0
      %1173 = vmatprep.subr.mxu0 0.0
      %1174 = vmatpush1.msra.mxu0 0.0
      %1175 = vmatprep.subr.mxu0 0.0
      %1176 = vmatpush1.msra.mxu0 0.0
      %1177 = vmatprep.subr.mxu0 0.0
      %1178 = vmatpush1.msra.mxu0 0.0
      %1179 = vmatprep.subr.mxu0 0.0
      %1180 = vmatpush1.msra.mxu0 0.0
      %1181 = vmatprep.subr.mxu0 0.0
      %1182 = vmatpush1.msra.mxu0 0.0
      %1183 = vmatprep.subr.mxu0 0.0
      %1184 = vmatpush1.msra.mxu0 0.0
      %1185 = vmatprep.subr.mxu0 0.0
      %1186 = vmatpush1.msra.mxu0 0.0
      %1187 = vmatprep.mubr.f32.mxu0 0.0
      %1188 = vmatmul.mubr.f32.gmra.mrb[0].mxu0 %v1121
      %v1189 = vpop.f32.mrb[0].mxu0
      %v1190 = vadd.f32 %v1118, %v1189
      %v1191 = vpop.f32.mrb[0].mxu0
      %1192 = vdwg.mxu0
      %1193 = vrot.lane.b32.xlu0 %v585, 120
      %v1194 = vpop.permute.xlu0 %1193
      %v1197 = vsel %vm861, %v1112, 0
      %1199 = vmatprep.subr.mxu0 0.0
      %1200 = vmatpush1.msra.mxu0 %v1194
      %1201 = vmatprep.subr.mxu0 0.0
      %1202 = vmatpush1.msra.mxu0 0.0
      %1203 = vmatprep.subr.mxu0 0.0
      %1204 = vmatpush1.msra.mxu0 0.0
      %1205 = vmatprep.subr.mxu0 0.0
      %1206 = vmatpush1.msra.mxu0 0.0
      %1207 = vmatprep.subr.mxu0 0.0
      %1208 = vmatpush1.msra.mxu0 0.0
      %1209 = vmatprep.subr.mxu0 0.0
      %1210 = vmatpush1.msra.mxu0 0.0
      %1211 = vmatprep.subr.mxu0 0.0
      %1212 = vmatpush1.msra.mxu0 0.0
      %1213 = vmatprep.subr.mxu0 0.0
      %1214 = vmatpush1.msra.mxu0 0.0
      %1215 = vmatprep.subr.mxu0 0.0
      %1216 = vmatpush1.msra.mxu0 0.0
      %1217 = vmatprep.subr.mxu0 0.0
      %1218 = vmatpush1.msra.mxu0 0.0
      %1219 = vmatprep.subr.mxu0 0.0
      %1220 = vmatpush1.msra.mxu0 0.0
      %1221 = vmatprep.subr.mxu0 0.0
      %1222 = vmatpush1.msra.mxu0 0.0
      %1223 = vmatprep.subr.mxu0 0.0
      %1224 = vmatpush1.msra.mxu0 0.0
      %1225 = vmatprep.subr.mxu0 0.0
      %1226 = vmatpush1.msra.mxu0 0.0
      %1227 = vmatprep.subr.mxu0 0.0
      %1228 = vmatpush1.msra.mxu0 0.0
      %1229 = vmatprep.subr.mxu0 0.0
      %1230 = vmatpush1.msra.mxu0 0.0
      %1231 = vmatprep.subr.mxu0 0.0
      %1232 = vmatpush1.msra.mxu0 0.0
      %1233 = vmatprep.subr.mxu0 0.0
      %1234 = vmatpush1.msra.mxu0 0.0
      %1235 = vmatprep.subr.mxu0 0.0
      %1236 = vmatpush1.msra.mxu0 0.0
      %1237 = vmatprep.subr.mxu0 0.0
      %1238 = vmatpush1.msra.mxu0 0.0
      %1239 = vmatprep.subr.mxu0 0.0
      %1240 = vmatpush1.msra.mxu0 0.0
      %1241 = vmatprep.subr.mxu0 0.0
      %1242 = vmatpush1.msra.mxu0 0.0
      %1243 = vmatprep.subr.mxu0 0.0
      %1244 = vmatpush1.msra.mxu0 0.0
      %1245 = vmatprep.subr.mxu0 0.0
      %1246 = vmatpush1.msra.mxu0 0.0
      %1247 = vmatprep.subr.mxu0 0.0
      %1248 = vmatpush1.msra.mxu0 0.0
      %1249 = vmatprep.subr.mxu0 0.0
      %1250 = vmatpush1.msra.mxu0 0.0
      %1251 = vmatprep.subr.mxu0 0.0
      %1252 = vmatpush1.msra.mxu0 0.0
      %1253 = vmatprep.subr.mxu0 0.0
      %1254 = vmatpush1.msra.mxu0 0.0
      %1255 = vmatprep.subr.mxu0 0.0
      %1256 = vmatpush1.msra.mxu0 0.0
      %1257 = vmatprep.subr.mxu0 0.0
      %1258 = vmatpush1.msra.mxu0 0.0
      %1259 = vmatprep.subr.mxu0 0.0
      %1260 = vmatpush1.msra.mxu0 0.0
      %1261 = vmatprep.subr.mxu0 0.0
      %1262 = vmatpush1.msra.mxu0 0.0
      %1263 = vmatprep.mubr.f32.mxu0 0.0
      %1264 = vmatmul.mubr.f32.gmra.mrb[0].mxu0 %v1197
      %v1265 = vpop.f32.mrb[0].mxu0
      %v1266 = vadd.f32 %v1118, %v1265
      %v1267 = vpop.f32.mrb[0].mxu0
      %1268 = vdwg.mxu0
      %1271 = vrot.lane.b32.xlu0 %v830, 120
      %v1272 = vpop.permute.xlu0 %1271
      %1273 = vrot.lane.b32.xlu0 %v831, 120
      %v1274 = vpop.permute.xlu0 %1273
      %v1277 = vadd.f32 %v1190, %v1272
      %v1278 = vadd.f32 %v1266, %v1274
      %v1280 = vsel %vm861, %v1277, 0
      %v1283 = vsel %vm861, %v1278, 0
      %1285 = vmatprep.subr.mxu0 0.0
      %1286 = vmatpush1.msra.mxu0 %v833
      %1287 = vmatprep.subr.mxu0 0.0
      %1288 = vmatpush1.msra.mxu0 0.0
      %1289 = vmatprep.subr.mxu0 0.0
      %1290 = vmatpush1.msra.mxu0 0.0
      %1291 = vmatprep.subr.mxu0 0.0
      %1292 = vmatpush1.msra.mxu0 0.0
      %1293 = vmatprep.subr.mxu0 0.0
      %1294 = vmatpush1.msra.mxu0 0.0
      %1295 = vmatprep.subr.mxu0 0.0
      %1296 = vmatpush1.msra.mxu0 0.0
      %1297 = vmatprep.subr.mxu0 0.0
      %1298 = vmatpush1.msra.mxu0 0.0
      %1299 = vmatprep.subr.mxu0 0.0
      %1300 = vmatpush1.msra.mxu0 0.0
      %1301 = vmatprep.subr.mxu0 0.0
      %1302 = vmatpush1.msra.mxu0 0.0
      %1303 = vmatprep.subr.mxu0 0.0
      %1304 = vmatpush1.msra.mxu0 0.0
      %1305 = vmatprep.subr.mxu0 0.0
      %1306 = vmatpush1.msra.mxu0 0.0
      %1307 = vmatprep.subr.mxu0 0.0
      %1308 = vmatpush1.msra.mxu0 0.0
      %1309 = vmatprep.subr.mxu0 0.0
      %1310 = vmatpush1.msra.mxu0 0.0
      %1311 = vmatprep.subr.mxu0 0.0
      %1312 = vmatpush1.msra.mxu0 0.0
      %1313 = vmatprep.subr.mxu0 0.0
      %1314 = vmatpush1.msra.mxu0 0.0
      %1315 = vmatprep.subr.mxu0 0.0
      %1316 = vmatpush1.msra.mxu0 0.0
      %1317 = vmatprep.subr.mxu0 0.0
      %1318 = vmatpush1.msra.mxu0 0.0
      %1319 = vmatprep.subr.mxu0 0.0
      %1320 = vmatpush1.msra.mxu0 0.0
      %1321 = vmatprep.subr.mxu0 0.0
      %1322 = vmatpush1.msra.mxu0 0.0
      %1323 = vmatprep.subr.mxu0 0.0
      %1324 = vmatpush1.msra.mxu0 0.0
      %1325 = vmatprep.subr.mxu0 0.0
      %1326 = vmatpush1.msra.mxu0 0.0
      %1327 = vmatprep.subr.mxu0 0.0
      %1328 = vmatpush1.msra.mxu0 0.0
      %1329 = vmatprep.subr.mxu0 0.0
      %1330 = vmatpush1.msra.mxu0 0.0
      %1331 = vmatprep.subr.mxu0 0.0
      %1332 = vmatpush1.msra.mxu0 0.0
      %1333 = vmatprep.subr.mxu0 0.0
      %1334 = vmatpush1.msra.mxu0 0.0
      %1335 = vmatprep.subr.mxu0 0.0
      %1336 = vmatpush1.msra.mxu0 0.0
      %1337 = vmatprep.subr.mxu0 0.0
      %1338 = vmatpush1.msra.mxu0 0.0
      %1339 = vmatprep.subr.mxu0 0.0
      %1340 = vmatpush1.msra.mxu0 0.0
      %1341 = vmatprep.subr.mxu0 0.0
      %1342 = vmatpush1.msra.mxu0 0.0
      %1343 = vmatprep.subr.mxu0 0.0
      %1344 = vmatpush1.msra.mxu0 0.0
      %1345 = vmatprep.subr.mxu0 0.0
      %1346 = vmatpush1.msra.mxu0 0.0
      %1347 = vmatprep.subr.mxu0 0.0
      %1348 = vmatpush1.msra.mxu0 0.0
      %1349 = vmatprep.mubr.f32.mxu0 0.0
      %1350 = vmatmul.mubr.f32.gmra.mrb[0].mxu0 %v1280
      %v1351 = vpop.f32.mrb[0].mxu0
      %v1352 = vadd.f32 0.0, %v1351
      %v1353 = vpop.f32.mrb[0].mxu0
      %1354 = vmatprep.mubr.f32.mxu0 0.0
      %1355 = vmatmul.mubr.f32.gmra.mrb[0].mxu0 %v1283
      %v1356 = vpop.f32.mrb[0].mxu0
      %v1357 = vadd.f32 0.0, %v1356
      %v1358 = vpop.f32.mrb[0].mxu0
      %1359 = vdwg.mxu0
      %v1361 = vsel %vm861, %v1046, 0
      %v1364 = vsel %vm861, %v1047, 0
      %1366 = vmatprep.subr.mxu0 0.0
      %1367 = vmatpush1.msra.mxu0 %v832
      %1368 = vmatprep.subr.mxu0 0.0
      %1369 = vmatpush1.msra.mxu0 0.0
      %1370 = vmatprep.subr.mxu0 0.0
      %1371 = vmatpush1.msra.mxu0 0.0
      %1372 = vmatprep.subr.mxu0 0.0
      %1373 = vmatpush1.msra.mxu0 0.0
      %1374 = vmatprep.subr.mxu0 0.0
      %1375 = vmatpush1.msra.mxu0 0.0
      %1376 = vmatprep.subr.mxu0 0.0
      %1377 = vmatpush1.msra.mxu0 0.0
      %1378 = vmatprep.subr.mxu0 0.0
      %1379 = vmatpush1.msra.mxu0 0.0
      %1380 = vmatprep.subr.mxu0 0.0
      %1381 = vmatpush1.msra.mxu0 0.0
      %1382 = vmatprep.subr.mxu0 0.0
      %1383 = vmatpush1.msra.mxu0 0.0
      %1384 = vmatprep.subr.mxu0 0.0
      %1385 = vmatpush1.msra.mxu0 0.0
      %1386 = vmatprep.subr.mxu0 0.0
      %1387 = vmatpush1.msra.mxu0 0.0
      %1388 = vmatprep.subr.mxu0 0.0
      %1389 = vmatpush1.msra.mxu0 0.0
      %1390 = vmatprep.subr.mxu0 0.0
      %1391 = vmatpush1.msra.mxu0 0.0
      %1392 = vmatprep.subr.mxu0 0.0
      %1393 = vmatpush1.msra.mxu0 0.0
      %1394 = vmatprep.subr.mxu0 0.0
      %1395 = vmatpush1.msra.mxu0 0.0
      %1396 = vmatprep.subr.mxu0 0.0
      %1397 = vmatpush1.msra.mxu0 0.0
      %1398 = vmatprep.subr.mxu0 0.0
      %1399 = vmatpush1.msra.mxu0 0.0
      %1400 = vmatprep.subr.mxu0 0.0
      %1401 = vmatpush1.msra.mxu0 0.0
      %1402 = vmatprep.subr.mxu0 0.0
      %1403 = vmatpush1.msra.mxu0 0.0
      %1404 = vmatprep.subr.mxu0 0.0
      %1405 = vmatpush1.msra.mxu0 0.0
      %1406 = vmatprep.subr.mxu0 0.0
      %1407 = vmatpush1.msra.mxu0 0.0
      %1408 = vmatprep.subr.mxu0 0.0
      %1409 = vmatpush1.msra.mxu0 0.0
      %1410 = vmatprep.subr.mxu0 0.0
      %1411 = vmatpush1.msra.mxu0 0.0
      %1412 = vmatprep.subr.mxu0 0.0
      %1413 = vmatpush1.msra.mxu0 0.0
      %1414 = vmatprep.subr.mxu0 0.0
      %1415 = vmatpush1.msra.mxu0 0.0
      %1416 = vmatprep.subr.mxu0 0.0
      %1417 = vmatpush1.msra.mxu0 0.0
      %1418 = vmatprep.subr.mxu0 0.0
      %1419 = vmatpush1.msra.mxu0 0.0
      %1420 = vmatprep.subr.mxu0 0.0
      %1421 = vmatpush1.msra.mxu0 0.0
      %1422 = vmatprep.subr.mxu0 0.0
      %1423 = vmatpush1.msra.mxu0 0.0
      %1424 = vmatprep.subr.mxu0 0.0
      %1425 = vmatpush1.msra.mxu0 0.0
      %1426 = vmatprep.subr.mxu0 0.0
      %1427 = vmatpush1.msra.mxu0 0.0
      %1428 = vmatprep.subr.mxu0 0.0
      %1429 = vmatpush1.msra.mxu0 0.0
      %1430 = vmatprep.mubr.f32.mxu0 0.0
      %1431 = vmatmul.mubr.f32.gmra.mrb[0].mxu0 %v1361
      %v1432 = vpop.f32.mrb[0].mxu0
      %v1433 = vadd.f32 %v1352, %v1432
      %v1434 = vpop.f32.mrb[0].mxu0
      %1435 = vmatprep.mubr.f32.mxu0 0.0
      %1436 = vmatmul.mubr.f32.gmra.mrb[0].mxu0 %v1364
      %v1437 = vpop.f32.mrb[0].mxu0
      %v1438 = vadd.f32 %v1357, %v1437
      %v1439 = vpop.f32.mrb[0].mxu0
      %1440 = vdwg.mxu0
      %v1441 = vld [vmem:[%s10 + $0x8] sm:$0xff]
      %1442 = vmatprep.subr.mxu0 0.0
      %1443 = vmatpush1.msra.mxu0 %v1441
      %1444 = vmatprep.subr.mxu0 0.0
      %1445 = vmatpush1.msra.mxu0 0.0
      %1446 = vmatprep.subr.mxu0 0.0
      %1447 = vmatpush1.msra.mxu0 0.0
      %1448 = vmatprep.subr.mxu0 0.0
      %1449 = vmatpush1.msra.mxu0 0.0
      %1450 = vmatprep.subr.mxu0 0.0
      %1451 = vmatpush1.msra.mxu0 0.0
      %1452 = vmatprep.subr.mxu0 0.0
      %1453 = vmatpush1.msra.mxu0 0.0
      %1454 = vmatprep.subr.mxu0 0.0
      %1455 = vmatpush1.msra.mxu0 0.0
      %1456 = vmatprep.subr.mxu0 0.0
      %1457 = vmatpush1.msra.mxu0 0.0
      %1458 = vmatprep.subr.mxu0 0.0
      %1459 = vmatpush1.msra.mxu0 0.0
      %1460 = vmatprep.subr.mxu0 0.0
      %1461 = vmatpush1.msra.mxu0 0.0
      %1462 = vmatprep.subr.mxu0 0.0
      %1463 = vmatpush1.msra.mxu0 0.0
      %1464 = vmatprep.subr.mxu0 0.0
      %1465 = vmatpush1.msra.mxu0 0.0
      %1466 = vmatprep.subr.mxu0 0.0
      %1467 = vmatpush1.msra.mxu0 0.0
      %1468 = vmatprep.subr.mxu0 0.0
      %1469 = vmatpush1.msra.mxu0 0.0
      %1470 = vmatprep.subr.mxu0 0.0
      %1471 = vmatpush1.msra.mxu0 0.0
      %1472 = vmatprep.subr.mxu0 0.0
      %1473 = vmatpush1.msra.mxu0 0.0
      %1474 = vmatprep.subr.mxu0 0.0
      %1475 = vmatpush1.msra.mxu0 0.0
      %1476 = vmatprep.subr.mxu0 0.0
      %1477 = vmatpush1.msra.mxu0 0.0
      %1478 = vmatprep.subr.mxu0 0.0
      %1479 = vmatpush1.msra.mxu0 0.0
      %1480 = vmatprep.subr.mxu0 0.0
      %1481 = vmatpush1.msra.mxu0 0.0
      %1482 = vmatprep.subr.mxu0 0.0
      %1483 = vmatpush1.msra.mxu0 0.0
      %1484 = vmatprep.subr.mxu0 0.0
      %1485 = vmatpush1.msra.mxu0 0.0
      %1486 = vmatprep.subr.mxu0 0.0
      %1487 = vmatpush1.msra.mxu0 0.0
      %1488 = vmatprep.subr.mxu0 0.0
      %1489 = vmatpush1.msra.mxu0 0.0
      %1490 = vmatprep.subr.mxu0 0.0
      %1491 = vmatpush1.msra.mxu0 0.0
      %1492 = vmatprep.subr.mxu0 0.0
      %1493 = vmatpush1.msra.mxu0 0.0
      %1494 = vmatprep.subr.mxu0 0.0
      %1495 = vmatpush1.msra.mxu0 0.0
      %1496 = vmatprep.subr.mxu0 0.0
      %1497 = vmatpush1.msra.mxu0 0.0
      %1498 = vmatprep.subr.mxu0 0.0
      %1499 = vmatpush1.msra.mxu0 0.0
      %1500 = vmatprep.subr.mxu0 0.0
      %1501 = vmatpush1.msra.mxu0 0.0
      %1502 = vmatprep.subr.mxu0 0.0
      %1503 = vmatpush1.msra.mxu0 0.0
      %1504 = vmatprep.subr.mxu0 0.0
      %1505 = vmatpush1.msra.mxu0 0.0
      %1506 = vmatprep.mubr.f32.mxu0 0.0
      %1507 = vmatmul.mubr.f32.gmra.mrb[0].mxu0 %v1280
      %v1508 = vpop.f32.mrb[0].mxu0
      %v1509 = vadd.f32 0.0, %v1508
      %v1510 = vpop.f32.mrb[0].mxu0
      %1511 = vmatprep.mubr.f32.mxu0 0.0
      %1512 = vmatmul.mubr.f32.gmra.mrb[0].mxu0 %v1283
      %v1513 = vpop.f32.mrb[0].mxu0
      %v1514 = vadd.f32 0.0, %v1513
      %v1515 = vpop.f32.mrb[0].mxu0
      %1516 = vdwg.mxu0
      %1517 = vmatprep.subr.mxu0 0.0
      %1518 = vmatpush1.msra.mxu0 %v1048
      %1519 = vmatprep.subr.mxu0 0.0
      %1520 = vmatpush1.msra.mxu0 0.0
      %1521 = vmatprep.subr.mxu0 0.0
      %1522 = vmatpush1.msra.mxu0 0.0
      %1523 = vmatprep.subr.mxu0 0.0
      %1524 = vmatpush1.msra.mxu0 0.0
      %1525 = vmatprep.subr.mxu0 0.0
      %1526 = vmatpush1.msra.mxu0 0.0
      %1527 = vmatprep.subr.mxu0 0.0
      %1528 = vmatpush1.msra.mxu0 0.0
      %1529 = vmatprep.subr.mxu0 0.0
      %1530 = vmatpush1.msra.mxu0 0.0
      %1531 = vmatprep.subr.mxu0 0.0
      %1532 = vmatpush1.msra.mxu0 0.0
      %1533 = vmatprep.subr.mxu0 0.0
      %1534 = vmatpush1.msra.mxu0 0.0
      %1535 = vmatprep.subr.mxu0 0.0
      %1536 = vmatpush1.msra.mxu0 0.0
      %1537 = vmatprep.subr.mxu0 0.0
      %1538 = vmatpush1.msra.mxu0 0.0
      %1539 = vmatprep.subr.mxu0 0.0
      %1540 = vmatpush1.msra.mxu0 0.0
      %1541 = vmatprep.subr.mxu0 0.0
      %1542 = vmatpush1.msra.mxu0 0.0
      %1543 = vmatprep.subr.mxu0 0.0
      %1544 = vmatpush1.msra.mxu0 0.0
      %1545 = vmatprep.subr.mxu0 0.0
      %1546 = vmatpush1.msra.mxu0 0.0
      %1547 = vmatprep.subr.mxu0 0.0
      %1548 = vmatpush1.msra.mxu0 0.0
      %1549 = vmatprep.subr.mxu0 0.0
      %1550 = vmatpush1.msra.mxu0 0.0
      %1551 = vmatprep.subr.mxu0 0.0
      %1552 = vmatpush1.msra.mxu0 0.0
      %1553 = vmatprep.subr.mxu0 0.0
      %1554 = vmatpush1.msra.mxu0 0.0
      %1555 = vmatprep.subr.mxu0 0.0
      %1556 = vmatpush1.msra.mxu0 0.0
      %1557 = vmatprep.subr.mxu0 0.0
      %1558 = vmatpush1.msra.mxu0 0.0
      %1559 = vmatprep.subr.mxu0 0.0
      %1560 = vmatpush1.msra.mxu0 0.0
      %1561 = vmatprep.subr.mxu0 0.0
      %1562 = vmatpush1.msra.mxu0 0.0
      %1563 = vmatprep.subr.mxu0 0.0
      %1564 = vmatpush1.msra.mxu0 0.0
      %1565 = vmatprep.subr.mxu0 0.0
      %1566 = vmatpush1.msra.mxu0 0.0
      %1567 = vmatprep.subr.mxu0 0.0
      %1568 = vmatpush1.msra.mxu0 0.0
      %1569 = vmatprep.subr.mxu0 0.0
      %1570 = vmatpush1.msra.mxu0 0.0
      %1571 = vmatprep.subr.mxu0 0.0
      %1572 = vmatpush1.msra.mxu0 0.0
      %1573 = vmatprep.subr.mxu0 0.0
      %1574 = vmatpush1.msra.mxu0 0.0
      %1575 = vmatprep.subr.mxu0 0.0
      %1576 = vmatpush1.msra.mxu0 0.0
      %1577 = vmatprep.subr.mxu0 0.0
      %1578 = vmatpush1.msra.mxu0 0.0
      %1579 = vmatprep.subr.mxu0 0.0
      %1580 = vmatpush1.msra.mxu0 0.0
      %1581 = vmatprep.mubr.f32.mxu0 0.0
      %1582 = vmatmul.mubr.f32.gmra.mrb[0].mxu0 %v1361
      %v1583 = vpop.f32.mrb[0].mxu0
      %v1584 = vadd.f32 %v1509, %v1583
      %v1585 = vpop.f32.mrb[0].mxu0
      %1586 = vmatprep.mubr.f32.mxu0 0.0
      %1587 = vmatmul.mubr.f32.gmra.mrb[0].mxu0 %v1364
      %v1588 = vpop.f32.mrb[0].mxu0
      %v1589 = vadd.f32 %v1514, %v1588
      %v1590 = vpop.f32.mrb[0].mxu0
      %1591 = vdwg.mxu0
      %v1592 = vld [vmem:[%s8] sm:$0xff]
      %v1594 = vsel %vm861, %v1433, 0
      %v1597 = vsel %vm861, %v1438, 0
      %1599 = vmatprep.subr.mxu0 0.0
      %1600 = vmatpush1.msra.mxu0 %v1592
      %1601 = vmatprep.subr.mxu0 0.0
      %1602 = vmatpush1.msra.mxu0 0.0
      %1603 = vmatprep.subr.mxu0 0.0
      %1604 = vmatpush1.msra.mxu0 0.0
      %1605 = vmatprep.subr.mxu0 0.0
      %1606 = vmatpush1.msra.mxu0 0.0
      %1607 = vmatprep.subr.mxu0 0.0
      %1608 = vmatpush1.msra.mxu0 0.0
      %1609 = vmatprep.subr.mxu0 0.0
      %1610 = vmatpush1.msra.mxu0 0.0
      %1611 = vmatprep.subr.mxu0 0.0
      %1612 = vmatpush1.msra.mxu0 0.0
      %1613 = vmatprep.subr.mxu0 0.0
      %1614 = vmatpush1.msra.mxu0 0.0
      %1615 = vmatprep.subr.mxu0 0.0
      %1616 = vmatpush1.msra.mxu0 0.0
      %1617 = vmatprep.subr.mxu0 0.0
      %1618 = vmatpush1.msra.mxu0 0.0
      %1619 = vmatprep.subr.mxu0 0.0
      %1620 = vmatpush1.msra.mxu0 0.0
      %1621 = vmatprep.subr.mxu0 0.0
      %1622 = vmatpush1.msra.mxu0 0.0
      %1623 = vmatprep.subr.mxu0 0.0
      %1624 = vmatpush1.msra.mxu0 0.0
      %1625 = vmatprep.subr.mxu0 0.0
      %1626 = vmatpush1.msra.mxu0 0.0
      %1627 = vmatprep.subr.mxu0 0.0
      %1628 = vmatpush1.msra.mxu0 0.0
      %1629 = vmatprep.subr.mxu0 0.0
      %1630 = vmatpush1.msra.mxu0 0.0
      %1631 = vmatprep.subr.mxu0 0.0
      %1632 = vmatpush1.msra.mxu0 0.0
      %1633 = vmatprep.subr.mxu0 0.0
      %1634 = vmatpush1.msra.mxu0 0.0
      %1635 = vmatprep.subr.mxu0 0.0
      %1636 = vmatpush1.msra.mxu0 0.0
      %1637 = vmatprep.subr.mxu0 0.0
      %1638 = vmatpush1.msra.mxu0 0.0
      %1639 = vmatprep.subr.mxu0 0.0
      %1640 = vmatpush1.msra.mxu0 0.0
      %1641 = vmatprep.subr.mxu0 0.0
      %1642 = vmatpush1.msra.mxu0 0.0
      %1643 = vmatprep.subr.mxu0 0.0
      %1644 = vmatpush1.msra.mxu0 0.0
      %1645 = vmatprep.subr.mxu0 0.0
      %1646 = vmatpush1.msra.mxu0 0.0
      %1647 = vmatprep.subr.mxu0 0.0
      %1648 = vmatpush1.msra.mxu0 0.0
      %1649 = vmatprep.subr.mxu0 0.0
      %1650 = vmatpush1.msra.mxu0 0.0
      %1651 = vmatprep.subr.mxu0 0.0
      %1652 = vmatpush1.msra.mxu0 0.0
      %1653 = vmatprep.subr.mxu0 0.0
      %1654 = vmatpush1.msra.mxu0 0.0
      %1655 = vmatprep.subr.mxu0 0.0
      %1656 = vmatpush1.msra.mxu0 0.0
      %1657 = vmatprep.subr.mxu0 0.0
      %1658 = vmatpush1.msra.mxu0 0.0
      %1659 = vmatprep.subr.mxu0 0.0
      %1660 = vmatpush1.msra.mxu0 0.0
      %1661 = vmatprep.subr.mxu0 0.0
      %1662 = vmatpush1.msra.mxu0 0.0
      %1663 = vmatprep.mubr.f32.mxu0 0.0
      %1664 = vmatmul.mubr.f32.gmra.mrb[0].mxu0 %v1594
      %v1665 = vpop.f32.mrb[0].mxu0
      %v1666 = vadd.f32 0.0, %v1665
      %v1667 = vpop.f32.mrb[0].mxu0
      %1668 = vmatprep.mubr.f32.mxu0 0.0
      %1669 = vmatmul.mubr.f32.gmra.mrb[0].mxu0 %v1597
      %v1670 = vpop.f32.mrb[0].mxu0
      %v1671 = vadd.f32 0.0, %v1670
      %v1672 = vpop.f32.mrb[0].mxu0
      %1673 = vdwg.mxu0
      %1676 = vrot.lane.b32.xlu0 %v1666, 127
      %v1677 = vpop.permute.xlu0 %1676
      %1678 = vrot.lane.b32.xlu0 %v1671, 127
      %v1679 = vpop.permute.xlu0 %1678
      %1682 = vxpose.xlu0.b32.start [1/16] %v1677, 128
      %1683 = vxpose.xlu0.b32.cont [2/16] 0.0, 128
      %1684 = vxpose.xlu0.b32.cont [3/16] 0.0, 128
      %1685 = vxpose.xlu0.b32.cont [4/16] 0.0, 128
      %1686 = vxpose.xlu0.b32.cont [5/16] 0.0, 128
      %1687 = vxpose.xlu0.b32.cont [6/16] 0.0, 128
      %1688 = vxpose.xlu0.b32.cont [7/16] 0.0, 128
      %1689 = vxpose.xlu0.b32.cont [8/16] 0.0, 128
      %1690 = vxpose.xlu0.b32.cont [9/16] 0.0, 128
      %1691 = vxpose.xlu0.b32.cont [10/16] 0.0, 128
      %1692 = vxpose.xlu0.b32.cont [11/16] 0.0, 128
      %1693 = vxpose.xlu0.b32.cont [12/16] 0.0, 128
      %1694 = vxpose.xlu0.b32.cont [13/16] 0.0, 128
      %1695 = vxpose.xlu0.b32.cont [14/16] 0.0, 128
      %1696 = vxpose.xlu0.b32.cont [15/16] 0.0, 128
      %1697 = vxpose.xlu0.b32.end [16/16] 0.0, 128
      %v1698 = vpop.trf.xlu0
      %v1699 = vpop.trf.xlu0
      %v1700 = vpop.trf.xlu0
      %v1701 = vpop.trf.xlu0
      %v1702 = vpop.trf.xlu0
      %v1703 = vpop.trf.xlu0
      %v1704 = vpop.trf.xlu0
      %v1705 = vpop.trf.xlu0
      %v1706 = vpop.trf.xlu0
      %v1707 = vpop.trf.xlu0
      %v1708 = vpop.trf.xlu0
      %v1709 = vpop.trf.xlu0
      %v1710 = vpop.trf.xlu0
      %v1711 = vpop.trf.xlu0
      %v1712 = vpop.trf.xlu0
      %v1713 = vpop.trf.xlu0
      %1714 = vxpose.xlu0.b32.start [1/16] %v1679, 128
      %1715 = vxpose.xlu0.b32.cont [2/16] 0.0, 128
      %1716 = vxpose.xlu0.b32.cont [3/16] 0.0, 128
      %1717 = vxpose.xlu0.b32.cont [4/16] 0.0, 128
      %1718 = vxpose.xlu0.b32.cont [5/16] 0.0, 128
      %1719 = vxpose.xlu0.b32.cont [6/16] 0.0, 128
      %1720 = vxpose.xlu0.b32.cont [7/16] 0.0, 128
      %1721 = vxpose.xlu0.b32.cont [8/16] 0.0, 128
      %1722 = vxpose.xlu0.b32.cont [9/16] 0.0, 128
      %1723 = vxpose.xlu0.b32.cont [10/16] 0.0, 128
      %1724 = vxpose.xlu0.b32.cont [11/16] 0.0, 128
      %1725 = vxpose.xlu0.b32.cont [12/16] 0.0, 128
      %1726 = vxpose.xlu0.b32.cont [13/16] 0.0, 128
      %1727 = vxpose.xlu0.b32.cont [14/16] 0.0, 128
      %1728 = vxpose.xlu0.b32.cont [15/16] 0.0, 128
      %1729 = vxpose.xlu0.b32.end [16/16] 0.0, 128
      %v1730 = vpop.trf.xlu0
      %v1731 = vpop.trf.xlu0
      %v1732 = vpop.trf.xlu0
      %v1733 = vpop.trf.xlu0
      %v1734 = vpop.trf.xlu0
      %v1735 = vpop.trf.xlu0
      %v1736 = vpop.trf.xlu0
      %v1737 = vpop.trf.xlu0
      %v1738 = vpop.trf.xlu0
      %v1739 = vpop.trf.xlu0
      %v1740 = vpop.trf.xlu0
      %v1741 = vpop.trf.xlu0
      %v1742 = vpop.trf.xlu0
      %v1743 = vpop.trf.xlu0
      %v1744 = vpop.trf.xlu0
      %v1745 = vpop.trf.xlu0
      %1746 = vset.pattern.permute.xlu0 0
      %1747 = vperm.xlu0 %1746, %v1666
      %v1748 = vpop.permute.xlu0 %1747
      %1750 = vset.pattern.permute.xlu0 0
      %1751 = vperm.xlu0 %1750, %v1671
      %v1752 = vpop.permute.xlu0 %1751
      %v1754 = vlaneseq
      %v1755 = vshrl.u32 %v1754, 7
      %v1756 = vsub.s32 0, %v1755
      %v1757 = vrot.slane %v1698, %v1756
      %v1758 = vlaneseq
      %v1759 = vshrl.u32 %v1758, 7
      %v1760 = vsub.s32 0, %v1759
      %v1761 = vrot.slane %v1730, %v1760
      %v1762 = vadd.f32 %v1748, %v1757
      %v1763 = vadd.f32 %v1752, %v1761
      %vm1764 = vcmp.gt.f32.partialorder %v1762, 0.0
      %vm1765 = vcmp.gt.f32.partialorder %v1763, 0.0
      %v1766 = vmul.f32 %v1762, 0.2
      %v1767 = vmul.f32 %v1763, 0.2
      %v1768 = vsel %vm1764, %v1762, %v1766
      %v1769 = vsel %vm1765, %v1763, %v1767
      %v1770 = vmul.f32 %v500, %v1768
      %v1771 = vmul.f32 %v500, %v1769
      %v1772 = vsel %vm861, %v1770, -inf
      %v1773 = vrot.slane %v1772, 4
      %v1774 = vmax.f32 %v1772, %v1773
      %v1775 = vrot.slane %v1774, 2
      %v1776 = vmax.f32 %v1774, %v1775
      %v1777 = vrot.slane %v1776, 1
      %v1778 = vmax.f32 %v1776, %v1777
      %v1779 = vsel %vm861, %v1771, -inf
      %v1780 = vrot.slane %v1779, 4
      %v1781 = vmax.f32 %v1779, %v1780
      %v1782 = vrot.slane %v1781, 2
      %v1783 = vmax.f32 %v1781, %v1782
      %v1784 = vrot.slane %v1783, 1
      %v1785 = vmax.f32 %v1783, %v1784
      %v1786 = vsub.f32 %v1770, %v1778
      %v1787 = vsub.f32 %v1771, %v1785
      %v1788 = vmul.f32 %v1786, 1.442695
      %v1789 = vpow.pop %v1788
      %v1790 = vmul.f32 %v1787, 1.442695
      %v1791 = vpow.pop %v1790
      %v1792 = vsel %vm861, %v1789, 0.0
      %v1793 = vrot.slane %v1792, 4
      %v1794 = vadd.f32 %v1792, %v1793
      %v1795 = vrot.slane %v1794, 2
      %v1796 = vadd.f32 %v1794, %v1795
      %v1797 = vrot.slane %v1796, 1
      %v1798 = vadd.f32 %v1796, %v1797
      %v1799 = vsel %vm861, %v1791, 0.0
      %v1800 = vrot.slane %v1799, 4
      %v1801 = vadd.f32 %v1799, %v1800
      %v1802 = vrot.slane %v1801, 2
      %v1803 = vadd.f32 %v1801, %v1802
      %v1804 = vrot.slane %v1803, 1
      %v1805 = vadd.f32 %v1803, %v1804
      %v1806 = vrcp.pop %v1798
      %v1807 = vmul.f32 %v1789, %v1806
      %v1808 = vrcp.pop %v1805
      %v1809 = vmul.f32 %v1791, %v1808
      %v1810 = vld [vmem:[%s9] sm:$0xff]
      %v1812 = vsel %vm861, %v1807, 0
      %1814 = vmatprep.subr.mxu0 0.0
      %1815 = vmatpush1.msra.mxu0 %v1433
      %1816 = vmatprep.subr.mxu0 0.0
      %1817 = vmatpush1.msra.mxu0 0.0
      %1818 = vmatprep.subr.mxu0 0.0
      %1819 = vmatpush1.msra.mxu0 0.0
      %1820 = vmatprep.subr.mxu0 0.0
      %1821 = vmatpush1.msra.mxu0 0.0
      %1822 = vmatprep.subr.mxu0 0.0
      %1823 = vmatpush1.msra.mxu0 0.0
      %1824 = vmatprep.subr.mxu0 0.0
      %1825 = vmatpush1.msra.mxu0 0.0
      %1826 = vmatprep.subr.mxu0 0.0
      %1827 = vmatpush1.msra.mxu0 0.0
      %1828 = vmatprep.subr.mxu0 0.0
      %1829 = vmatpush1.msra.mxu0 0.0
      %1830 = vmatprep.subr.mxu0 0.0
      %1831 = vmatpush1.msra.mxu0 0.0
      %1832 = vmatprep.subr.mxu0 0.0
      %1833 = vmatpush1.msra.mxu0 0.0
      %1834 = vmatprep.subr.mxu0 0.0
      %1835 = vmatpush1.msra.mxu0 0.0
      %1836 = vmatprep.subr.mxu0 0.0
      %1837 = vmatpush1.msra.mxu0 0.0
      %1838 = vmatprep.subr.mxu0 0.0
      %1839 = vmatpush1.msra.mxu0 0.0
      %1840 = vmatprep.subr.mxu0 0.0
      %1841 = vmatpush1.msra.mxu0 0.0
      %1842 = vmatprep.subr.mxu0 0.0
      %1843 = vmatpush1.msra.mxu0 0.0
      %1844 = vmatprep.subr.mxu0 0.0
      %1845 = vmatpush1.msra.mxu0 0.0
      %1846 = vmatprep.subr.mxu0 0.0
      %1847 = vmatpush1.msra.mxu0 0.0
      %1848 = vmatprep.subr.mxu0 0.0
      %1849 = vmatpush1.msra.mxu0 0.0
      %1850 = vmatprep.subr.mxu0 0.0
      %1851 = vmatpush1.msra.mxu0 0.0
      %1852 = vmatprep.subr.mxu0 0.0
      %1853 = vmatpush1.msra.mxu0 0.0
      %1854 = vmatprep.subr.mxu0 0.0
      %1855 = vmatpush1.msra.mxu0 0.0
      %1856 = vmatprep.subr.mxu0 0.0
      %1857 = vmatpush1.msra.mxu0 0.0
      %1858 = vmatprep.subr.mxu0 0.0
      %1859 = vmatpush1.msra.mxu0 0.0
      %1860 = vmatprep.subr.mxu0 0.0
      %1861 = vmatpush1.msra.mxu0 0.0
      %1862 = vmatprep.subr.mxu0 0.0
      %1863 = vmatpush1.msra.mxu0 0.0
      %1864 = vmatprep.subr.mxu0 0.0
      %1865 = vmatpush1.msra.mxu0 0.0
      %1866 = vmatprep.subr.mxu0 0.0
      %1867 = vmatpush1.msra.mxu0 0.0
      %1868 = vmatprep.subr.mxu0 0.0
      %1869 = vmatpush1.msra.mxu0 0.0
      %1870 = vmatprep.subr.mxu0 0.0
      %1871 = vmatpush1.msra.mxu0 0.0
      %1872 = vmatprep.subr.mxu0 0.0
      %1873 = vmatpush1.msra.mxu0 0.0
      %1874 = vmatprep.subr.mxu0 0.0
      %1875 = vmatpush1.msra.mxu0 0.0
      %1876 = vmatprep.subr.mxu0 0.0
      %1877 = vmatpush1.msra.mxu0 0.0
      %1878 = vmatprep.mubr.f32.mxu0 0.0
      %1879 = vmatmul.mubr.f32.gmra.mrb[0].mxu0 %v1812
      %v1880 = vpop.f32.mrb[0].mxu0
      %v1881 = vadd.f32 %v1810, %v1880
      %v1882 = vpop.f32.mrb[0].mxu0
      %1883 = vdwg.mxu0
      %v1885 = vsel %vm861, %v1809, 0
      %1887 = vmatprep.subr.mxu0 0.0
      %1888 = vmatpush1.msra.mxu0 %v1438
      %1889 = vmatprep.subr.mxu0 0.0
      %1890 = vmatpush1.msra.mxu0 0.0
      %1891 = vmatprep.subr.mxu0 0.0
      %1892 = vmatpush1.msra.mxu0 0.0
      %1893 = vmatprep.subr.mxu0 0.0
      %1894 = vmatpush1.msra.mxu0 0.0
      %1895 = vmatprep.subr.mxu0 0.0
      %1896 = vmatpush1.msra.mxu0 0.0
      %1897 = vmatprep.subr.mxu0 0.0
      %1898 = vmatpush1.msra.mxu0 0.0
      %1899 = vmatprep.subr.mxu0 0.0
      %1900 = vmatpush1.msra.mxu0 0.0
      %1901 = vmatprep.subr.mxu0 0.0
      %1902 = vmatpush1.msra.mxu0 0.0
      %1903 = vmatprep.subr.mxu0 0.0
      %1904 = vmatpush1.msra.mxu0 0.0
      %1905 = vmatprep.subr.mxu0 0.0
      %1906 = vmatpush1.msra.mxu0 0.0
      %1907 = vmatprep.subr.mxu0 0.0
      %1908 = vmatpush1.msra.mxu0 0.0
      %1909 = vmatprep.subr.mxu0 0.0
      %1910 = vmatpush1.msra.mxu0 0.0
      %1911 = vmatprep.subr.mxu0 0.0
      %1912 = vmatpush1.msra.mxu0 0.0
      %1913 = vmatprep.subr.mxu0 0.0
      %1914 = vmatpush1.msra.mxu0 0.0
      %1915 = vmatprep.subr.mxu0 0.0
      %1916 = vmatpush1.msra.mxu0 0.0
      %1917 = vmatprep.subr.mxu0 0.0
      %1918 = vmatpush1.msra.mxu0 0.0
      %1919 = vmatprep.subr.mxu0 0.0
      %1920 = vmatpush1.msra.mxu0 0.0
      %1921 = vmatprep.subr.mxu0 0.0
      %1922 = vmatpush1.msra.mxu0 0.0
      %1923 = vmatprep.subr.mxu0 0.0
      %1924 = vmatpush1.msra.mxu0 0.0
      %1925 = vmatprep.subr.mxu0 0.0
      %1926 = vmatpush1.msra.mxu0 0.0
      %1927 = vmatprep.subr.mxu0 0.0
      %1928 = vmatpush1.msra.mxu0 0.0
      %1929 = vmatprep.subr.mxu0 0.0
      %1930 = vmatpush1.msra.mxu0 0.0
      %1931 = vmatprep.subr.mxu0 0.0
      %1932 = vmatpush1.msra.mxu0 0.0
      %1933 = vmatprep.subr.mxu0 0.0
      %1934 = vmatpush1.msra.mxu0 0.0
      %1935 = vmatprep.subr.mxu0 0.0
      %1936 = vmatpush1.msra.mxu0 0.0
      %1937 = vmatprep.subr.mxu0 0.0
      %1938 = vmatpush1.msra.mxu0 0.0
      %1939 = vmatprep.subr.mxu0 0.0
      %1940 = vmatpush1.msra.mxu0 0.0
      %1941 = vmatprep.subr.mxu0 0.0
      %1942 = vmatpush1.msra.mxu0 0.0
      %1943 = vmatprep.subr.mxu0 0.0
      %1944 = vmatpush1.msra.mxu0 0.0
      %1945 = vmatprep.subr.mxu0 0.0
      %1946 = vmatpush1.msra.mxu0 0.0
      %1947 = vmatprep.subr.mxu0 0.0
      %1948 = vmatpush1.msra.mxu0 0.0
      %1949 = vmatprep.subr.mxu0 0.0
      %1950 = vmatpush1.msra.mxu0 0.0
      %1951 = vmatprep.mubr.f32.mxu0 0.0
      %1952 = vmatmul.mubr.f32.gmra.mrb[0].mxu0 %v1885
      %v1953 = vpop.f32.mrb[0].mxu0
      %v1954 = vadd.f32 %v1810, %v1953
      %v1955 = vpop.f32.mrb[0].mxu0
      %1956 = vdwg.mxu0
      %v1957 = vadd.f32 %v1881, %v1584
      %v1958 = vadd.f32 %v1954, %v1589
      %v1959 = vld [vmem:[%s11] sm:$0x1]
      %v1961 = vlaneseq
      %v1962 = vshrl.u32 %v1961, 7
      %v1963 = vsub.s32 0, %v1962
      %v1964 = vrot.slane %v1959, %v1963
      %v1966 = vadd.f32 %v1957, %v1964
      %v1967 = vadd.f32 %v1958, %v1964
      %vm1968 = vcmp.gt.f32.partialorder %v1966, 0.0
      %vm1969 = vcmp.gt.f32.partialorder %v1967, 0.0
      %v1970 = vmin.f32 %v1966, 0.0
      %v1971 = vmin.f32 %v1967, 0.0
      %v1972 = vmul.f32 %v1970, 1.442695
      %v1973 = vpow.pop %v1972
      %v1974 = vmul.f32 %v1971, 1.442695
      %v1975 = vpow.pop %v1974
      %v1976 = vsub.f32 %v1973, 1.0
      %v1977 = vsub.f32 %v1975, 1.0
      %v1978 = vsel %vm1968, %v1966, %v1976
      %v1979 = vsel %vm1969, %v1967, %v1977
      %s1980 = scalar_lea.vmem %s1, 8
      %v1981 = vld [vmem:[%s1980] sm:$0xff]
      %s1982 = scalar_lea.vmem %s2, 4
      %v1983 = vld [vmem:[%s1982] sm:$0xf]
      %v1985 = vsel %vm509, %v1983, 0
      %1987 = vmatprep.subr.mxu0 0.0
      %1988 = vmatpush1.msra.mxu0 %v1985
      %1989 = vmatprep.subr.mxu0 0.0
      %1990 = vmatpush1.msra.mxu0 0.0
      %1991 = vmatprep.subr.mxu0 0.0
      %1992 = vmatpush1.msra.mxu0 0.0
      %1993 = vmatprep.subr.mxu0 0.0
      %1994 = vmatpush1.msra.mxu0 0.0
      %1995 = vmatprep.subr.mxu0 0.0
      %1996 = vmatpush1.msra.mxu0 0.0
      %1997 = vmatprep.subr.mxu0 0.0
      %1998 = vmatpush1.msra.mxu0 0.0
      %1999 = vmatprep.subr.mxu0 0.0
      %2000 = vmatpush1.msra.mxu0 0.0
      %2001 = vmatprep.subr.mxu0 0.0
      %2002 = vmatpush1.msra.mxu0 0.0
      %2003 = vmatprep.subr.mxu0 0.0
      %2004 = vmatpush1.msra.mxu0 0.0
      %2005 = vmatprep.subr.mxu0 0.0
      %2006 = vmatpush1.msra.mxu0 0.0
      %2007 = vmatprep.subr.mxu0 0.0
      %2008 = vmatpush1.msra.mxu0 0.0
      %2009 = vmatprep.subr.mxu0 0.0
      %2010 = vmatpush1.msra.mxu0 0.0
      %2011 = vmatprep.subr.mxu0 0.0
      %2012 = vmatpush1.msra.mxu0 0.0
      %2013 = vmatprep.subr.mxu0 0.0
      %2014 = vmatpush1.msra.mxu0 0.0
      %2015 = vmatprep.subr.mxu0 0.0
      %2016 = vmatpush1.msra.mxu0 0.0
      %2017 = vmatprep.subr.mxu0 0.0
      %2018 = vmatpush1.msra.mxu0 0.0
      %2019 = vmatprep.subr.mxu0 0.0
      %2020 = vmatpush1.msra.mxu0 0.0
      %2021 = vmatprep.subr.mxu0 0.0
      %2022 = vmatpush1.msra.mxu0 0.0
      %2023 = vmatprep.subr.mxu0 0.0
      %2024 = vmatpush1.msra.mxu0 0.0
      %2025 = vmatprep.subr.mxu0 0.0
      %2026 = vmatpush1.msra.mxu0 0.0
      %2027 = vmatprep.subr.mxu0 0.0
      %2028 = vmatpush1.msra.mxu0 0.0
      %2029 = vmatprep.subr.mxu0 0.0
      %2030 = vmatpush1.msra.mxu0 0.0
      %2031 = vmatprep.subr.mxu0 0.0
      %2032 = vmatpush1.msra.mxu0 0.0
      %2033 = vmatprep.subr.mxu0 0.0
      %2034 = vmatpush1.msra.mxu0 0.0
      %2035 = vmatprep.subr.mxu0 0.0
      %2036 = vmatpush1.msra.mxu0 0.0
      %2037 = vmatprep.subr.mxu0 0.0
      %2038 = vmatpush1.msra.mxu0 0.0
      %2039 = vmatprep.subr.mxu0 0.0
      %2040 = vmatpush1.msra.mxu0 0.0
      %2041 = vmatprep.subr.mxu0 0.0
      %2042 = vmatpush1.msra.mxu0 0.0
      %2043 = vmatprep.subr.mxu0 0.0
      %2044 = vmatpush1.msra.mxu0 0.0
      %2045 = vmatprep.subr.mxu0 0.0
      %2046 = vmatpush1.msra.mxu0 0.0
      %2047 = vmatprep.subr.mxu0 0.0
      %2048 = vmatpush1.msra.mxu0 0.0
      %2049 = vmatprep.subr.mxu0 0.0
      %2050 = vmatpush1.msra.mxu0 0.0
      %2051 = vmatprep.mubr.f32.mxu0 0.0
      %2052 = vmatmul.mubr.f32.gmra.mrb[0].mxu0 %v504
      %v2053 = vpop.f32.mrb[0].mxu0
      %v2054 = vadd.f32 0.0, %v2053
      %v2055 = vpop.f32.mrb[0].mxu0
      %2056 = vmatprep.mubr.f32.mxu0 0.0
      %2057 = vmatmul.mubr.f32.gmra.mrb[0].mxu0 %v507
      %v2058 = vpop.f32.mrb[0].mxu0
      %v2059 = vadd.f32 0.0, %v2058
      %v2060 = vpop.f32.mrb[0].mxu0
      %2061 = vdwg.mxu0
      %s2062 = scalar_lea.vmem %s3, 16
      %v2063 = vld [vmem:[%s2062] sm:$0xff]
      %v2064 = vld [vmem:[%s2062 + $0x8] sm:$0xff]
      %v2066 = vsel %vm590, %v2054, 0
      %v2069 = vsel %vm590, %v2059, 0
      %2071 = vmatprep.subr.mxu0 0.0
      %2072 = vmatpush1.msra.mxu0 %v2063
      %2073 = vmatprep.subr.mxu0 0.0
      %2074 = vmatpush1.msra.mxu0 %v2064
      %2075 = vmatprep.subr.mxu0 0.0
      %2076 = vmatpush1.msra.mxu0 0.0
      %2077 = vmatprep.subr.mxu0 0.0
      %2078 = vmatpush1.msra.mxu0 0.0
      %2079 = vmatprep.subr.mxu0 0.0
      %2080 = vmatpush1.msra.mxu0 0.0
      %2081 = vmatprep.subr.mxu0 0.0
      %2082 = vmatpush1.msra.mxu0 0.0
      %2083 = vmatprep.subr.mxu0 0.0
      %2084 = vmatpush1.msra.mxu0 0.0
      %2085 = vmatprep.subr.mxu0 0.0
      %2086 = vmatpush1.msra.mxu0 0.0
      %2087 = vmatprep.subr.mxu0 0.0
      %2088 = vmatpush1.msra.mxu0 0.0
      %2089 = vmatprep.subr.mxu0 0.0
      %2090 = vmatpush1.msra.mxu0 0.0
      %2091 = vmatprep.subr.mxu0 0.0
      %2092 = vmatpush1.msra.mxu0 0.0
      %2093 = vmatprep.subr.mxu0 0.0
      %2094 = vmatpush1.msra.mxu0 0.0
      %2095 = vmatprep.subr.mxu0 0.0
      %2096 = vmatpush1.msra.mxu0 0.0
      %2097 = vmatprep.subr.mxu0 0.0
      %2098 = vmatpush1.msra.mxu0 0.0
      %2099 = vmatprep.subr.mxu0 0.0
      %2100 = vmatpush1.msra.mxu0 0.0
      %2101 = vmatprep.subr.mxu0 0.0
      %2102 = vmatpush1.msra.mxu0 0.0
      %2103 = vmatprep.subr.mxu0 0.0
      %2104 = vmatpush1.msra.mxu0 0.0
      %2105 = vmatprep.subr.mxu0 0.0
      %2106 = vmatpush1.msra.mxu0 0.0
      %2107 = vmatprep.subr.mxu0 0.0
      %2108 = vmatpush1.msra.mxu0 0.0
      %2109 = vmatprep.subr.mxu0 0.0
      %2110 = vmatpush1.msra.mxu0 0.0
      %2111 = vmatprep.subr.mxu0 0.0
      %2112 = vmatpush1.msra.mxu0 0.0
      %2113 = vmatprep.subr.mxu0 0.0
      %2114 = vmatpush1.msra.mxu0 0.0
      %2115 = vmatprep.subr.mxu0 0.0
      %2116 = vmatpush1.msra.mxu0 0.0
      %2117 = vmatprep.subr.mxu0 0.0
      %2118 = vmatpush1.msra.mxu0 0.0
      %2119 = vmatprep.subr.mxu0 0.0
      %2120 = vmatpush1.msra.mxu0 0.0
      %2121 = vmatprep.subr.mxu0 0.0
      %2122 = vmatpush1.msra.mxu0 0.0
      %2123 = vmatprep.subr.mxu0 0.0
      %2124 = vmatpush1.msra.mxu0 0.0
      %2125 = vmatprep.subr.mxu0 0.0
      %2126 = vmatpush1.msra.mxu0 0.0
      %2127 = vmatprep.subr.mxu0 0.0
      %2128 = vmatpush1.msra.mxu0 0.0
      %2129 = vmatprep.subr.mxu0 0.0
      %2130 = vmatpush1.msra.mxu0 0.0
      %2131 = vmatprep.subr.mxu0 0.0
      %2132 = vmatpush1.msra.mxu0 0.0
      %2133 = vmatprep.subr.mxu0 0.0
      %2134 = vmatpush1.msra.mxu0 0.0
      %2135 = vmatprep.mubr.f32.mxu0 0.0
      %2136 = vmatmul.mubr.f32.gmra.mrb[0].mxu0 %v2066
      %v2137 = vpop.f32.mrb[0].mxu0
      %v2138 = vadd.f32 0.0, %v2137
      %v2139 = vpop.f32.mrb[0].mxu0
      %2140 = vmatprep.mubr.f32.mxu0 0.0
      %2141 = vmatmul.mubr.f32.gmra.mrb[0].mxu0 %v2069
      %v2142 = vpop.f32.mrb[0].mxu0
      %v2143 = vadd.f32 0.0, %v2142
      %v2144 = vpop.f32.mrb[0].mxu0
      %2145 = vdwg.mxu0
      %2148 = vrot.lane.b32.xlu0 %v2138, 126
      %v2149 = vpop.permute.xlu0 %2148
      %2150 = vrot.lane.b32.xlu0 %v2143, 126
      %v2151 = vpop.permute.xlu0 %2150
      %2154 = vxpose.xlu0.b32.start [1/16] %v2149, 128
      %2155 = vxpose.xlu0.b32.cont [2/16] 0.0, 128
      %2156 = vxpose.xlu0.b32.cont [3/16] 0.0, 128
      %2157 = vxpose.xlu0.b32.cont [4/16] 0.0, 128
      %2158 = vxpose.xlu0.b32.cont [5/16] 0.0, 128
      %2159 = vxpose.xlu0.b32.cont [6/16] 0.0, 128
      %2160 = vxpose.xlu0.b32.cont [7/16] 0.0, 128
      %2161 = vxpose.xlu0.b32.cont [8/16] 0.0, 128
      %2162 = vxpose.xlu0.b32.cont [9/16] 0.0, 128
      %2163 = vxpose.xlu0.b32.cont [10/16] 0.0, 128
      %2164 = vxpose.xlu0.b32.cont [11/16] 0.0, 128
      %2165 = vxpose.xlu0.b32.cont [12/16] 0.0, 128
      %2166 = vxpose.xlu0.b32.cont [13/16] 0.0, 128
      %2167 = vxpose.xlu0.b32.cont [14/16] 0.0, 128
      %2168 = vxpose.xlu0.b32.cont [15/16] 0.0, 128
      %2169 = vxpose.xlu0.b32.end [16/16] 0.0, 128
      %v2170 = vpop.trf.xlu0
      %v2171 = vpop.trf.xlu0
      %v2172 = vpop.trf.xlu0
      %v2173 = vpop.trf.xlu0
      %v2174 = vpop.trf.xlu0
      %v2175 = vpop.trf.xlu0
      %v2176 = vpop.trf.xlu0
      %v2177 = vpop.trf.xlu0
      %v2178 = vpop.trf.xlu0
      %v2179 = vpop.trf.xlu0
      %v2180 = vpop.trf.xlu0
      %v2181 = vpop.trf.xlu0
      %v2182 = vpop.trf.xlu0
      %v2183 = vpop.trf.xlu0
      %v2184 = vpop.trf.xlu0
      %v2185 = vpop.trf.xlu0
      %2186 = vxpose.xlu0.b32.start [1/16] %v2151, 128
      %2187 = vxpose.xlu0.b32.cont [2/16] 0.0, 128
      %2188 = vxpose.xlu0.b32.cont [3/16] 0.0, 128
      %2189 = vxpose.xlu0.b32.cont [4/16] 0.0, 128
      %2190 = vxpose.xlu0.b32.cont [5/16] 0.0, 128
      %2191 = vxpose.xlu0.b32.cont [6/16] 0.0, 128
      %2192 = vxpose.xlu0.b32.cont [7/16] 0.0, 128
      %2193 = vxpose.xlu0.b32.cont [8/16] 0.0, 128
      %2194 = vxpose.xlu0.b32.cont [9/16] 0.0, 128
      %2195 = vxpose.xlu0.b32.cont [10/16] 0.0, 128
      %2196 = vxpose.xlu0.b32.cont [11/16] 0.0, 128
      %2197 = vxpose.xlu0.b32.cont [12/16] 0.0, 128
      %2198 = vxpose.xlu0.b32.cont [13/16] 0.0, 128
      %2199 = vxpose.xlu0.b32.cont [14/16] 0.0, 128
      %2200 = vxpose.xlu0.b32.cont [15/16] 0.0, 128
      %2201 = vxpose.xlu0.b32.end [16/16] 0.0, 128
      %v2202 = vpop.trf.xlu0
      %v2203 = vpop.trf.xlu0
      %v2204 = vpop.trf.xlu0
      %v2205 = vpop.trf.xlu0
      %v2206 = vpop.trf.xlu0
      %v2207 = vpop.trf.xlu0
      %v2208 = vpop.trf.xlu0
      %v2209 = vpop.trf.xlu0
      %v2210 = vpop.trf.xlu0
      %v2211 = vpop.trf.xlu0
      %v2212 = vpop.trf.xlu0
      %v2213 = vpop.trf.xlu0
      %v2214 = vpop.trf.xlu0
      %v2215 = vpop.trf.xlu0
      %v2216 = vpop.trf.xlu0
      %v2217 = vpop.trf.xlu0
      %s2218 = scalar_lea.vmem %s5, 4
      %v2219 = vld [vmem:[%s2218] sm:$0xf]
      %v2221 = vsel %vm509, %v2219, 0
      %2223 = vmatprep.subr.mxu0 0.0
      %2224 = vmatpush1.msra.mxu0 %v2221
      %2225 = vmatprep.subr.mxu0 0.0
      %2226 = vmatpush1.msra.mxu0 0.0
      %2227 = vmatprep.subr.mxu0 0.0
      %2228 = vmatpush1.msra.mxu0 0.0
      %2229 = vmatprep.subr.mxu0 0.0
      %2230 = vmatpush1.msra.mxu0 0.0
      %2231 = vmatprep.subr.mxu0 0.0
      %2232 = vmatpush1.msra.mxu0 0.0
      %2233 = vmatprep.subr.mxu0 0.0
      %2234 = vmatpush1.msra.mxu0 0.0
      %2235 = vmatprep.subr.mxu0 0.0
      %2236 = vmatpush1.msra.mxu0 0.0
      %2237 = vmatprep.subr.mxu0 0.0
      %2238 = vmatpush1.msra.mxu0 0.0
      %2239 = vmatprep.subr.mxu0 0.0
      %2240 = vmatpush1.msra.mxu0 0.0
      %2241 = vmatprep.subr.mxu0 0.0
      %2242 = vmatpush1.msra.mxu0 0.0
      %2243 = vmatprep.subr.mxu0 0.0
      %2244 = vmatpush1.msra.mxu0 0.0
      %2245 = vmatprep.subr.mxu0 0.0
      %2246 = vmatpush1.msra.mxu0 0.0
      %2247 = vmatprep.subr.mxu0 0.0
      %2248 = vmatpush1.msra.mxu0 0.0
      %2249 = vmatprep.subr.mxu0 0.0
      %2250 = vmatpush1.msra.mxu0 0.0
      %2251 = vmatprep.subr.mxu0 0.0
      %2252 = vmatpush1.msra.mxu0 0.0
      %2253 = vmatprep.subr.mxu0 0.0
      %2254 = vmatpush1.msra.mxu0 0.0
      %2255 = vmatprep.subr.mxu0 0.0
      %2256 = vmatpush1.msra.mxu0 0.0
      %2257 = vmatprep.subr.mxu0 0.0
      %2258 = vmatpush1.msra.mxu0 0.0
      %2259 = vmatprep.subr.mxu0 0.0
      %2260 = vmatpush1.msra.mxu0 0.0
      %2261 = vmatprep.subr.mxu0 0.0
      %2262 = vmatpush1.msra.mxu0 0.0
      %2263 = vmatprep.subr.mxu0 0.0
      %2264 = vmatpush1.msra.mxu0 0.0
      %2265 = vmatprep.subr.mxu0 0.0
      %2266 = vmatpush1.msra.mxu0 0.0
      %2267 = vmatprep.subr.mxu0 0.0
      %2268 = vmatpush1.msra.mxu0 0.0
      %2269 = vmatprep.subr.mxu0 0.0
      %2270 = vmatpush1.msra.mxu0 0.0
      %2271 = vmatprep.subr.mxu0 0.0
      %2272 = vmatpush1.msra.mxu0 0.0
      %2273 = vmatprep.subr.mxu0 0.0
      %2274 = vmatpush1.msra.mxu0 0.0
      %2275 = vmatprep.subr.mxu0 0.0
      %2276 = vmatpush1.msra.mxu0 0.0
      %2277 = vmatprep.subr.mxu0 0.0
      %2278 = vmatpush1.msra.mxu0 0.0
      %2279 = vmatprep.subr.mxu0 0.0
      %2280 = vmatpush1.msra.mxu0 0.0
      %2281 = vmatprep.subr.mxu0 0.0
      %2282 = vmatpush1.msra.mxu0 0.0
      %2283 = vmatprep.subr.mxu0 0.0
      %2284 = vmatpush1.msra.mxu0 0.0
      %2285 = vmatprep.subr.mxu0 0.0
      %2286 = vmatpush1.msra.mxu0 0.0
      %2287 = vmatprep.mubr.f32.mxu0 0.0
      %2288 = vmatmul.mubr.f32.gmra.mrb[0].mxu0 %v504
      %v2289 = vpop.f32.mrb[0].mxu0
      %v2290 = vadd.f32 0.0, %v2289
      %v2291 = vpop.f32.mrb[0].mxu0
      %2292 = vmatprep.mubr.f32.mxu0 0.0
      %2293 = vmatmul.mubr.f32.gmra.mrb[0].mxu0 %v507
      %v2294 = vpop.f32.mrb[0].mxu0
      %v2295 = vadd.f32 0.0, %v2294
      %v2296 = vpop.f32.mrb[0].mxu0
      %2297 = vdwg.mxu0
      %s2298 = scalar_lea.vmem %s6, 1
      %v2299 = vld [vmem:[%s2298] sm:$0x1]
      %v2301 = vlaneseq
      %v2302 = vshrl.u32 %v2301, 7
      %v2303 = vsub.s32 0, %v2302
      %v2304 = vrot.slane %v2299, %v2303
      %v2306 = vadd.f32 %v2290, %v2304
      %v2307 = vadd.f32 %v2295, %v2304
      %s2308 = scalar_lea.vmem %s7, 16
      %v2309 = vld [vmem:[%s2308] sm:$0xff]
      %v2310 = vld [vmem:[%s2308 + $0x8] sm:$0xff]
      %s2311 = scalar_lea.vmem %s4, 8
      %v2312 = vld [vmem:[%s2311] sm:$0xff]
      %2313 = vset.pattern.permute.xlu0 0
      %2314 = vperm.xlu0 %2313, %v2138
      %v2315 = vpop.permute.xlu0 %2314
      %2317 = vset.pattern.permute.xlu0 0
      %2318 = vperm.xlu0 %2317, %v2143
      %v2319 = vpop.permute.xlu0 %2318
      %v2321 = vlaneseq
      %v2322 = vshrl.u32 %v2321, 7
      %v2323 = vsub.s32 0, %v2322
      %v2324 = vrot.slane %v2170, %v2323
      %v2325 = vlaneseq
      %v2326 = vshrl.u32 %v2325, 7
      %v2327 = vsub.s32 0, %v2326
      %v2328 = vrot.slane %v2202, %v2327
      %v2329 = vadd.f32 %v2315, %v2324
      %v2330 = vadd.f32 %v2319, %v2328
      %vm2331 = vcmp.gt.f32.partialorder %v2329, 0.0
      %vm2332 = vcmp.gt.f32.partialorder %v2330, 0.0
      %v2333 = vmul.f32 %v2329, 0.2
      %v2334 = vmul.f32 %v2330, 0.2
      %v2335 = vsel %vm2331, %v2329, %v2333
      %v2336 = vsel %vm2332, %v2330, %v2334
      %v2337 = vmul.f32 %v1981, %v2335
      %v2338 = vmul.f32 %v1981, %v2336
      %v2339 = vsel %vm861, %v2337, -inf
      %v2340 = vrot.slane %v2339, 4
      %v2341 = vmax.f32 %v2339, %v2340
      %v2342 = vrot.slane %v2341, 2
      %v2343 = vmax.f32 %v2341, %v2342
      %v2344 = vrot.slane %v2343, 1
      %v2345 = vmax.f32 %v2343, %v2344
      %v2346 = vsel %vm861, %v2338, -inf
      %v2347 = vrot.slane %v2346, 4
      %v2348 = vmax.f32 %v2346, %v2347
      %v2349 = vrot.slane %v2348, 2
      %v2350 = vmax.f32 %v2348, %v2349
      %v2351 = vrot.slane %v2350, 1
      %v2352 = vmax.f32 %v2350, %v2351
      %v2353 = vsub.f32 %v2337, %v2345
      %v2354 = vsub.f32 %v2338, %v2352
      %v2355 = vmul.f32 %v2353, 1.442695
      %v2356 = vpow.pop %v2355
      %v2357 = vmul.f32 %v2354, 1.442695
      %v2358 = vpow.pop %v2357
      %v2359 = vsel %vm861, %v2356, 0.0
      %v2360 = vrot.slane %v2359, 4
      %v2361 = vadd.f32 %v2359, %v2360
      %v2362 = vrot.slane %v2361, 2
      %v2363 = vadd.f32 %v2361, %v2362
      %v2364 = vrot.slane %v2363, 1
      %v2365 = vadd.f32 %v2363, %v2364
      %v2366 = vsel %vm861, %v2358, 0.0
      %v2367 = vrot.slane %v2366, 4
      %v2368 = vadd.f32 %v2366, %v2367
      %v2369 = vrot.slane %v2368, 2
      %v2370 = vadd.f32 %v2368, %v2369
      %v2371 = vrot.slane %v2370, 1
      %v2372 = vadd.f32 %v2370, %v2371
      %v2373 = vrcp.pop %v2365
      %v2374 = vmul.f32 %v2356, %v2373
      %v2375 = vrcp.pop %v2372
      %v2376 = vmul.f32 %v2358, %v2375
      %v2378 = vsel %vm861, %v2374, 0
      %2380 = vmatprep.subr.mxu0 0.0
      %2381 = vmatpush1.msra.mxu0 %v2054
      %2382 = vmatprep.subr.mxu0 0.0
      %2383 = vmatpush1.msra.mxu0 0.0
      %2384 = vmatprep.subr.mxu0 0.0
      %2385 = vmatpush1.msra.mxu0 0.0
      %2386 = vmatprep.subr.mxu0 0.0
      %2387 = vmatpush1.msra.mxu0 0.0
      %2388 = vmatprep.subr.mxu0 0.0
      %2389 = vmatpush1.msra.mxu0 0.0
      %2390 = vmatprep.subr.mxu0 0.0
      %2391 = vmatpush1.msra.mxu0 0.0
      %2392 = vmatprep.subr.mxu0 0.0
      %2393 = vmatpush1.msra.mxu0 0.0
      %2394 = vmatprep.subr.mxu0 0.0
      %2395 = vmatpush1.msra.mxu0 0.0
      %2396 = vmatprep.subr.mxu0 0.0
      %2397 = vmatpush1.msra.mxu0 0.0
      %2398 = vmatprep.subr.mxu0 0.0
      %2399 = vmatpush1.msra.mxu0 0.0
      %2400 = vmatprep.subr.mxu0 0.0
      %2401 = vmatpush1.msra.mxu0 0.0
      %2402 = vmatprep.subr.mxu0 0.0
      %2403 = vmatpush1.msra.mxu0 0.0
      %2404 = vmatprep.subr.mxu0 0.0
      %2405 = vmatpush1.msra.mxu0 0.0
      %2406 = vmatprep.subr.mxu0 0.0
      %2407 = vmatpush1.msra.mxu0 0.0
      %2408 = vmatprep.subr.mxu0 0.0
      %2409 = vmatpush1.msra.mxu0 0.0
      %2410 = vmatprep.subr.mxu0 0.0
      %2411 = vmatpush1.msra.mxu0 0.0
      %2412 = vmatprep.subr.mxu0 0.0
      %2413 = vmatpush1.msra.mxu0 0.0
      %2414 = vmatprep.subr.mxu0 0.0
      %2415 = vmatpush1.msra.mxu0 0.0
      %2416 = vmatprep.subr.mxu0 0.0
      %2417 = vmatpush1.msra.mxu0 0.0
      %2418 = vmatprep.subr.mxu0 0.0
      %2419 = vmatpush1.msra.mxu0 0.0
      %2420 = vmatprep.subr.mxu0 0.0
      %2421 = vmatpush1.msra.mxu0 0.0
      %2422 = vmatprep.subr.mxu0 0.0
      %2423 = vmatpush1.msra.mxu0 0.0
      %2424 = vmatprep.subr.mxu0 0.0
      %2425 = vmatpush1.msra.mxu0 0.0
      %2426 = vmatprep.subr.mxu0 0.0
      %2427 = vmatpush1.msra.mxu0 0.0
      %2428 = vmatprep.subr.mxu0 0.0
      %2429 = vmatpush1.msra.mxu0 0.0
      %2430 = vmatprep.subr.mxu0 0.0
      %2431 = vmatpush1.msra.mxu0 0.0
      %2432 = vmatprep.subr.mxu0 0.0
      %2433 = vmatpush1.msra.mxu0 0.0
      %2434 = vmatprep.subr.mxu0 0.0
      %2435 = vmatpush1.msra.mxu0 0.0
      %2436 = vmatprep.subr.mxu0 0.0
      %2437 = vmatpush1.msra.mxu0 0.0
      %2438 = vmatprep.subr.mxu0 0.0
      %2439 = vmatpush1.msra.mxu0 0.0
      %2440 = vmatprep.subr.mxu0 0.0
      %2441 = vmatpush1.msra.mxu0 0.0
      %2442 = vmatprep.subr.mxu0 0.0
      %2443 = vmatpush1.msra.mxu0 0.0
      %2444 = vmatprep.mubr.f32.mxu0 0.0
      %2445 = vmatmul.mubr.f32.gmra.mrb[0].mxu0 %v2378
      %v2446 = vpop.f32.mrb[0].mxu0
      %v2447 = vadd.f32 %v2312, %v2446
      %v2448 = vpop.f32.mrb[0].mxu0
      %2449 = vdwg.mxu0
      %v2451 = vsel %vm861, %v2376, 0
      %2453 = vmatprep.subr.mxu0 0.0
      %2454 = vmatpush1.msra.mxu0 %v2059
      %2455 = vmatprep.subr.mxu0 0.0
      %2456 = vmatpush1.msra.mxu0 0.0
      %2457 = vmatprep.subr.mxu0 0.0
      %2458 = vmatpush1.msra.mxu0 0.0
      %2459 = vmatprep.subr.mxu0 0.0
      %2460 = vmatpush1.msra.mxu0 0.0
      %2461 = vmatprep.subr.mxu0 0.0
      %2462 = vmatpush1.msra.mxu0 0.0
      %2463 = vmatprep.subr.mxu0 0.0
      %2464 = vmatpush1.msra.mxu0 0.0
      %2465 = vmatprep.subr.mxu0 0.0
      %2466 = vmatpush1.msra.mxu0 0.0
      %2467 = vmatprep.subr.mxu0 0.0
      %2468 = vmatpush1.msra.mxu0 0.0
      %2469 = vmatprep.subr.mxu0 0.0
      %2470 = vmatpush1.msra.mxu0 0.0
      %2471 = vmatprep.subr.mxu0 0.0
      %2472 = vmatpush1.msra.mxu0 0.0
      %2473 = vmatprep.subr.mxu0 0.0
      %2474 = vmatpush1.msra.mxu0 0.0
      %2475 = vmatprep.subr.mxu0 0.0
      %2476 = vmatpush1.msra.mxu0 0.0
      %2477 = vmatprep.subr.mxu0 0.0
      %2478 = vmatpush1.msra.mxu0 0.0
      %2479 = vmatprep.subr.mxu0 0.0
      %2480 = vmatpush1.msra.mxu0 0.0
      %2481 = vmatprep.subr.mxu0 0.0
      %2482 = vmatpush1.msra.mxu0 0.0
      %2483 = vmatprep.subr.mxu0 0.0
      %2484 = vmatpush1.msra.mxu0 0.0
      %2485 = vmatprep.subr.mxu0 0.0
      %2486 = vmatpush1.msra.mxu0 0.0
      %2487 = vmatprep.subr.mxu0 0.0
      %2488 = vmatpush1.msra.mxu0 0.0
      %2489 = vmatprep.subr.mxu0 0.0
      %2490 = vmatpush1.msra.mxu0 0.0
      %2491 = vmatprep.subr.mxu0 0.0
      %2492 = vmatpush1.msra.mxu0 0.0
      %2493 = vmatprep.subr.mxu0 0.0
      %2494 = vmatpush1.msra.mxu0 0.0
      %2495 = vmatprep.subr.mxu0 0.0
      %2496 = vmatpush1.msra.mxu0 0.0
      %2497 = vmatprep.subr.mxu0 0.0
      %2498 = vmatpush1.msra.mxu0 0.0
      %2499 = vmatprep.subr.mxu0 0.0
      %2500 = vmatpush1.msra.mxu0 0.0
      %2501 = vmatprep.subr.mxu0 0.0
      %2502 = vmatpush1.msra.mxu0 0.0
      %2503 = vmatprep.subr.mxu0 0.0
      %2504 = vmatpush1.msra.mxu0 0.0
      %2505 = vmatprep.subr.mxu0 0.0
      %2506 = vmatpush1.msra.mxu0 0.0
      %2507 = vmatprep.subr.mxu0 0.0
      %2508 = vmatpush1.msra.mxu0 0.0
      %2509 = vmatprep.subr.mxu0 0.0
      %2510 = vmatpush1.msra.mxu0 0.0
      %2511 = vmatprep.subr.mxu0 0.0
      %2512 = vmatpush1.msra.mxu0 0.0
      %2513 = vmatprep.subr.mxu0 0.0
      %2514 = vmatpush1.msra.mxu0 0.0
      %2515 = vmatprep.subr.mxu0 0.0
      %2516 = vmatpush1.msra.mxu0 0.0
      %2517 = vmatprep.mubr.f32.mxu0 0.0
      %2518 = vmatmul.mubr.f32.gmra.mrb[0].mxu0 %v2451
      %v2519 = vpop.f32.mrb[0].mxu0
      %v2520 = vadd.f32 %v2312, %v2519
      %v2521 = vpop.f32.mrb[0].mxu0
      %2522 = vdwg.mxu0
      %v2523 = vadd.f32 %v2447, %v2306
      %v2524 = vadd.f32 %v2520, %v2307
      %s2525 = scalar_lea.vmem %s10, 16
      %v2526 = vld [vmem:[%s2525] sm:$0xff]
      %2527 = vset.pattern.permute.xlu0 1
      %2528 = vperm.xlu0 %2527, %v2138
      %v2529 = vpop.permute.xlu0 %2528
      %2531 = vset.pattern.permute.xlu0 1
      %2532 = vperm.xlu0 %2531, %v2143
      %v2533 = vpop.permute.xlu0 %2532
      %v2535 = vlaneseq
      %v2536 = vshrl.u32 %v2535, 7
      %v2537 = vsub.s32 1, %v2536
      %v2538 = vrot.slane %v2170, %v2537
      %v2539 = vlaneseq
      %v2540 = vshrl.u32 %v2539, 7
      %v2541 = vsub.s32 1, %v2540
      %v2542 = vrot.slane %v2202, %v2541
      %v2543 = vadd.f32 %v2529, %v2538
      %v2544 = vadd.f32 %v2533, %v2542
      %vm2545 = vcmp.gt.f32.partialorder %v2543, 0.0
      %vm2546 = vcmp.gt.f32.partialorder %v2544, 0.0
      %v2547 = vmul.f32 %v2543, 0.2
      %v2548 = vmul.f32 %v2544, 0.2
      %v2549 = vsel %vm2545, %v2543, %v2547
      %v2550 = vsel %vm2546, %v2544, %v2548
      %v2551 = vmul.f32 %v1981, %v2549
      %v2552 = vmul.f32 %v1981, %v2550
      %v2553 = vsel %vm861, %v2551, -inf
      %v2554 = vrot.slane %v2553, 4
      %v2555 = vmax.f32 %v2553, %v2554
      %v2556 = vrot.slane %v2555, 2
      %v2557 = vmax.f32 %v2555, %v2556
      %v2558 = vrot.slane %v2557, 1
      %v2559 = vmax.f32 %v2557, %v2558
      %v2560 = vsel %vm861, %v2552, -inf
      %v2561 = vrot.slane %v2560, 4
      %v2562 = vmax.f32 %v2560, %v2561
      %v2563 = vrot.slane %v2562, 2
      %v2564 = vmax.f32 %v2562, %v2563
      %v2565 = vrot.slane %v2564, 1
      %v2566 = vmax.f32 %v2564, %v2565
      %v2567 = vsub.f32 %v2551, %v2559
      %v2568 = vsub.f32 %v2552, %v2566
      %v2569 = vmul.f32 %v2567, 1.442695
      %v2570 = vpow.pop %v2569
      %v2571 = vmul.f32 %v2568, 1.442695
      %v2572 = vpow.pop %v2571
      %v2573 = vsel %vm861, %v2570, 0.0
      %v2574 = vrot.slane %v2573, 4
      %v2575 = vadd.f32 %v2573, %v2574
      %v2576 = vrot.slane %v2575, 2
      %v2577 = vadd.f32 %v2575, %v2576
      %v2578 = vrot.slane %v2577, 1
      %v2579 = vadd.f32 %v2577, %v2578
      %v2580 = vsel %vm861, %v2572, 0.0
      %v2581 = vrot.slane %v2580, 4
      %v2582 = vadd.f32 %v2580, %v2581
      %v2583 = vrot.slane %v2582, 2
      %v2584 = vadd.f32 %v2582, %v2583
      %v2585 = vrot.slane %v2584, 1
      %v2586 = vadd.f32 %v2584, %v2585
      %v2587 = vrcp.pop %v2579
      %v2588 = vmul.f32 %v2570, %v2587
      %v2589 = vrcp.pop %v2586
      %v2590 = vmul.f32 %v2572, %v2589
      %2591 = vrot.lane.b32.xlu0 %v2054, 120
      %v2592 = vpop.permute.xlu0 %2591
      %2595 = vrot.lane.b32.xlu0 %v2312, 120
      %v2596 = vpop.permute.xlu0 %2595
      %v2599 = vsel %vm861, %v2588, 0
      %2601 = vmatprep.subr.mxu0 0.0
      %2602 = vmatpush1.msra.mxu0 %v2592
      %2603 = vmatprep.subr.mxu0 0.0
      %2604 = vmatpush1.msra.mxu0 0.0
      %2605 = vmatprep.subr.mxu0 0.0
      %2606 = vmatpush1.msra.mxu0 0.0
      %2607 = vmatprep.subr.mxu0 0.0
      %2608 = vmatpush1.msra.mxu0 0.0
      %2609 = vmatprep.subr.mxu0 0.0
      %2610 = vmatpush1.msra.mxu0 0.0
      %2611 = vmatprep.subr.mxu0 0.0
      %2612 = vmatpush1.msra.mxu0 0.0
      %2613 = vmatprep.subr.mxu0 0.0
      %2614 = vmatpush1.msra.mxu0 0.0
      %2615 = vmatprep.subr.mxu0 0.0
      %2616 = vmatpush1.msra.mxu0 0.0
      %2617 = vmatprep.subr.mxu0 0.0
      %2618 = vmatpush1.msra.mxu0 0.0
      %2619 = vmatprep.subr.mxu0 0.0
      %2620 = vmatpush1.msra.mxu0 0.0
      %2621 = vmatprep.subr.mxu0 0.0
      %2622 = vmatpush1.msra.mxu0 0.0
      %2623 = vmatprep.subr.mxu0 0.0
      %2624 = vmatpush1.msra.mxu0 0.0
      %2625 = vmatprep.subr.mxu0 0.0
      %2626 = vmatpush1.msra.mxu0 0.0
      %2627 = vmatprep.subr.mxu0 0.0
      %2628 = vmatpush1.msra.mxu0 0.0
      %2629 = vmatprep.subr.mxu0 0.0
      %2630 = vmatpush1.msra.mxu0 0.0
      %2631 = vmatprep.subr.mxu0 0.0
      %2632 = vmatpush1.msra.mxu0 0.0
      %2633 = vmatprep.subr.mxu0 0.0
      %2634 = vmatpush1.msra.mxu0 0.0
      %2635 = vmatprep.subr.mxu0 0.0
      %2636 = vmatpush1.msra.mxu0 0.0
      %2637 = vmatprep.subr.mxu0 0.0
      %2638 = vmatpush1.msra.mxu0 0.0
      %2639 = vmatprep.subr.mxu0 0.0
      %2640 = vmatpush1.msra.mxu0 0.0
      %2641 = vmatprep.subr.mxu0 0.0
      %2642 = vmatpush1.msra.mxu0 0.0
      %2643 = vmatprep.subr.mxu0 0.0
      %2644 = vmatpush1.msra.mxu0 0.0
      %2645 = vmatprep.subr.mxu0 0.0
      %2646 = vmatpush1.msra.mxu0 0.0
      %2647 = vmatprep.subr.mxu0 0.0
      %2648 = vmatpush1.msra.mxu0 0.0
      %2649 = vmatprep.subr.mxu0 0.0
      %2650 = vmatpush1.msra.mxu0 0.0
      %2651 = vmatprep.subr.mxu0 0.0
      %2652 = vmatpush1.msra.mxu0 0.0
      %2653 = vmatprep.subr.mxu0 0.0
      %2654 = vmatpush1.msra.mxu0 0.0
      %2655 = vmatprep.subr.mxu0 0.0
      %2656 = vmatpush1.msra.mxu0 0.0
      %2657 = vmatprep.subr.mxu0 0.0
      %2658 = vmatpush1.msra.mxu0 0.0
      %2659 = vmatprep.subr.mxu0 0.0
      %2660 = vmatpush1.msra.mxu0 0.0
      %2661 = vmatprep.subr.mxu0 0.0
      %2662 = vmatpush1.msra.mxu0 0.0
      %2663 = vmatprep.subr.mxu0 0.0
      %2664 = vmatpush1.msra.mxu0 0.0
      %2665 = vmatprep.mubr.f32.mxu0 0.0
      %2666 = vmatmul.mubr.f32.gmra.mrb[0].mxu0 %v2599
      %v2667 = vpop.f32.mrb[0].mxu0
      %v2668 = vadd.f32 %v2596, %v2667
      %v2669 = vpop.f32.mrb[0].mxu0
      %2670 = vdwg.mxu0
      %2671 = vrot.lane.b32.xlu0 %v2059, 120
      %v2672 = vpop.permute.xlu0 %2671
      %v2675 = vsel %vm861, %v2590, 0
      %2677 = vmatprep.subr.mxu0 0.0
      %2678 = vmatpush1.msra.mxu0 %v2672
      %2679 = vmatprep.subr.mxu0 0.0
      %2680 = vmatpush1.msra.mxu0 0.0
      %2681 = vmatprep.subr.mxu0 0.0
      %2682 = vmatpush1.msra.mxu0 0.0
      %2683 = vmatprep.subr.mxu0 0.0
      %2684 = vmatpush1.msra.mxu0 0.0
      %2685 = vmatprep.subr.mxu0 0.0
      %2686 = vmatpush1.msra.mxu0 0.0
      %2687 = vmatprep.subr.mxu0 0.0
      %2688 = vmatpush1.msra.mxu0 0.0
      %2689 = vmatprep.subr.mxu0 0.0
      %2690 = vmatpush1.msra.mxu0 0.0
      %2691 = vmatprep.subr.mxu0 0.0
      %2692 = vmatpush1.msra.mxu0 0.0
      %2693 = vmatprep.subr.mxu0 0.0
      %2694 = vmatpush1.msra.mxu0 0.0
      %2695 = vmatprep.subr.mxu0 0.0
      %2696 = vmatpush1.msra.mxu0 0.0
      %2697 = vmatprep.subr.mxu0 0.0
      %2698 = vmatpush1.msra.mxu0 0.0
      %2699 = vmatprep.subr.mxu0 0.0
      %2700 = vmatpush1.msra.mxu0 0.0
      %2701 = vmatprep.subr.mxu0 0.0
      %2702 = vmatpush1.msra.mxu0 0.0
      %2703 = vmatprep.subr.mxu0 0.0
      %2704 = vmatpush1.msra.mxu0 0.0
      %2705 = vmatprep.subr.mxu0 0.0
      %2706 = vmatpush1.msra.mxu0 0.0
      %2707 = vmatprep.subr.mxu0 0.0
      %2708 = vmatpush1.msra.mxu0 0.0
      %2709 = vmatprep.subr.mxu0 0.0
      %2710 = vmatpush1.msra.mxu0 0.0
      %2711 = vmatprep.subr.mxu0 0.0
      %2712 = vmatpush1.msra.mxu0 0.0
      %2713 = vmatprep.subr.mxu0 0.0
      %2714 = vmatpush1.msra.mxu0 0.0
      %2715 = vmatprep.subr.mxu0 0.0
      %2716 = vmatpush1.msra.mxu0 0.0
      %2717 = vmatprep.subr.mxu0 0.0
      %2718 = vmatpush1.msra.mxu0 0.0
      %2719 = vmatprep.subr.mxu0 0.0
      %2720 = vmatpush1.msra.mxu0 0.0
      %2721 = vmatprep.subr.mxu0 0.0
      %2722 = vmatpush1.msra.mxu0 0.0
      %2723 = vmatprep.subr.mxu0 0.0
      %2724 = vmatpush1.msra.mxu0 0.0
      %2725 = vmatprep.subr.mxu0 0.0
      %2726 = vmatpush1.msra.mxu0 0.0
      %2727 = vmatprep.subr.mxu0 0.0
      %2728 = vmatpush1.msra.mxu0 0.0
      %2729 = vmatprep.subr.mxu0 0.0
      %2730 = vmatpush1.msra.mxu0 0.0
      %2731 = vmatprep.subr.mxu0 0.0
      %2732 = vmatpush1.msra.mxu0 0.0
      %2733 = vmatprep.subr.mxu0 0.0
      %2734 = vmatpush1.msra.mxu0 0.0
      %2735 = vmatprep.subr.mxu0 0.0
      %2736 = vmatpush1.msra.mxu0 0.0
      %2737 = vmatprep.subr.mxu0 0.0
      %2738 = vmatpush1.msra.mxu0 0.0
      %2739 = vmatprep.subr.mxu0 0.0
      %2740 = vmatpush1.msra.mxu0 0.0
      %2741 = vmatprep.mubr.f32.mxu0 0.0
      %2742 = vmatmul.mubr.f32.gmra.mrb[0].mxu0 %v2675
      %v2743 = vpop.f32.mrb[0].mxu0
      %v2744 = vadd.f32 %v2596, %v2743
      %v2745 = vpop.f32.mrb[0].mxu0
      %2746 = vdwg.mxu0
      %2749 = vrot.lane.b32.xlu0 %v2306, 120
      %v2750 = vpop.permute.xlu0 %2749
      %2751 = vrot.lane.b32.xlu0 %v2307, 120
      %v2752 = vpop.permute.xlu0 %2751
      %v2755 = vadd.f32 %v2668, %v2750
      %v2756 = vadd.f32 %v2744, %v2752
      %v2758 = vsel %vm861, %v2755, 0
      %v2761 = vsel %vm861, %v2756, 0
      %2763 = vmatprep.subr.mxu0 0.0
      %2764 = vmatpush1.msra.mxu0 %v2310
      %2765 = vmatprep.subr.mxu0 0.0
      %2766 = vmatpush1.msra.mxu0 0.0
      %2767 = vmatprep.subr.mxu0 0.0
      %2768 = vmatpush1.msra.mxu0 0.0
      %2769 = vmatprep.subr.mxu0 0.0
      %2770 = vmatpush1.msra.mxu0 0.0
      %2771 = vmatprep.subr.mxu0 0.0
      %2772 = vmatpush1.msra.mxu0 0.0
      %2773 = vmatprep.subr.mxu0 0.0
      %2774 = vmatpush1.msra.mxu0 0.0
      %2775 = vmatprep.subr.mxu0 0.0
      %2776 = vmatpush1.msra.mxu0 0.0
      %2777 = vmatprep.subr.mxu0 0.0
      %2778 = vmatpush1.msra.mxu0 0.0
      %2779 = vmatprep.subr.mxu0 0.0
      %2780 = vmatpush1.msra.mxu0 0.0
      %2781 = vmatprep.subr.mxu0 0.0
      %2782 = vmatpush1.msra.mxu0 0.0
      %2783 = vmatprep.subr.mxu0 0.0
      %2784 = vmatpush1.msra.mxu0 0.0
      %2785 = vmatprep.subr.mxu0 0.0
      %2786 = vmatpush1.msra.mxu0 0.0
      %2787 = vmatprep.subr.mxu0 0.0
      %2788 = vmatpush1.msra.mxu0 0.0
      %2789 = vmatprep.subr.mxu0 0.0
      %2790 = vmatpush1.msra.mxu0 0.0
      %2791 = vmatprep.subr.mxu0 0.0
      %2792 = vmatpush1.msra.mxu0 0.0
      %2793 = vmatprep.subr.mxu0 0.0
      %2794 = vmatpush1.msra.mxu0 0.0
      %2795 = vmatprep.subr.mxu0 0.0
      %2796 = vmatpush1.msra.mxu0 0.0
      %2797 = vmatprep.subr.mxu0 0.0
      %2798 = vmatpush1.msra.mxu0 0.0
      %2799 = vmatprep.subr.mxu0 0.0
      %2800 = vmatpush1.msra.mxu0 0.0
      %2801 = vmatprep.subr.mxu0 0.0
      %2802 = vmatpush1.msra.mxu0 0.0
      %2803 = vmatprep.subr.mxu0 0.0
      %2804 = vmatpush1.msra.mxu0 0.0
      %2805 = vmatprep.subr.mxu0 0.0
      %2806 = vmatpush1.msra.mxu0 0.0
      %2807 = vmatprep.subr.mxu0 0.0
      %2808 = vmatpush1.msra.mxu0 0.0
      %2809 = vmatprep.subr.mxu0 0.0
      %2810 = vmatpush1.msra.mxu0 0.0
      %2811 = vmatprep.subr.mxu0 0.0
      %2812 = vmatpush1.msra.mxu0 0.0
      %2813 = vmatprep.subr.mxu0 0.0
      %2814 = vmatpush1.msra.mxu0 0.0
      %2815 = vmatprep.subr.mxu0 0.0
      %2816 = vmatpush1.msra.mxu0 0.0
      %2817 = vmatprep.subr.mxu0 0.0
      %2818 = vmatpush1.msra.mxu0 0.0
      %2819 = vmatprep.subr.mxu0 0.0
      %2820 = vmatpush1.msra.mxu0 0.0
      %2821 = vmatprep.subr.mxu0 0.0
      %2822 = vmatpush1.msra.mxu0 0.0
      %2823 = vmatprep.subr.mxu0 0.0
      %2824 = vmatpush1.msra.mxu0 0.0
      %2825 = vmatprep.subr.mxu0 0.0
      %2826 = vmatpush1.msra.mxu0 0.0
      %2827 = vmatprep.mubr.f32.mxu0 0.0
      %2828 = vmatmul.mubr.f32.gmra.mrb[0].mxu0 %v2758
      %v2829 = vpop.f32.mrb[0].mxu0
      %v2830 = vadd.f32 0.0, %v2829
      %v2831 = vpop.f32.mrb[0].mxu0
      %2832 = vmatprep.mubr.f32.mxu0 0.0
      %2833 = vmatmul.mubr.f32.gmra.mrb[0].mxu0 %v2761
      %v2834 = vpop.f32.mrb[0].mxu0
      %v2835 = vadd.f32 0.0, %v2834
      %v2836 = vpop.f32.mrb[0].mxu0
      %2837 = vdwg.mxu0
      %v2839 = vsel %vm861, %v2523, 0
      %v2842 = vsel %vm861, %v2524, 0
      %2844 = vmatprep.subr.mxu0 0.0
      %2845 = vmatpush1.msra.mxu0 %v2309
      %2846 = vmatprep.subr.mxu0 0.0
      %2847 = vmatpush1.msra.mxu0 0.0
      %2848 = vmatprep.subr.mxu0 0.0
      %2849 = vmatpush1.msra.mxu0 0.0
      %2850 = vmatprep.subr.mxu0 0.0
      %2851 = vmatpush1.msra.mxu0 0.0
      %2852 = vmatprep.subr.mxu0 0.0
      %2853 = vmatpush1.msra.mxu0 0.0
      %2854 = vmatprep.subr.mxu0 0.0
      %2855 = vmatpush1.msra.mxu0 0.0
      %2856 = vmatprep.subr.mxu0 0.0
      %2857 = vmatpush1.msra.mxu0 0.0
      %2858 = vmatprep.subr.mxu0 0.0
      %2859 = vmatpush1.msra.mxu0 0.0
      %2860 = vmatprep.subr.mxu0 0.0
      %2861 = vmatpush1.msra.mxu0 0.0
      %2862 = vmatprep.subr.mxu0 0.0
      %2863 = vmatpush1.msra.mxu0 0.0
      %2864 = vmatprep.subr.mxu0 0.0
      %2865 = vmatpush1.msra.mxu0 0.0
      %2866 = vmatprep.subr.mxu0 0.0
      %2867 = vmatpush1.msra.mxu0 0.0
      %2868 = vmatprep.subr.mxu0 0.0
      %2869 = vmatpush1.msra.mxu0 0.0
      %2870 = vmatprep.subr.mxu0 0.0
      %2871 = vmatpush1.msra.mxu0 0.0
      %2872 = vmatprep.subr.mxu0 0.0
      %2873 = vmatpush1.msra.mxu0 0.0
      %2874 = vmatprep.subr.mxu0 0.0
      %2875 = vmatpush1.msra.mxu0 0.0
      %2876 = vmatprep.subr.mxu0 0.0
      %2877 = vmatpush1.msra.mxu0 0.0
      %2878 = vmatprep.subr.mxu0 0.0
      %2879 = vmatpush1.msra.mxu0 0.0
      %2880 = vmatprep.subr.mxu0 0.0
      %2881 = vmatpush1.msra.mxu0 0.0
      %2882 = vmatprep.subr.mxu0 0.0
      %2883 = vmatpush1.msra.mxu0 0.0
      %2884 = vmatprep.subr.mxu0 0.0
      %2885 = vmatpush1.msra.mxu0 0.0
      %2886 = vmatprep.subr.mxu0 0.0
      %2887 = vmatpush1.msra.mxu0 0.0
      %2888 = vmatprep.subr.mxu0 0.0
      %2889 = vmatpush1.msra.mxu0 0.0
      %2890 = vmatprep.subr.mxu0 0.0
      %2891 = vmatpush1.msra.mxu0 0.0
      %2892 = vmatprep.subr.mxu0 0.0
      %2893 = vmatpush1.msra.mxu0 0.0
      %2894 = vmatprep.subr.mxu0 0.0
      %2895 = vmatpush1.msra.mxu0 0.0
      %2896 = vmatprep.subr.mxu0 0.0
      %2897 = vmatpush1.msra.mxu0 0.0
      %2898 = vmatprep.subr.mxu0 0.0
      %2899 = vmatpush1.msra.mxu0 0.0
      %2900 = vmatprep.subr.mxu0 0.0
      %2901 = vmatpush1.msra.mxu0 0.0
      %2902 = vmatprep.subr.mxu0 0.0
      %2903 = vmatpush1.msra.mxu0 0.0
      %2904 = vmatprep.subr.mxu0 0.0
      %2905 = vmatpush1.msra.mxu0 0.0
      %2906 = vmatprep.subr.mxu0 0.0
      %2907 = vmatpush1.msra.mxu0 0.0
      %2908 = vmatprep.mubr.f32.mxu0 0.0
      %2909 = vmatmul.mubr.f32.gmra.mrb[0].mxu0 %v2839
      %v2910 = vpop.f32.mrb[0].mxu0
      %v2911 = vadd.f32 %v2830, %v2910
      %v2912 = vpop.f32.mrb[0].mxu0
      %2913 = vmatprep.mubr.f32.mxu0 0.0
      %2914 = vmatmul.mubr.f32.gmra.mrb[0].mxu0 %v2842
      %v2915 = vpop.f32.mrb[0].mxu0
      %v2916 = vadd.f32 %v2835, %v2915
      %v2917 = vpop.f32.mrb[0].mxu0
      %2918 = vdwg.mxu0
      %v2919 = vld [vmem:[%s2525 + $0x8] sm:$0xff]
      %2920 = vmatprep.subr.mxu0 0.0
      %2921 = vmatpush1.msra.mxu0 %v2919
      %2922 = vmatprep.subr.mxu0 0.0
      %2923 = vmatpush1.msra.mxu0 0.0
      %2924 = vmatprep.subr.mxu0 0.0
      %2925 = vmatpush1.msra.mxu0 0.0
      %2926 = vmatprep.subr.mxu0 0.0
      %2927 = vmatpush1.msra.mxu0 0.0
      %2928 = vmatprep.subr.mxu0 0.0
      %2929 = vmatpush1.msra.mxu0 0.0
      %2930 = vmatprep.subr.mxu0 0.0
      %2931 = vmatpush1.msra.mxu0 0.0
      %2932 = vmatprep.subr.mxu0 0.0
      %2933 = vmatpush1.msra.mxu0 0.0
      %2934 = vmatprep.subr.mxu0 0.0
      %2935 = vmatpush1.msra.mxu0 0.0
      %2936 = vmatprep.subr.mxu0 0.0
      %2937 = vmatpush1.msra.mxu0 0.0
      %2938 = vmatprep.subr.mxu0 0.0
      %2939 = vmatpush1.msra.mxu0 0.0
      %2940 = vmatprep.subr.mxu0 0.0
      %2941 = vmatpush1.msra.mxu0 0.0
      %2942 = vmatprep.subr.mxu0 0.0
      %2943 = vmatpush1.msra.mxu0 0.0
      %2944 = vmatprep.subr.mxu0 0.0
      %2945 = vmatpush1.msra.mxu0 0.0
      %2946 = vmatprep.subr.mxu0 0.0
      %2947 = vmatpush1.msra.mxu0 0.0
      %2948 = vmatprep.subr.mxu0 0.0
      %2949 = vmatpush1.msra.mxu0 0.0
      %2950 = vmatprep.subr.mxu0 0.0
      %2951 = vmatpush1.msra.mxu0 0.0
      %2952 = vmatprep.subr.mxu0 0.0
      %2953 = vmatpush1.msra.mxu0 0.0
      %2954 = vmatprep.subr.mxu0 0.0
      %2955 = vmatpush1.msra.mxu0 0.0
      %2956 = vmatprep.subr.mxu0 0.0
      %2957 = vmatpush1.msra.mxu0 0.0
      %2958 = vmatprep.subr.mxu0 0.0
      %2959 = vmatpush1.msra.mxu0 0.0
      %2960 = vmatprep.subr.mxu0 0.0
      %2961 = vmatpush1.msra.mxu0 0.0
      %2962 = vmatprep.subr.mxu0 0.0
      %2963 = vmatpush1.msra.mxu0 0.0
      %2964 = vmatprep.subr.mxu0 0.0
      %2965 = vmatpush1.msra.mxu0 0.0
      %2966 = vmatprep.subr.mxu0 0.0
      %2967 = vmatpush1.msra.mxu0 0.0
      %2968 = vmatprep.subr.mxu0 0.0
      %2969 = vmatpush1.msra.mxu0 0.0
      %2970 = vmatprep.subr.mxu0 0.0
      %2971 = vmatpush1.msra.mxu0 0.0
      %2972 = vmatprep.subr.mxu0 0.0
      %2973 = vmatpush1.msra.mxu0 0.0
      %2974 = vmatprep.subr.mxu0 0.0
      %2975 = vmatpush1.msra.mxu0 0.0
      %2976 = vmatprep.subr.mxu0 0.0
      %2977 = vmatpush1.msra.mxu0 0.0
      %2978 = vmatprep.subr.mxu0 0.0
      %2979 = vmatpush1.msra.mxu0 0.0
      %2980 = vmatprep.subr.mxu0 0.0
      %2981 = vmatpush1.msra.mxu0 0.0
      %2982 = vmatprep.subr.mxu0 0.0
      %2983 = vmatpush1.msra.mxu0 0.0
      %2984 = vmatprep.mubr.f32.mxu0 0.0
      %2985 = vmatmul.mubr.f32.gmra.mrb[0].mxu0 %v2758
      %v2986 = vpop.f32.mrb[0].mxu0
      %v2987 = vadd.f32 0.0, %v2986
      %v2988 = vpop.f32.mrb[0].mxu0
      %2989 = vmatprep.mubr.f32.mxu0 0.0
      %2990 = vmatmul.mubr.f32.gmra.mrb[0].mxu0 %v2761
      %v2991 = vpop.f32.mrb[0].mxu0
      %v2992 = vadd.f32 0.0, %v2991
      %v2993 = vpop.f32.mrb[0].mxu0
      %2994 = vdwg.mxu0
      %2995 = vmatprep.subr.mxu0 0.0
      %2996 = vmatpush1.msra.mxu0 %v2526
      %2997 = vmatprep.subr.mxu0 0.0
      %2998 = vmatpush1.msra.mxu0 0.0
      %2999 = vmatprep.subr.mxu0 0.0
      %3000 = vmatpush1.msra.mxu0 0.0
      %3001 = vmatprep.subr.mxu0 0.0
      %3002 = vmatpush1.msra.mxu0 0.0
      %3003 = vmatprep.subr.mxu0 0.0
      %3004 = vmatpush1.msra.mxu0 0.0
      %3005 = vmatprep.subr.mxu0 0.0
      %3006 = vmatpush1.msra.mxu0 0.0
      %3007 = vmatprep.subr.mxu0 0.0
      %3008 = vmatpush1.msra.mxu0 0.0
      %3009 = vmatprep.subr.mxu0 0.0
      %3010 = vmatpush1.msra.mxu0 0.0
      %3011 = vmatprep.subr.mxu0 0.0
      %3012 = vmatpush1.msra.mxu0 0.0
      %3013 = vmatprep.subr.mxu0 0.0
      %3014 = vmatpush1.msra.mxu0 0.0
      %3015 = vmatprep.subr.mxu0 0.0
      %3016 = vmatpush1.msra.mxu0 0.0
      %3017 = vmatprep.subr.mxu0 0.0
      %3018 = vmatpush1.msra.mxu0 0.0
      %3019 = vmatprep.subr.mxu0 0.0
      %3020 = vmatpush1.msra.mxu0 0.0
      %3021 = vmatprep.subr.mxu0 0.0
      %3022 = vmatpush1.msra.mxu0 0.0
      %3023 = vmatprep.subr.mxu0 0.0
      %3024 = vmatpush1.msra.mxu0 0.0
      %3025 = vmatprep.subr.mxu0 0.0
      %3026 = vmatpush1.msra.mxu0 0.0
      %3027 = vmatprep.subr.mxu0 0.0
      %3028 = vmatpush1.msra.mxu0 0.0
      %3029 = vmatprep.subr.mxu0 0.0
      %3030 = vmatpush1.msra.mxu0 0.0
      %3031 = vmatprep.subr.mxu0 0.0
      %3032 = vmatpush1.msra.mxu0 0.0
      %3033 = vmatprep.subr.mxu0 0.0
      %3034 = vmatpush1.msra.mxu0 0.0
      %3035 = vmatprep.subr.mxu0 0.0
      %3036 = vmatpush1.msra.mxu0 0.0
      %3037 = vmatprep.subr.mxu0 0.0
      %3038 = vmatpush1.msra.mxu0 0.0
      %3039 = vmatprep.subr.mxu0 0.0
      %3040 = vmatpush1.msra.mxu0 0.0
      %3041 = vmatprep.subr.mxu0 0.0
      %3042 = vmatpush1.msra.mxu0 0.0
      %3043 = vmatprep.subr.mxu0 0.0
      %3044 = vmatpush1.msra.mxu0 0.0
      %3045 = vmatprep.subr.mxu0 0.0
      %3046 = vmatpush1.msra.mxu0 0.0
      %3047 = vmatprep.subr.mxu0 0.0
      %3048 = vmatpush1.msra.mxu0 0.0
      %3049 = vmatprep.subr.mxu0 0.0
      %3050 = vmatpush1.msra.mxu0 0.0
      %3051 = vmatprep.subr.mxu0 0.0
      %3052 = vmatpush1.msra.mxu0 0.0
      %3053 = vmatprep.subr.mxu0 0.0
      %3054 = vmatpush1.msra.mxu0 0.0
      %3055 = vmatprep.subr.mxu0 0.0
      %3056 = vmatpush1.msra.mxu0 0.0
      %3057 = vmatprep.subr.mxu0 0.0
      %3058 = vmatpush1.msra.mxu0 0.0
      %3059 = vmatprep.mubr.f32.mxu0 0.0
      %3060 = vmatmul.mubr.f32.gmra.mrb[0].mxu0 %v2839
      %v3061 = vpop.f32.mrb[0].mxu0
      %v3062 = vadd.f32 %v2987, %v3061
      %v3063 = vpop.f32.mrb[0].mxu0
      %3064 = vmatprep.mubr.f32.mxu0 0.0
      %3065 = vmatmul.mubr.f32.gmra.mrb[0].mxu0 %v2842
      %v3066 = vpop.f32.mrb[0].mxu0
      %v3067 = vadd.f32 %v2992, %v3066
      %v3068 = vpop.f32.mrb[0].mxu0
      %3069 = vdwg.mxu0
      %s3070 = scalar_lea.vmem %s8, 8
      %v3071 = vld [vmem:[%s3070] sm:$0xff]
      %v3073 = vsel %vm861, %v2911, 0
      %v3076 = vsel %vm861, %v2916, 0
      %3078 = vmatprep.subr.mxu0 0.0
      %3079 = vmatpush1.msra.mxu0 %v3071
      %3080 = vmatprep.subr.mxu0 0.0
      %3081 = vmatpush1.msra.mxu0 0.0
      %3082 = vmatprep.subr.mxu0 0.0
      %3083 = vmatpush1.msra.mxu0 0.0
      %3084 = vmatprep.subr.mxu0 0.0
      %3085 = vmatpush1.msra.mxu0 0.0
      %3086 = vmatprep.subr.mxu0 0.0
      %3087 = vmatpush1.msra.mxu0 0.0
      %3088 = vmatprep.subr.mxu0 0.0
      %3089 = vmatpush1.msra.mxu0 0.0
      %3090 = vmatprep.subr.mxu0 0.0
      %3091 = vmatpush1.msra.mxu0 0.0
      %3092 = vmatprep.subr.mxu0 0.0
      %3093 = vmatpush1.msra.mxu0 0.0
      %3094 = vmatprep.subr.mxu0 0.0
      %3095 = vmatpush1.msra.mxu0 0.0
      %3096 = vmatprep.subr.mxu0 0.0
      %3097 = vmatpush1.msra.mxu0 0.0
      %3098 = vmatprep.subr.mxu0 0.0
      %3099 = vmatpush1.msra.mxu0 0.0
      %3100 = vmatprep.subr.mxu0 0.0
      %3101 = vmatpush1.msra.mxu0 0.0
      %3102 = vmatprep.subr.mxu0 0.0
      %3103 = vmatpush1.msra.mxu0 0.0
      %3104 = vmatprep.subr.mxu0 0.0
      %3105 = vmatpush1.msra.mxu0 0.0
      %3106 = vmatprep.subr.mxu0 0.0
      %3107 = vmatpush1.msra.mxu0 0.0
      %3108 = vmatprep.subr.mxu0 0.0
      %3109 = vmatpush1.msra.mxu0 0.0
      %3110 = vmatprep.subr.mxu0 0.0
      %3111 = vmatpush1.msra.mxu0 0.0
      %3112 = vmatprep.subr.mxu0 0.0
      %3113 = vmatpush1.msra.mxu0 0.0
      %3114 = vmatprep.subr.mxu0 0.0
      %3115 = vmatpush1.msra.mxu0 0.0
      %3116 = vmatprep.subr.mxu0 0.0
      %3117 = vmatpush1.msra.mxu0 0.0
      %3118 = vmatprep.subr.mxu0 0.0
      %3119 = vmatpush1.msra.mxu0 0.0
      %3120 = vmatprep.subr.mxu0 0.0
      %3121 = vmatpush1.msra.mxu0 0.0
      %3122 = vmatprep.subr.mxu0 0.0
      %3123 = vmatpush1.msra.mxu0 0.0
      %3124 = vmatprep.subr.mxu0 0.0
      %3125 = vmatpush1.msra.mxu0 0.0
      %3126 = vmatprep.subr.mxu0 0.0
      %3127 = vmatpush1.msra.mxu0 0.0
      %3128 = vmatprep.subr.mxu0 0.0
      %3129 = vmatpush1.msra.mxu0 0.0
      %3130 = vmatprep.subr.mxu0 0.0
      %3131 = vmatpush1.msra.mxu0 0.0
      %3132 = vmatprep.subr.mxu0 0.0
      %3133 = vmatpush1.msra.mxu0 0.0
      %3134 = vmatprep.subr.mxu0 0.0
      %3135 = vmatpush1.msra.mxu0 0.0
      %3136 = vmatprep.subr.mxu0 0.0
      %3137 = vmatpush1.msra.mxu0 0.0
      %3138 = vmatprep.subr.mxu0 0.0
      %3139 = vmatpush1.msra.mxu0 0.0
      %3140 = vmatprep.subr.mxu0 0.0
      %3141 = vmatpush1.msra.mxu0 0.0
      %3142 = vmatprep.mubr.f32.mxu0 0.0
      %3143 = vmatmul.mubr.f32.gmra.mrb[0].mxu0 %v3073
      %v3144 = vpop.f32.mrb[0].mxu0
      %v3145 = vadd.f32 0.0, %v3144
      %v3146 = vpop.f32.mrb[0].mxu0
      %3147 = vmatprep.mubr.f32.mxu0 0.0
      %3148 = vmatmul.mubr.f32.gmra.mrb[0].mxu0 %v3076
      %v3149 = vpop.f32.mrb[0].mxu0
      %v3150 = vadd.f32 0.0, %v3149
      %v3151 = vpop.f32.mrb[0].mxu0
      %3152 = vdwg.mxu0
      %3155 = vrot.lane.b32.xlu0 %v3145, 127
      %v3156 = vpop.permute.xlu0 %3155
      %3157 = vrot.lane.b32.xlu0 %v3150, 127
      %v3158 = vpop.permute.xlu0 %3157
      %3161 = vxpose.xlu0.b32.start [1/16] %v3156, 128
      %3162 = vxpose.xlu0.b32.cont [2/16] 0.0, 128
      %3163 = vxpose.xlu0.b32.cont [3/16] 0.0, 128
      %3164 = vxpose.xlu0.b32.cont [4/16] 0.0, 128
      %3165 = vxpose.xlu0.b32.cont [5/16] 0.0, 128
      %3166 = vxpose.xlu0.b32.cont [6/16] 0.0, 128
      %3167 = vxpose.xlu0.b32.cont [7/16] 0.0, 128
      %3168 = vxpose.xlu0.b32.cont [8/16] 0.0, 128
      %3169 = vxpose.xlu0.b32.cont [9/16] 0.0, 128
      %3170 = vxpose.xlu0.b32.cont [10/16] 0.0, 128
      %3171 = vxpose.xlu0.b32.cont [11/16] 0.0, 128
      %3172 = vxpose.xlu0.b32.cont [12/16] 0.0, 128
      %3173 = vxpose.xlu0.b32.cont [13/16] 0.0, 128
      %3174 = vxpose.xlu0.b32.cont [14/16] 0.0, 128
      %3175 = vxpose.xlu0.b32.cont [15/16] 0.0, 128
      %3176 = vxpose.xlu0.b32.end [16/16] 0.0, 128
      %v3177 = vpop.trf.xlu0
      %v3178 = vpop.trf.xlu0
      %v3179 = vpop.trf.xlu0
      %v3180 = vpop.trf.xlu0
      %v3181 = vpop.trf.xlu0
      %v3182 = vpop.trf.xlu0
      %v3183 = vpop.trf.xlu0
      %v3184 = vpop.trf.xlu0
      %v3185 = vpop.trf.xlu0
      %v3186 = vpop.trf.xlu0
      %v3187 = vpop.trf.xlu0
      %v3188 = vpop.trf.xlu0
      %v3189 = vpop.trf.xlu0
      %v3190 = vpop.trf.xlu0
      %v3191 = vpop.trf.xlu0
      %v3192 = vpop.trf.xlu0
      %3193 = vxpose.xlu0.b32.start [1/16] %v3158, 128
      %3194 = vxpose.xlu0.b32.cont [2/16] 0.0, 128
      %3195 = vxpose.xlu0.b32.cont [3/16] 0.0, 128
      %3196 = vxpose.xlu0.b32.cont [4/16] 0.0, 128
      %3197 = vxpose.xlu0.b32.cont [5/16] 0.0, 128
      %3198 = vxpose.xlu0.b32.cont [6/16] 0.0, 128
      %3199 = vxpose.xlu0.b32.cont [7/16] 0.0, 128
      %3200 = vxpose.xlu0.b32.cont [8/16] 0.0, 128
      %3201 = vxpose.xlu0.b32.cont [9/16] 0.0, 128
      %3202 = vxpose.xlu0.b32.cont [10/16] 0.0, 128
      %3203 = vxpose.xlu0.b32.cont [11/16] 0.0, 128
      %3204 = vxpose.xlu0.b32.cont [12/16] 0.0, 128
      %3205 = vxpose.xlu0.b32.cont [13/16] 0.0, 128
      %3206 = vxpose.xlu0.b32.cont [14/16] 0.0, 128
      %3207 = vxpose.xlu0.b32.cont [15/16] 0.0, 128
      %3208 = vxpose.xlu0.b32.end [16/16] 0.0, 128
      %v3209 = vpop.trf.xlu0
      %v3210 = vpop.trf.xlu0
      %v3211 = vpop.trf.xlu0
      %v3212 = vpop.trf.xlu0
      %v3213 = vpop.trf.xlu0
      %v3214 = vpop.trf.xlu0
      %v3215 = vpop.trf.xlu0
      %v3216 = vpop.trf.xlu0
      %v3217 = vpop.trf.xlu0
      %v3218 = vpop.trf.xlu0
      %v3219 = vpop.trf.xlu0
      %v3220 = vpop.trf.xlu0
      %v3221 = vpop.trf.xlu0
      %v3222 = vpop.trf.xlu0
      %v3223 = vpop.trf.xlu0
      %v3224 = vpop.trf.xlu0
      %3225 = vset.pattern.permute.xlu0 0
      %3226 = vperm.xlu0 %3225, %v3145
      %v3227 = vpop.permute.xlu0 %3226
      %3229 = vset.pattern.permute.xlu0 0
      %3230 = vperm.xlu0 %3229, %v3150
      %v3231 = vpop.permute.xlu0 %3230
      %v3233 = vlaneseq
      %v3234 = vshrl.u32 %v3233, 7
      %v3235 = vsub.s32 0, %v3234
      %v3236 = vrot.slane %v3177, %v3235
      %v3237 = vlaneseq
      %v3238 = vshrl.u32 %v3237, 7
      %v3239 = vsub.s32 0, %v3238
      %v3240 = vrot.slane %v3209, %v3239
      %v3241 = vadd.f32 %v3227, %v3236
      %v3242 = vadd.f32 %v3231, %v3240
      %vm3243 = vcmp.gt.f32.partialorder %v3241, 0.0
      %vm3244 = vcmp.gt.f32.partialorder %v3242, 0.0
      %v3245 = vmul.f32 %v3241, 0.2
      %v3246 = vmul.f32 %v3242, 0.2
      %v3247 = vsel %vm3243, %v3241, %v3245
      %v3248 = vsel %vm3244, %v3242, %v3246
      %v3249 = vmul.f32 %v1981, %v3247
      %v3250 = vmul.f32 %v1981, %v3248
      %v3251 = vsel %vm861, %v3249, -inf
      %v3252 = vrot.slane %v3251, 4
      %v3253 = vmax.f32 %v3251, %v3252
      %v3254 = vrot.slane %v3253, 2
      %v3255 = vmax.f32 %v3253, %v3254
      %v3256 = vrot.slane %v3255, 1
      %v3257 = vmax.f32 %v3255, %v3256
      %v3258 = vsel %vm861, %v3250, -inf
      %v3259 = vrot.slane %v3258, 4
      %v3260 = vmax.f32 %v3258, %v3259
      %v3261 = vrot.slane %v3260, 2
      %v3262 = vmax.f32 %v3260, %v3261
      %v3263 = vrot.slane %v3262, 1
      %v3264 = vmax.f32 %v3262, %v3263
      %v3265 = vsub.f32 %v3249, %v3257
      %v3266 = vsub.f32 %v3250, %v3264
      %v3267 = vmul.f32 %v3265, 1.442695
      %v3268 = vpow.pop %v3267
      %v3269 = vmul.f32 %v3266, 1.442695
      %v3270 = vpow.pop %v3269
      %v3271 = vsel %vm861, %v3268, 0.0
      %v3272 = vrot.slane %v3271, 4
      %v3273 = vadd.f32 %v3271, %v3272
      %v3274 = vrot.slane %v3273, 2
      %v3275 = vadd.f32 %v3273, %v3274
      %v3276 = vrot.slane %v3275, 1
      %v3277 = vadd.f32 %v3275, %v3276
      %v3278 = vsel %vm861, %v3270, 0.0
      %v3279 = vrot.slane %v3278, 4
      %v3280 = vadd.f32 %v3278, %v3279
      %v3281 = vrot.slane %v3280, 2
      %v3282 = vadd.f32 %v3280, %v3281
      %v3283 = vrot.slane %v3282, 1
      %v3284 = vadd.f32 %v3282, %v3283
      %v3285 = vrcp.pop %v3277
      %v3286 = vmul.f32 %v3268, %v3285
      %v3287 = vrcp.pop %v3284
      %v3288 = vmul.f32 %v3270, %v3287
      %s3289 = scalar_lea.vmem %s9, 8
      %v3290 = vld [vmem:[%s3289] sm:$0xff]
      %v3292 = vsel %vm861, %v3286, 0
      %3294 = vmatprep.subr.mxu0 0.0
      %3295 = vmatpush1.msra.mxu0 %v2911
      %3296 = vmatprep.subr.mxu0 0.0
      %3297 = vmatpush1.msra.mxu0 0.0
      %3298 = vmatprep.subr.mxu0 0.0
      %3299 = vmatpush1.msra.mxu0 0.0
      %3300 = vmatprep.subr.mxu0 0.0
      %3301 = vmatpush1.msra.mxu0 0.0
      %3302 = vmatprep.subr.mxu0 0.0
      %3303 = vmatpush1.msra.mxu0 0.0
      %3304 = vmatprep.subr.mxu0 0.0
      %3305 = vmatpush1.msra.mxu0 0.0
      %3306 = vmatprep.subr.mxu0 0.0
      %3307 = vmatpush1.msra.mxu0 0.0
      %3308 = vmatprep.subr.mxu0 0.0
      %3309 = vmatpush1.msra.mxu0 0.0
      %3310 = vmatprep.subr.mxu0 0.0
      %3311 = vmatpush1.msra.mxu0 0.0
      %3312 = vmatprep.subr.mxu0 0.0
      %3313 = vmatpush1.msra.mxu0 0.0
      %3314 = vmatprep.subr.mxu0 0.0
      %3315 = vmatpush1.msra.mxu0 0.0
      %3316 = vmatprep.subr.mxu0 0.0
      %3317 = vmatpush1.msra.mxu0 0.0
      %3318 = vmatprep.subr.mxu0 0.0
      %3319 = vmatpush1.msra.mxu0 0.0
      %3320 = vmatprep.subr.mxu0 0.0
      %3321 = vmatpush1.msra.mxu0 0.0
      %3322 = vmatprep.subr.mxu0 0.0
      %3323 = vmatpush1.msra.mxu0 0.0
      %3324 = vmatprep.subr.mxu0 0.0
      %3325 = vmatpush1.msra.mxu0 0.0
      %3326 = vmatprep.subr.mxu0 0.0
      %3327 = vmatpush1.msra.mxu0 0.0
      %3328 = vmatprep.subr.mxu0 0.0
      %3329 = vmatpush1.msra.mxu0 0.0
      %3330 = vmatprep.subr.mxu0 0.0
      %3331 = vmatpush1.msra.mxu0 0.0
      %3332 = vmatprep.subr.mxu0 0.0
      %3333 = vmatpush1.msra.mxu0 0.0
      %3334 = vmatprep.subr.mxu0 0.0
      %3335 = vmatpush1.msra.mxu0 0.0
      %3336 = vmatprep.subr.mxu0 0.0
      %3337 = vmatpush1.msra.mxu0 0.0
      %3338 = vmatprep.subr.mxu0 0.0
      %3339 = vmatpush1.msra.mxu0 0.0
      %3340 = vmatprep.subr.mxu0 0.0
      %3341 = vmatpush1.msra.mxu0 0.0
      %3342 = vmatprep.subr.mxu0 0.0
      %3343 = vmatpush1.msra.mxu0 0.0
      %3344 = vmatprep.subr.mxu0 0.0
      %3345 = vmatpush1.msra.mxu0 0.0
      %3346 = vmatprep.subr.mxu0 0.0
      %3347 = vmatpush1.msra.mxu0 0.0
      %3348 = vmatprep.subr.mxu0 0.0
      %3349 = vmatpush1.msra.mxu0 0.0
      %3350 = vmatprep.subr.mxu0 0.0
      %3351 = vmatpush1.msra.mxu0 0.0
      %3352 = vmatprep.subr.mxu0 0.0
      %3353 = vmatpush1.msra.mxu0 0.0
      %3354 = vmatprep.subr.mxu0 0.0
      %3355 = vmatpush1.msra.mxu0 0.0
      %3356 = vmatprep.subr.mxu0 0.0
      %3357 = vmatpush1.msra.mxu0 0.0
      %3358 = vmatprep.mubr.f32.mxu0 0.0
      %3359 = vmatmul.mubr.f32.gmra.mrb[0].mxu0 %v3292
      %v3360 = vpop.f32.mrb[0].mxu0
      %v3361 = vadd.f32 %v3290, %v3360
      %v3362 = vpop.f32.mrb[0].mxu0
      %3363 = vdwg.mxu0
      %v3365 = vsel %vm861, %v3288, 0
      %3367 = vmatprep.subr.mxu0 0.0
      %3368 = vmatpush1.msra.mxu0 %v2916
      %3369 = vmatprep.subr.mxu0 0.0
      %3370 = vmatpush1.msra.mxu0 0.0
      %3371 = vmatprep.subr.mxu0 0.0
      %3372 = vmatpush1.msra.mxu0 0.0
      %3373 = vmatprep.subr.mxu0 0.0
      %3374 = vmatpush1.msra.mxu0 0.0
      %3375 = vmatprep.subr.mxu0 0.0
      %3376 = vmatpush1.msra.mxu0 0.0
      %3377 = vmatprep.subr.mxu0 0.0
      %3378 = vmatpush1.msra.mxu0 0.0
      %3379 = vmatprep.subr.mxu0 0.0
      %3380 = vmatpush1.msra.mxu0 0.0
      %3381 = vmatprep.subr.mxu0 0.0
      %3382 = vmatpush1.msra.mxu0 0.0
      %3383 = vmatprep.subr.mxu0 0.0
      %3384 = vmatpush1.msra.mxu0 0.0
      %3385 = vmatprep.subr.mxu0 0.0
      %3386 = vmatpush1.msra.mxu0 0.0
      %3387 = vmatprep.subr.mxu0 0.0
      %3388 = vmatpush1.msra.mxu0 0.0
      %3389 = vmatprep.subr.mxu0 0.0
      %3390 = vmatpush1.msra.mxu0 0.0
      %3391 = vmatprep.subr.mxu0 0.0
      %3392 = vmatpush1.msra.mxu0 0.0
      %3393 = vmatprep.subr.mxu0 0.0
      %3394 = vmatpush1.msra.mxu0 0.0
      %3395 = vmatprep.subr.mxu0 0.0
      %3396 = vmatpush1.msra.mxu0 0.0
      %3397 = vmatprep.subr.mxu0 0.0
      %3398 = vmatpush1.msra.mxu0 0.0
      %3399 = vmatprep.subr.mxu0 0.0
      %3400 = vmatpush1.msra.mxu0 0.0
      %3401 = vmatprep.subr.mxu0 0.0
      %3402 = vmatpush1.msra.mxu0 0.0
      %3403 = vmatprep.subr.mxu0 0.0
      %3404 = vmatpush1.msra.mxu0 0.0
      %3405 = vmatprep.subr.mxu0 0.0
      %3406 = vmatpush1.msra.mxu0 0.0
      %3407 = vmatprep.subr.mxu0 0.0
      %3408 = vmatpush1.msra.mxu0 0.0
      %3409 = vmatprep.subr.mxu0 0.0
      %3410 = vmatpush1.msra.mxu0 0.0
      %3411 = vmatprep.subr.mxu0 0.0
      %3412 = vmatpush1.msra.mxu0 0.0
      %3413 = vmatprep.subr.mxu0 0.0
      %3414 = vmatpush1.msra.mxu0 0.0
      %3415 = vmatprep.subr.mxu0 0.0
      %3416 = vmatpush1.msra.mxu0 0.0
      %3417 = vmatprep.subr.mxu0 0.0
      %3418 = vmatpush1.msra.mxu0 0.0
      %3419 = vmatprep.subr.mxu0 0.0
      %3420 = vmatpush1.msra.mxu0 0.0
      %3421 = vmatprep.subr.mxu0 0.0
      %3422 = vmatpush1.msra.mxu0 0.0
      %3423 = vmatprep.subr.mxu0 0.0
      %3424 = vmatpush1.msra.mxu0 0.0
      %3425 = vmatprep.subr.mxu0 0.0
      %3426 = vmatpush1.msra.mxu0 0.0
      %3427 = vmatprep.subr.mxu0 0.0
      %3428 = vmatpush1.msra.mxu0 0.0
      %3429 = vmatprep.subr.mxu0 0.0
      %3430 = vmatpush1.msra.mxu0 0.0
      %3431 = vmatprep.mubr.f32.mxu0 0.0
      %3432 = vmatmul.mubr.f32.gmra.mrb[0].mxu0 %v3365
      %v3433 = vpop.f32.mrb[0].mxu0
      %v3434 = vadd.f32 %v3290, %v3433
      %v3435 = vpop.f32.mrb[0].mxu0
      %3436 = vdwg.mxu0
      %v3437 = vadd.f32 %v3361, %v3062
      %v3438 = vadd.f32 %v3434, %v3067
      %s3439 = scalar_lea.vmem %s11, 1
      %v3440 = vld [vmem:[%s3439] sm:$0x1]
      %v3442 = vlaneseq
      %v3443 = vshrl.u32 %v3442, 7
      %v3444 = vsub.s32 0, %v3443
      %v3445 = vrot.slane %v3440, %v3444
      %v3447 = vadd.f32 %v3437, %v3445
      %v3448 = vadd.f32 %v3438, %v3445
      %vm3449 = vcmp.gt.f32.partialorder %v3447, 0.0
      %vm3450 = vcmp.gt.f32.partialorder %v3448, 0.0
      %v3451 = vmin.f32 %v3447, 0.0
      %v3452 = vmin.f32 %v3448, 0.0
      %v3453 = vmul.f32 %v3451, 1.442695
      %v3454 = vpow.pop %v3453
      %v3455 = vmul.f32 %v3452, 1.442695
      %v3456 = vpow.pop %v3455
      %v3457 = vsub.f32 %v3454, 1.0
      %v3458 = vsub.f32 %v3456, 1.0
      %v3459 = vsel %vm3449, %v3447, %v3457
      %v3460 = vsel %vm3450, %v3448, %v3458
      %v3461 = vld [vmem:[%s12] sm:$0xff]
      %v3462 = vld [vmem:[%s13] sm:$0xff]
      %v3464 = vsel %vm861, %v3459, 0
      %v3467 = vsel %vm861, %v3460, 0
      %3469 = vmatprep.subr.mxu0 0.0
      %3470 = vmatpush1.msra.mxu0 %v3462
      %3471 = vmatprep.subr.mxu0 0.0
      %3472 = vmatpush1.msra.mxu0 0.0
      %3473 = vmatprep.subr.mxu0 0.0
      %3474 = vmatpush1.msra.mxu0 0.0
      %3475 = vmatprep.subr.mxu0 0.0
      %3476 = vmatpush1.msra.mxu0 0.0
      %3477 = vmatprep.subr.mxu0 0.0
      %3478 = vmatpush1.msra.mxu0 0.0
      %3479 = vmatprep.subr.mxu0 0.0
      %3480 = vmatpush1.msra.mxu0 0.0
      %3481 = vmatprep.subr.mxu0 0.0
      %3482 = vmatpush1.msra.mxu0 0.0
      %3483 = vmatprep.subr.mxu0 0.0
      %3484 = vmatpush1.msra.mxu0 0.0
      %3485 = vmatprep.subr.mxu0 0.0
      %3486 = vmatpush1.msra.mxu0 0.0
      %3487 = vmatprep.subr.mxu0 0.0
      %3488 = vmatpush1.msra.mxu0 0.0
      %3489 = vmatprep.subr.mxu0 0.0
      %3490 = vmatpush1.msra.mxu0 0.0
      %3491 = vmatprep.subr.mxu0 0.0
      %3492 = vmatpush1.msra.mxu0 0.0
      %3493 = vmatprep.subr.mxu0 0.0
      %3494 = vmatpush1.msra.mxu0 0.0
      %3495 = vmatprep.subr.mxu0 0.0
      %3496 = vmatpush1.msra.mxu0 0.0
      %3497 = vmatprep.subr.mxu0 0.0
      %3498 = vmatpush1.msra.mxu0 0.0
      %3499 = vmatprep.subr.mxu0 0.0
      %3500 = vmatpush1.msra.mxu0 0.0
      %3501 = vmatprep.subr.mxu0 0.0
      %3502 = vmatpush1.msra.mxu0 0.0
      %3503 = vmatprep.subr.mxu0 0.0
      %3504 = vmatpush1.msra.mxu0 0.0
      %3505 = vmatprep.subr.mxu0 0.0
      %3506 = vmatpush1.msra.mxu0 0.0
      %3507 = vmatprep.subr.mxu0 0.0
      %3508 = vmatpush1.msra.mxu0 0.0
      %3509 = vmatprep.subr.mxu0 0.0
      %3510 = vmatpush1.msra.mxu0 0.0
      %3511 = vmatprep.subr.mxu0 0.0
      %3512 = vmatpush1.msra.mxu0 0.0
      %3513 = vmatprep.subr.mxu0 0.0
      %3514 = vmatpush1.msra.mxu0 0.0
      %3515 = vmatprep.subr.mxu0 0.0
      %3516 = vmatpush1.msra.mxu0 0.0
      %3517 = vmatprep.subr.mxu0 0.0
      %3518 = vmatpush1.msra.mxu0 0.0
      %3519 = vmatprep.subr.mxu0 0.0
      %3520 = vmatpush1.msra.mxu0 0.0
      %3521 = vmatprep.subr.mxu0 0.0
      %3522 = vmatpush1.msra.mxu0 0.0
      %3523 = vmatprep.subr.mxu0 0.0
      %3524 = vmatpush1.msra.mxu0 0.0
      %3525 = vmatprep.subr.mxu0 0.0
      %3526 = vmatpush1.msra.mxu0 0.0
      %3527 = vmatprep.subr.mxu0 0.0
      %3528 = vmatpush1.msra.mxu0 0.0
      %3529 = vmatprep.subr.mxu0 0.0
      %3530 = vmatpush1.msra.mxu0 0.0
      %3531 = vmatprep.subr.mxu0 0.0
      %3532 = vmatpush1.msra.mxu0 0.0
      %3533 = vmatprep.mubr.f32.mxu0 0.0
      %3534 = vmatmul.mubr.f32.gmra.mrb[0].mxu0 %v3464
      %v3535 = vpop.f32.mrb[0].mxu0
      %v3536 = vadd.f32 0.0, %v3535
      %v3537 = vpop.f32.mrb[0].mxu0
      %3538 = vmatprep.mubr.f32.mxu0 0.0
      %3539 = vmatmul.mubr.f32.gmra.mrb[0].mxu0 %v3467
      %v3540 = vpop.f32.mrb[0].mxu0
      %v3541 = vadd.f32 0.0, %v3540
      %v3542 = vpop.f32.mrb[0].mxu0
      %3543 = vdwg.mxu0
      %v3545 = vsel %vm861, %v1978, 0
      %v3548 = vsel %vm861, %v1979, 0
      %3550 = vmatprep.subr.mxu0 0.0
      %3551 = vmatpush1.msra.mxu0 %v3461
      %3552 = vmatprep.subr.mxu0 0.0
      %3553 = vmatpush1.msra.mxu0 0.0
      %3554 = vmatprep.subr.mxu0 0.0
      %3555 = vmatpush1.msra.mxu0 0.0
      %3556 = vmatprep.subr.mxu0 0.0
      %3557 = vmatpush1.msra.mxu0 0.0
      %3558 = vmatprep.subr.mxu0 0.0
      %3559 = vmatpush1.msra.mxu0 0.0
      %3560 = vmatprep.subr.mxu0 0.0
      %3561 = vmatpush1.msra.mxu0 0.0
      %3562 = vmatprep.subr.mxu0 0.0
      %3563 = vmatpush1.msra.mxu0 0.0
      %3564 = vmatprep.subr.mxu0 0.0
      %3565 = vmatpush1.msra.mxu0 0.0
      %3566 = vmatprep.subr.mxu0 0.0
      %3567 = vmatpush1.msra.mxu0 0.0
      %3568 = vmatprep.subr.mxu0 0.0
      %3569 = vmatpush1.msra.mxu0 0.0
      %3570 = vmatprep.subr.mxu0 0.0
      %3571 = vmatpush1.msra.mxu0 0.0
      %3572 = vmatprep.subr.mxu0 0.0
      %3573 = vmatpush1.msra.mxu0 0.0
      %3574 = vmatprep.subr.mxu0 0.0
      %3575 = vmatpush1.msra.mxu0 0.0
      %3576 = vmatprep.subr.mxu0 0.0
      %3577 = vmatpush1.msra.mxu0 0.0
      %3578 = vmatprep.subr.mxu0 0.0
      %3579 = vmatpush1.msra.mxu0 0.0
      %3580 = vmatprep.subr.mxu0 0.0
      %3581 = vmatpush1.msra.mxu0 0.0
      %3582 = vmatprep.subr.mxu0 0.0
      %3583 = vmatpush1.msra.mxu0 0.0
      %3584 = vmatprep.subr.mxu0 0.0
      %3585 = vmatpush1.msra.mxu0 0.0
      %3586 = vmatprep.subr.mxu0 0.0
      %3587 = vmatpush1.msra.mxu0 0.0
      %3588 = vmatprep.subr.mxu0 0.0
      %3589 = vmatpush1.msra.mxu0 0.0
      %3590 = vmatprep.subr.mxu0 0.0
      %3591 = vmatpush1.msra.mxu0 0.0
      %3592 = vmatprep.subr.mxu0 0.0
      %3593 = vmatpush1.msra.mxu0 0.0
      %3594 = vmatprep.subr.mxu0 0.0
      %3595 = vmatpush1.msra.mxu0 0.0
      %3596 = vmatprep.subr.mxu0 0.0
      %3597 = vmatpush1.msra.mxu0 0.0
      %3598 = vmatprep.subr.mxu0 0.0
      %3599 = vmatpush1.msra.mxu0 0.0
      %3600 = vmatprep.subr.mxu0 0.0
      %3601 = vmatpush1.msra.mxu0 0.0
      %3602 = vmatprep.subr.mxu0 0.0
      %3603 = vmatpush1.msra.mxu0 0.0
      %3604 = vmatprep.subr.mxu0 0.0
      %3605 = vmatpush1.msra.mxu0 0.0
      %3606 = vmatprep.subr.mxu0 0.0
      %3607 = vmatpush1.msra.mxu0 0.0
      %3608 = vmatprep.subr.mxu0 0.0
      %3609 = vmatpush1.msra.mxu0 0.0
      %3610 = vmatprep.subr.mxu0 0.0
      %3611 = vmatpush1.msra.mxu0 0.0
      %3612 = vmatprep.subr.mxu0 0.0
      %3613 = vmatpush1.msra.mxu0 0.0
      %3614 = vmatprep.mubr.f32.mxu0 0.0
      %3615 = vmatmul.mubr.f32.gmra.mrb[0].mxu0 %v3545
      %v3616 = vpop.f32.mrb[0].mxu0
      %v3617 = vadd.f32 %v3536, %v3616
      %v3618 = vpop.f32.mrb[0].mxu0
      %3619 = vmatprep.mubr.f32.mxu0 0.0
      %3620 = vmatmul.mubr.f32.gmra.mrb[0].mxu0 %v3548
      %v3621 = vpop.f32.mrb[0].mxu0
      %v3622 = vadd.f32 %v3541, %v3621
      %v3623 = vpop.f32.mrb[0].mxu0
      %3624 = vdwg.mxu0
      %v3625 = vld [vmem:[%s14] sm:$0x1]
      %v3627 = vlaneseq
      %v3628 = vshrl.u32 %v3627, 7
      %v3629 = vsub.s32 0, %v3628
      %v3630 = vrot.slane %v3625, %v3629
      %v3632 = vadd.f32 %v3617, %v3630
      %v3633 = vadd.f32 %v3622, %v3630
      %v3634 = vsub.f32 0.0, %v3632
      %v3635 = vsub.f32 0.0, %v3633
      %v3636 = vmul.f32 %v3634, 1.442695
      %v3637 = vpow.pop %v3636
      %v3638 = vmul.f32 %v3635, 1.442695
      %v3639 = vpow.pop %v3638
      %v3640 = vadd.f32 %v3637, 1.0
      %v3641 = vadd.f32 %v3639, 1.0
      %v3642 = vrcp.pop %v3640
      %v3643 = vmul.f32 1.0, %v3642
      %v3644 = vrcp.pop %v3641
      %v3645 = vmul.f32 1.0, %v3644
      %v3646 = vmul.f32 %v3643, %v1978
      %v3647 = vmul.f32 %v3645, %v1979
      %v3648 = vsub.f32 1.0, %v3643
      %v3649 = vsub.f32 1.0, %v3645
      %v3650 = vmul.f32 %v3648, %v3459
      %v3651 = vmul.f32 %v3649, %v3460
      %v3652 = vadd.f32 %v3646, %v3650
      %v3653 = vadd.f32 %v3647, %v3651
      %3654 = vst.msk [vmem:[%s496] sm:$0xff] %vm861, %v3652
      %3655 = vst.msk [vmem:[%s496 + $0x8] sm:$0xff] %vm861, %v3653
      %s3656 = smul.u32 2, %s26
      %p3657 = scmp.lt.s32.totalorder %s3656, 7
      %s3658 = scalar_select %p3657, %s3656, 7
      %s3659 = smul.addr %s3658, 8
      %s3660 = scalar_lea.vmem %s15, %s3659
      // Predicated region
      $region81: #{parallel_gat.1} parent=79 // pred_check
        %p3661 = pneg %p364
      $region82: #{parallel_gat.1} parent=79 // pred_check_branch
        %3663 = sbr.rel (%p3661) target = $region84
      $region83: #{parallel_gat.1} parent=79 // pred_region
        %s3664 = smul.u32 2, %s26
      $region84: #{parallel_gat.1} parent=79 // pred_fallthru
        _
    $region80: #{parallel_gat.1} parent=5 // pred_fallthru
      _
    %p3665 = scmp.le.s32.totalorder 2, %s21
    // Predicated region
    $region85: #{parallel_gat.1} parent=5 // pred_check
      %p3666 = pneg %p3665
    $region86: #{parallel_gat.1} parent=5 // pred_check_branch
      %3668 = sbr.rel (%p3666) target = $region88
    $region87: #{parallel_gat.1} parent=5 // pred_region
      %s3669 = ssub.s32 %s21, 2
      // Predicated region
      $region89: #{parallel_gat.1} parent=87 // pred_check
        %p3670 = pneg %p370
      $region90: #{parallel_gat.1} parent=87 // pred_check_branch
        %3672 = sbr.rel (%p3670) target = $region92
      $region91: #{parallel_gat.1} parent=87 // pred_region
        %s3673 = smul.u32 2, %s27
        %p3674 = scmp.lt.s32.totalorder %s3673, 7
        %s3675 = scalar_select %p3674, %s3673, 7
        %s3676 = smul.addr %s3675, 8
        %s3677 = scalar_lea.vmem %s15, %s3676
      $region92: #{parallel_gat.1} parent=87 // pred_fallthru
        _
    $region88: #{parallel_gat.1} parent=5 // pred_fallthru
      _
  $region6: #{parallel_gat.1} parent=0 // loop_footer
    %s25 = sadd.s32 1, %s21
  $region7: #{parallel_gat.1} parent=0 // loop_footer_branch
    %20 = sbr.rel target = $region3
  $region8: #{parallel_gat.1} parent=0 // loop_exit
    _

</llo_original>
